<compile_context>
chip_gen: v7x
topology: tpu7x:2x2x1
jax: 0.10.0
libtpu: 0.0.40
codegen_flags: <defaults>
</compile_context>

<pallas_src>
import functools

import jax
import jax.numpy as jnp
import numpy as np
from jax import lax
from jax.experimental import pallas as pl
from jax.experimental.pallas import tpu as pltpu


def _round_up(n, m):
    return ((n + m - 1) // m) * m


# ----------------------------- Pallas kernel -------------------------------
def _inconv_kernel(G, H, W, Cout, rc,
                   xb_ref, w1r_ref, b1_ref, br_ref, t2_ref, b2_ref,
                   pool_ref, wfc1t_ref, wfc2_ref, bcast_ref,
                   o_ref, hpad_scr):
    WC = W * Cout
    GH = G * H
    f32 = jnp.float32
    cdt = jnp.bfloat16

    # ---- conv1 (3 ky bands fused along K) + residual 1x1 conv in ONE matmul ----
    # xb_ref: (G, H, KBp) bf16, bands pre-shifted and lane-padded in the wrapper.
    x2 = xb_ref[...].reshape(GH, -1)                                  # (G*H, KBp)
    acc1 = jnp.dot(x2, w1r_ref[...], preferred_element_type=f32)      # (G*H, 2*WC)
    h1 = jnp.maximum(acc1[:, :WC] + b1_ref[...], 0.0)                 # conv1+BN1+ReLU
    res = acc1[:, WC:] + br_ref[...]                                  # residual+BNres

    # ---- per-image row-padded hidden map: zero ONLY the halo rows, overwrite interior ----
    zrow = jnp.zeros((G, 1, WC), f32)
    hpad_scr[:, 0:1, :] = zrow
    hpad_scr[:, H + 1:H + 2, :] = zrow
    hpad_scr[:, 1:H + 1, :] = h1.reshape(G, H, WC)

    # ---- conv2: three ky bands lane-concatenated -> one matmul with K = 3*W*Cout ----
    band0 = hpad_scr[:, 0:H, :].reshape(GH, WC)
    band1 = hpad_scr[:, 1:H + 1, :].reshape(GH, WC)
    band2 = hpad_scr[:, 2:H + 2, :].reshape(GH, WC)
    cat2 = jnp.concatenate([band0, band1, band2], axis=-1).astype(cdt)  # (G*H, 3*WC)
    acc2 = jnp.dot(cat2, t2_ref[...], preferred_element_type=f32)
    h2 = jnp.maximum(acc2 + b2_ref[...], 0.0)                         # (G*H, WC)

    # ---- SE: per-image channel mean via sublane sums + one small fold matmul ----
    rows = [jnp.sum(h2[g * H:(g + 1) * H, :], axis=0, keepdims=True) for g in range(G)]
    hsum = jnp.concatenate(rows, axis=0) if G > 1 else rows[0]        # (G, WC)
    pooled = jnp.dot(hsum.astype(cdt), pool_ref[...],
                     preferred_element_type=f32)                      # (G, Cout), 1/(H*W) folded

    # ---- SE FCs on VPU/XLU (rc is tiny): off the MXU critical path ----
    gate_pre = jnp.zeros((G, Cout), f32)
    for r in range(rc):
        z_r = jnp.sum(pooled * wfc1t_ref[r:r + 1, :], axis=1, keepdims=True)   # (G, 1)
        gate_pre = gate_pre + jnp.maximum(z_r, 0.0) * wfc2_ref[r:r + 1, :]
    gate = jax.nn.sigmoid(gate_pre)                                   # (G, Cout)

    # ---- broadcast gate to the lane-dense layout, gate + residual add, store ----
    gate_t = jnp.dot(gate.astype(cdt), bcast_ref[...],
                     preferred_element_type=f32)                      # (G, WC)
    out = h2.reshape(G, H, WC) * gate_t[:, None, :] + res.reshape(G, H, WC)
    o_ref[...] = out.astype(o_ref.dtype)                              # lane-dense (G,H,WC)


# --------------------------- one-time weight prep ---------------------------
def fold_bn(gamma, beta, mean, var, conv_bias=None, eps=1e-5):
    scale = gamma / jnp.sqrt(var + eps)
    bias = beta - mean * scale
    if conv_bias is not None:
        bias = bias + conv_bias * scale
    return scale, bias


def _band_weights(w, W, scale):
    """Block-banded (Toeplitz) conv weights, one matrix per kernel row ky.

    w: (3, 3, Ci, Co) HWIO.  Returns T of shape (3, (W+2)*Ci, W*Co) with
      T[ky, (j+kx)*Ci + c, j*Co + o] = w[ky, kx, c, o] * scale[o]
    so feeding the ky-shifted, W-padded input row band through T[ky] and summing
    over ky reproduces a stride-1 / pad-1 3x3 conv (BN scale pre-folded).
    """
    _, _, Ci, Co = w.shape
    ws = (w * scale[None, None, None, :]).astype(jnp.float32)
    win = jnp.arange(W + 2)
    j = jnp.arange(W)
    kx = jnp.arange(3)
    sel = (win[None, :, None] == (j[None, None, :] + kx[:, None, None])).astype(jnp.float32)
    t = jnp.einsum("kwj,ykco->ywcjo", sel, ws)                        # (3, W+2, Ci, W, Co)
    return t.reshape(3, (W + 2) * Ci, W * Co)


def prepare_inconv_weights(p, H, W):
    """One-time prep: BN folding, Toeplitz expansion, fusion, bf16 casts."""
    f32, cdt = jnp.float32, jnp.bfloat16
    Cin, Cout = p["w1"].shape[2], p["w1"].shape[3]
    WC = W * Cout
    KB0 = (W + 2) * Cin
    KBp = _round_up(3 * KB0, 128)          # lane-dense fused-K for conv1 + residual

    s1, b1 = fold_bn(p["g1"], p["beta1"], p["m1"], p["v1"], p["b1c"])
    s2, b2 = fold_bn(p["g2"], p["beta2"], p["m2"], p["v2"], p["b2c"])
    sr, br = fold_bn(p["gres"], p["betares"], p["mres"], p["vres"])

    # fused conv1(+BN1 scale) weight over the 3 ky bands stacked along K
    t1 = _band_weights(p["w1"], W, s1).reshape(3 * KB0, WC)           # (3*KB0, WC)
    # residual 1x1(+BNres scale) weight, nonzero only in the ky=1 band rows
    wres33 = jnp.zeros((3, 3, Cin, Cout), f32).at[1, 1].set(p["wres"])
    rmat = _band_weights(wres33, W, sr)[1]                            # (KB0, WC)
    r_full = jnp.zeros((3 * KB0, WC), f32).at[KB0:2 * KB0, :].set(rmat)
    w1r = jnp.concatenate([t1, r_full], axis=1)                       # (3*KB0, 2*WC)
    w1r = jnp.pad(w1r, ((0, KBp - 3 * KB0), (0, 0))).astype(cdt)      # (KBp, 2*WC)

    # fused conv2(+BN2 scale) weight: ky bands stacked along K, W padding folded
    t2 = _band_weights(p["w2"], W, s2)[:, Cout:(W + 1) * Cout, :]     # (3, WC, WC)
    t2f = t2.reshape(3 * WC, WC).astype(cdt)

    eye = jnp.eye(Cout, dtype=f32)
    return dict(
        w1r=w1r, t2=t2f,
        b1=jnp.tile(b1, W).reshape(1, WC).astype(f32),
        b2=jnp.tile(b2, W).reshape(1, WC).astype(f32),
        br=jnp.tile(br, W).reshape(1, WC).astype(f32),
        pool=(jnp.tile(eye, (W, 1)) / float(H * W)).astype(cdt),      # (WC, Cout), 1/(H*W) folded
        bcast=jnp.tile(eye, (1, W)).astype(cdt),                      # (Cout, WC)
        wfc1t=p["wfc1"].T.astype(f32),                                # (rc, Cout)
        wfc2=p["wfc2"].astype(f32),                                   # (rc, Cout)
    )


# ------------------------------ forward wrapper ------------------------------
def _pick_images_per_step(B, H):
    # Fill ~128 MXU rows per grid step (M-occupancy), keep B % G == 0.
    # TODO(synk): on v7x prefer capping G at B//2 once B is large enough so both
    #             TensorCores get >= 2 pipelined grid steps each.
    g = max(1, min(B, max(1, 128 // max(H, 1))))
    while B % g:
        g -= 1
    return g


def inconv_forward(x_nchw, prep, *, images_per_step=None):
    f32, cdt = jnp.float32, jnp.bfloat16
    x = jnp.transpose(x_nchw, (0, 2, 3, 1)).astype(f32)               # NCHW -> NHWC
    B, H, W, Cin = x.shape
    Cout = prep["bcast"].shape[0]
    rc = prep["wfc2"].shape[0]
    WC = W * Cout
    KB0 = (W + 2) * Cin
    KBp = _round_up(3 * KB0, 128)

    G = images_per_step if images_per_step is not None else _pick_images_per_step(B, H)
    assert B % G == 0, "batch must be divisible by images_per_step"

    # band-major, pre-shifted, lane-padded bf16 input rows: (B, H, KBp)
    x_pad = jnp.pad(x, ((0, 0), (1, 1), (1, 1), (0, 0)))
    bands = [x_pad[:, ky:ky + H, :, :].reshape(B, H, KB0) for ky in range(3)]
    xb = jnp.concatenate(bands, axis=-1)
    xb = jnp.pad(xb, ((0, 0), (0, 0), (0, KBp - 3 * KB0))).astype(cdt)

    args = (xb, prep["w1r"], prep["b1"], prep["br"], prep["t2"], prep["b2"],
            prep["pool"], prep["wfc1t"], prep["wfc2"], prep["bcast"])

    def full_spec(a):
        zeros = (0,) * a.ndim
        return pl.BlockSpec(a.shape, lambda i, _z=zeros: _z)

    in_specs = [pl.BlockSpec((G, H, KBp), lambda i: (i, 0, 0))]
    in_specs += [full_spec(a) for a in args[1:]]

    # Explicit VMEM budget (do not rely on the default scoped limit).
    nbytes = lambda a: int(a.size) * a.dtype.itemsize
    vmem_limit = int(sum(2 * nbytes(a) for a in args[1:])             # invariant weights (x2 buf)
                     + 2 * G * H * KBp * 2                            # double-buffered input block
                     + 2 * G * H * WC * 4                             # double-buffered output block
                     + G * (H + 2) * WC * 4                           # scratch
                     + (24 << 20))                                    # headroom for temporaries

    out = pl.pallas_call(
        functools.partial(_inconv_kernel, G, H, W, Cout, rc),
        out_shape=jax.ShapeDtypeStruct((B, H, WC), f32),
        grid=(B // G,),
        in_specs=in_specs,
        out_specs=pl.BlockSpec((G, H, WC), lambda i: (i, 0, 0)),
        scratch_shapes=[pltpu.VMEM((G, H + 2, WC), f32)],
        compiler_params=pltpu.CompilerParams(
            dimension_semantics=("parallel",),
            vmem_limit_bytes=vmem_limit),
    )(*args)

    # (B, H, W*Cout) -> (B, H, W, Cout) -> NCHW (module contract is NCHW; trivial here)
    return jnp.transpose(out.reshape(B, H, W, Cout), (0, 3, 1, 2))


# ----------------------------- pure-JAX reference ---------------------------
def ref_forward_nhwc(x, p, eps=1e-5):
    def bn(y, g, b, m, v):
        return (y - m) / jnp.sqrt(v + eps) * g + b

    def conv(x, w):
        return lax.conv_general_dilated(x, w, (1, 1), "SAME",
                                        dimension_numbers=("NHWC", "HWIO", "NHWC"))

    h = conv(x, p["w1"]) + p["b1c"]
    h = jnp.maximum(bn(h, p["g1"], p["beta1"], p["m1"], p["v1"]), 0.0)
    h = conv(h, p["w2"]) + p["b2c"]
    h = jnp.maximum(bn(h, p["g2"], p["beta2"], p["m2"], p["v2"]), 0.0)
    y = h.mean(axis=(1, 2))                      # (B, Cout)
    z = jnp.maximum(y @ p["wfc1"], 0.0)
    gate = jax.nn.sigmoid(z @ p["wfc2"])
    h = h * gate[:, None, None, :]
    r = conv(x, p["wres"][None, None])
    r = bn(r, p["gres"], p["betares"], p["mres"], p["vres"])
    return h + r


# ------------------------------- params init -------------------------------
def make_params(key, in_ch, out_ch, reduction=16):
    rc = out_ch // reduction
    ks = jax.random.split(key, 19)
    rnd = lambda k, s, sc=0.1: sc * jax.random.normal(k, s, jnp.float32)
    pos = lambda k, s: 0.5 + jax.random.uniform(k, s, jnp.float32)
    return dict(
        # conv1 + bn1
        w1=rnd(ks[0], (3, 3, in_ch, out_ch)), b1c=rnd(ks[1], (out_ch,)),
        g1=pos(ks[2], (out_ch,)), beta1=rnd(ks[3], (out_ch,)),
        m1=rnd(ks[4], (out_ch,)), v1=pos(ks[5], (out_ch,)),
        # conv2 + bn2
        w2=rnd(ks[6], (3, 3, out_ch, out_ch)), b2c=rnd(ks[7], (out_ch,)),
        g2=pos(ks[8], (out_ch,)), beta2=rnd(ks[9], (out_ch,)),
        m2=rnd(ks[10], (out_ch,)), v2=pos(ks[11], (out_ch,)),
        # SE fc (bias-free Linear layers, stored already transposed: (in, out))
        wfc1=rnd(ks[12], (out_ch, rc), 0.3), wfc2=rnd(ks[13], (rc, out_ch), 0.3),
        # residual 1x1 conv (no bias) + bn
        wres=rnd(ks[14], (in_ch, out_ch)),
        gres=pos(ks[15], (out_ch,)), betares=rnd(ks[16], (out_ch,)),
        mres=rnd(ks[17], (out_ch,)), vres=pos(ks[18], (out_ch,)),
    )


if __name__ == "__main__":
    key = jax.random.PRNGKey(0)
    k_x, k_p = jax.random.split(key)

    B, IN_CH, OUT_CH, H, W = 2, 4, 32, 16, 16
    x_nchw = jax.random.normal(k_x, (B, IN_CH, H, W), jnp.float32)
    params = make_params(k_p, IN_CH, OUT_CH)

    # One-time weight prep (BN folding, Toeplitz expansion, bf16 casts) hoisted out of
    # the steady-state forward path.
    prep = jax.block_until_ready(prepare_inconv_weights(params, H, W))

    fwd = jax.jit(inconv_forward)
    out = jax.block_until_ready(fwd(x_nchw, prep))

    # Reference uses bf16-rounded x / conv weights (the kernel's matmuls run in bf16 with
    # f32 accumulation); remaining differences are accumulation order + folded-scale rounding.
    rnd_bf16 = lambda a: a.astype(jnp.bfloat16).astype(jnp.float32)
    p_ref = dict(params)
    for kk in ("w1", "w2", "wres"):
        p_ref[kk] = rnd_bf16(params[kk])
    ref = ref_forward_nhwc(rnd_bf16(jnp.transpose(x_nchw, (0, 2, 3, 1))), p_ref)
    ref = jnp.transpose(ref, (0, 3, 1, 2))
    np.testing.assert_allclose(np.asarray(out), np.asarray(ref), rtol=2e-2, atol=5e-2)

    print("KERNEL_OK")
</pallas_src>

<mosaic_0001>
module attributes {stable_mosaic.version = 11 : i64} {
  func.func @_inconv_kernel(%arg0: i32, %arg1: memref<2x16x256xbf16, #tpu.memory_space<vmem>>, %arg2: memref<256x1024xbf16, #tpu.memory_space<vmem>>, %arg3: memref<1x512xf32, #tpu.memory_space<vmem>>, %arg4: memref<1x512xf32, #tpu.memory_space<vmem>>, %arg5: memref<1536x512xbf16, #tpu.memory_space<vmem>>, %arg6: memref<1x512xf32, #tpu.memory_space<vmem>>, %arg7: memref<512x32xbf16, #tpu.memory_space<vmem>>, %arg8: memref<2x32xf32, #tpu.memory_space<vmem>>, %arg9: memref<2x32xf32, #tpu.memory_space<vmem>>, %arg10: memref<32x512xbf16, #tpu.memory_space<vmem>>, %arg11: memref<2x16x512xf32, #tpu.memory_space<vmem>>, %arg12: memref<2x18x512xf32, #tpu.memory_space<vmem>>) attributes {dimension_semantics = [#tpu.dimension_semantics<parallel>], iteration_bounds = array<i64: 1>, scalar_prefetch = 0 : i64, scratch_operands = 1 : i64, tpu.core_type = #tpu.core_type<tc>, window_params = [{transform_indices = @transform_0, window_bounds = array<i64: 2, 16, 256>}, {pipeline_mode = #tpu.pipeline_mode<synchronous>, transform_indices = @transform_1, window_bounds = array<i64: 256, 1024>}, {pipeline_mode = #tpu.pipeline_mode<synchronous>, transform_indices = @transform_2, window_bounds = array<i64: 1, 512>}, {pipeline_mode = #tpu.pipeline_mode<synchronous>, transform_indices = @transform_3, window_bounds = array<i64: 1, 512>}, {pipeline_mode = #tpu.pipeline_mode<synchronous>, transform_indices = @transform_4, window_bounds = array<i64: 1536, 512>}, {pipeline_mode = #tpu.pipeline_mode<synchronous>, transform_indices = @transform_5, window_bounds = array<i64: 1, 512>}, {pipeline_mode = #tpu.pipeline_mode<synchronous>, transform_indices = @transform_6, window_bounds = array<i64: 512, 32>}, {pipeline_mode = #tpu.pipeline_mode<synchronous>, transform_indices = @transform_7, window_bounds = array<i64: 2, 32>}, {pipeline_mode = #tpu.pipeline_mode<synchronous>, transform_indices = @transform_8, window_bounds = array<i64: 2, 32>}, {pipeline_mode = #tpu.pipeline_mode<synchronous>, transform_indices = @transform_9, window_bounds = array<i64: 32, 512>}, {transform_indices = @transform_10, window_bounds = array<i64: 2, 16, 512>}]} {
    %c0 = arith.constant 0 : index
    %c0_0 = arith.constant 0 : index
    %c0_1 = arith.constant 0 : index
    %0 = vector.load %arg1[%c0, %c0_0, %c0_1] : memref<2x16x256xbf16, #tpu.memory_space<vmem>>, vector<2x16x256xbf16>
    %1 = vector.shape_cast %0 : vector<2x16x256xbf16> to vector<32x256xbf16>
    %c0_2 = arith.constant 0 : index
    %c0_3 = arith.constant 0 : index
    %2 = vector.load %arg2[%c0_2, %c0_3] : memref<256x1024xbf16, #tpu.memory_space<vmem>>, vector<256x1024xbf16>
    %cst = arith.constant dense<0.000000e+00> : vector<32x1024xf32>
    %3 = tpu.matmul %1, %2, %cst {dimension_numbers = #tpu.dot_dimension_numbers<[1], [0], [0], [1], [0, 0, 1, 1], [], []>} : vector<32x256xbf16>, vector<256x1024xbf16>, vector<32x1024xf32> -> vector<32x1024xf32>
    %4 = vector.extract_strided_slice %3 {offsets = [0, 0], sizes = [32, 512], strides = [1, 1]} : vector<32x1024xf32> to vector<32x512xf32>
    %c0_4 = arith.constant 0 : index
    %c0_5 = arith.constant 0 : index
    %5 = vector.load %arg3[%c0_4, %c0_5] : memref<1x512xf32, #tpu.memory_space<vmem>>, vector<1x512xf32>
    %6 = vector.broadcast %5 : vector<1x512xf32> to vector<32x512xf32>
    %7 = arith.addf %4, %6 : vector<32x512xf32>
    %cst_6 = arith.constant 0.000000e+00 : f32
    %8 = vector.broadcast %cst_6 : f32 to vector<32x512xf32>
    %9 = arith.maximumf %7, %8 : vector<32x512xf32>
    %10 = vector.extract_strided_slice %3 {offsets = [0, 512], sizes = [32, 512], strides = [1, 1]} : vector<32x1024xf32> to vector<32x512xf32>
    %c0_7 = arith.constant 0 : index
    %c0_8 = arith.constant 0 : index
    %11 = vector.load %arg4[%c0_7, %c0_8] : memref<1x512xf32, #tpu.memory_space<vmem>>, vector<1x512xf32>
    %12 = vector.broadcast %11 : vector<1x512xf32> to vector<32x512xf32>
    %13 = arith.addf %10, %12 : vector<32x512xf32>
    %cst_9 = arith.constant 0.000000e+00 : f32
    %14 = vector.broadcast %cst_9 : f32 to vector<2x1x512xf32>
    %c0_10 = arith.constant 0 : index
    %c0_11 = arith.constant 0 : index
    %c0_12 = arith.constant 0 : index
    %15 = vector.load %arg12[%c0_10, %c0_11, %c0_12] : memref<2x18x512xf32, #tpu.memory_space<vmem>>, vector<2x1x512xf32>
    tpu.vector_store %arg12[%c0_10, %c0_11, %c0_12], %14 {strides = array<i32>} : memref<2x18x512xf32, #tpu.memory_space<vmem>>, vector<2x1x512xf32>,
    %c0_13 = arith.constant 0 : index
    %c17 = arith.constant 17 : index
    %c0_14 = arith.constant 0 : index
    %16 = vector.load %arg12[%c0_13, %c17, %c0_14] : memref<2x18x512xf32, #tpu.memory_space<vmem>>, vector<2x1x512xf32>
    tpu.vector_store %arg12[%c0_13, %c17, %c0_14], %14 {strides = array<i32>} : memref<2x18x512xf32, #tpu.memory_space<vmem>>, vector<2x1x512xf32>,
    %17 = vector.shape_cast %9 : vector<32x512xf32> to vector<2x16x512xf32>
    %c0_15 = arith.constant 0 : index
    %c1 = arith.constant 1 : index
    %c0_16 = arith.constant 0 : index
    %18 = vector.load %arg12[%c0_15, %c1, %c0_16] : memref<2x18x512xf32, #tpu.memory_space<vmem>>, vector<2x16x512xf32>
    tpu.vector_store %arg12[%c0_15, %c1, %c0_16], %17 {strides = array<i32>} : memref<2x18x512xf32, #tpu.memory_space<vmem>>, vector<2x16x512xf32>,
    %c0_17 = arith.constant 0 : index
    %c0_18 = arith.constant 0 : index
    %c0_19 = arith.constant 0 : index
    %19 = vector.load %arg12[%c0_17, %c0_18, %c0_19] : memref<2x18x512xf32, #tpu.memory_space<vmem>>, vector<2x16x512xf32>
    %20 = vector.shape_cast %19 : vector<2x16x512xf32> to vector<32x512xf32>
    %c0_20 = arith.constant 0 : index
    %c1_21 = arith.constant 1 : index
    %c0_22 = arith.constant 0 : index
    %21 = vector.load %arg12[%c0_20, %c1_21, %c0_22] : memref<2x18x512xf32, #tpu.memory_space<vmem>>, vector<2x16x512xf32>
    %22 = vector.shape_cast %21 : vector<2x16x512xf32> to vector<32x512xf32>
    %c0_23 = arith.constant 0 : index
    %c2 = arith.constant 2 : index
    %c0_24 = arith.constant 0 : index
    %23 = vector.load %arg12[%c0_23, %c2, %c0_24] : memref<2x18x512xf32, #tpu.memory_space<vmem>>, vector<2x16x512xf32>
    %24 = vector.shape_cast %23 : vector<2x16x512xf32> to vector<32x512xf32>
    %25 = tpu.concatenate %20, %22, %24 in 1 : vector<32x512xf32>, vector<32x512xf32>, vector<32x512xf32> -> vector<32x1536xf32>
    %26 = arith.truncf %25 : vector<32x1536xf32> to vector<32x1536xbf16>
    %c0_25 = arith.constant 0 : index
    %c0_26 = arith.constant 0 : index
    %27 = vector.load %arg5[%c0_25, %c0_26] : memref<1536x512xbf16, #tpu.memory_space<vmem>>, vector<1536x512xbf16>
    %cst_27 = arith.constant dense<0.000000e+00> : vector<32x512xf32>
    %28 = tpu.matmul %26, %27, %cst_27 {dimension_numbers = #tpu.dot_dimension_numbers<[1], [0], [0], [1], [0, 0, 1, 1], [], []>} : vector<32x1536xbf16>, vector<1536x512xbf16>, vector<32x512xf32> -> vector<32x512xf32>
    %c0_28 = arith.constant 0 : index
    %c0_29 = arith.constant 0 : index
    %29 = vector.load %arg6[%c0_28, %c0_29] : memref<1x512xf32, #tpu.memory_space<vmem>>, vector<1x512xf32>
    %30 = vector.broadcast %29 : vector<1x512xf32> to vector<32x512xf32>
    %31 = arith.addf %28, %30 : vector<32x512xf32>
    %cst_30 = arith.constant 0.000000e+00 : f32
    %32 = vector.broadcast %cst_30 : f32 to vector<32x512xf32>
    %33 = arith.maximumf %31, %32 : vector<32x512xf32>
    %34 = vector.extract_strided_slice %33 {offsets = [0, 0], sizes = [16, 512], strides = [1, 1]} : vector<32x512xf32> to vector<16x512xf32>
    %cst_31 = arith.constant dense<0.000000e+00> : vector<512xf32>
    %35 = vector.multi_reduction <add>, %34, %cst_31 [0] : vector<16x512xf32> to vector<512xf32>
    %36 = vector.shape_cast %35 : vector<512xf32> to vector<1x512xf32>
    %37 = vector.extract_strided_slice %33 {offsets = [16, 0], sizes = [16, 512], strides = [1, 1]} : vector<32x512xf32> to vector<16x512xf32>
    %cst_32 = arith.constant dense<0.000000e+00> : vector<512xf32>
    %38 = vector.multi_reduction <add>, %37, %cst_32 [0] : vector<16x512xf32> to vector<512xf32>
    %39 = vector.shape_cast %38 : vector<512xf32> to vector<1x512xf32>
    %40 = tpu.concatenate %36, %39 in 0 : vector<1x512xf32>, vector<1x512xf32> -> vector<2x512xf32>
    %41 = arith.truncf %40 : vector<2x512xf32> to vector<2x512xbf16>
    %c0_33 = arith.constant 0 : index
    %c0_34 = arith.constant 0 : index
    %42 = vector.load %arg7[%c0_33, %c0_34] : memref<512x32xbf16, #tpu.memory_space<vmem>>, vector<512x32xbf16>
    %cst_35 = arith.constant dense<0.000000e+00> : vector<2x32xf32>
    %43 = tpu.matmul %41, %42, %cst_35 {dimension_numbers = #tpu.dot_dimension_numbers<[1], [0], [0], [1], [0, 0, 1, 1], [], []>} : vector<2x512xbf16>, vector<512x32xbf16>, vector<2x32xf32> -> vector<2x32xf32>
    %cst_36 = arith.constant 0.000000e+00 : f32
    %44 = vector.broadcast %cst_36 : f32 to vector<2x32xf32>
    %c0_37 = arith.constant 0 : index
    %c0_38 = arith.constant 0 : index
    %45 = vector.load %arg8[%c0_37, %c0_38] : memref<2x32xf32, #tpu.memory_space<vmem>>, vector<1x32xf32>
    %46 = vector.broadcast %45 : vector<1x32xf32> to vector<2x32xf32>
    %47 = arith.mulf %43, %46 : vector<2x32xf32>
    %cst_39 = arith.constant dense<0.000000e+00> : vector<2xf32>
    %48 = vector.multi_reduction <add>, %47, %cst_39 [1] : vector<2x32xf32> to vector<2xf32>
    %49 = vector.shape_cast %48 : vector<2xf32> to vector<2x1xf32>
    %cst_40 = arith.constant 0.000000e+00 : f32
    %50 = vector.broadcast %cst_40 : f32 to vector<2x1xf32>
    %51 = arith.maximumf %49, %50 : vector<2x1xf32>
    %c0_41 = arith.constant 0 : index
    %c0_42 = arith.constant 0 : index
    %52 = vector.load %arg9[%c0_41, %c0_42] : memref<2x32xf32, #tpu.memory_space<vmem>>, vector<1x32xf32>
    %53 = vector.broadcast %51 : vector<2x1xf32> to vector<2x32xf32>
    %54 = vector.broadcast %52 : vector<1x32xf32> to vector<2x32xf32>
    %55 = arith.mulf %53, %54 : vector<2x32xf32>
    %56 = arith.addf %44, %55 : vector<2x32xf32>
    %c1_43 = arith.constant 1 : index
    %c0_44 = arith.constant 0 : index
    %57 = vector.load %arg8[%c1_43, %c0_44] : memref<2x32xf32, #tpu.memory_space<vmem>>, vector<1x32xf32>
    %58 = vector.broadcast %57 : vector<1x32xf32> to vector<2x32xf32>
    %59 = arith.mulf %43, %58 : vector<2x32xf32>
    %cst_45 = arith.constant dense<0.000000e+00> : vector<2xf32>
    %60 = vector.multi_reduction <add>, %59, %cst_45 [1] : vector<2x32xf32> to vector<2xf32>
    %61 = vector.shape_cast %60 : vector<2xf32> to vector<2x1xf32>
    %cst_46 = arith.constant 0.000000e+00 : f32
    %62 = vector.broadcast %cst_46 : f32 to vector<2x1xf32>
    %63 = arith.maximumf %61, %62 : vector<2x1xf32>
    %c1_47 = arith.constant 1 : index
    %c0_48 = arith.constant 0 : index
    %64 = vector.load %arg9[%c1_47, %c0_48] : memref<2x32xf32, #tpu.memory_space<vmem>>, vector<1x32xf32>
    %65 = vector.broadcast %63 : vector<2x1xf32> to vector<2x32xf32>
    %66 = vector.broadcast %64 : vector<1x32xf32> to vector<2x32xf32>
    %67 = arith.mulf %65, %66 : vector<2x32xf32>
    %68 = arith.addf %56, %67 : vector<2x32xf32>
    %69 = arith.negf %68 : vector<2x32xf32>
    %70 = math.exp %69 : vector<2x32xf32>
    %cst_49 = arith.constant 1.000000e+00 : f32
    %71 = vector.broadcast %cst_49 : f32 to vector<2x32xf32>
    %72 = arith.addf %71, %70 : vector<2x32xf32>
    %73 = arith.divf %71, %72 : vector<2x32xf32>
    %74 = arith.truncf %73 : vector<2x32xf32> to vector<2x32xbf16>
    %c0_50 = arith.constant 0 : index
    %c0_51 = arith.constant 0 : index
    %75 = vector.load %arg10[%c0_50, %c0_51] : memref<32x512xbf16, #tpu.memory_space<vmem>>, vector<32x512xbf16>
    %cst_52 = arith.constant dense<0.000000e+00> : vector<2x512xf32>
    %76 = tpu.matmul %74, %75, %cst_52 {dimension_numbers = #tpu.dot_dimension_numbers<[1], [0], [0], [1], [0, 0, 1, 1], [], []>} : vector<2x32xbf16>, vector<32x512xbf16>, vector<2x512xf32> -> vector<2x512xf32>
    %77 = vector.shape_cast %33 : vector<32x512xf32> to vector<2x16x512xf32>
    %78 = vector.shape_cast %76 : vector<2x512xf32> to vector<2x1x512xf32>
    %79 = vector.broadcast %78 : vector<2x1x512xf32> to vector<2x16x512xf32>
    %80 = arith.mulf %77, %79 : vector<2x16x512xf32>
    %81 = vector.shape_cast %13 : vector<32x512xf32> to vector<2x16x512xf32>
    %82 = arith.addf %80, %81 : vector<2x16x512xf32>
    %c0_53 = arith.constant 0 : index
    %c0_54 = arith.constant 0 : index
    %c0_55 = arith.constant 0 : index
    %83 = vector.load %arg11[%c0_53, %c0_54, %c0_55] : memref<2x16x512xf32, #tpu.memory_space<vmem>>, vector<2x16x512xf32>
    tpu.vector_store %arg11[%c0_53, %c0_54, %c0_55], %82 {strides = array<i32>} : memref<2x16x512xf32, #tpu.memory_space<vmem>>, vector<2x16x512xf32>,
    return
  }
  func.func @transform_0(%arg0: i32) -> (i32, i32, i32) {
    %c0_i32 = arith.constant 0 : i32
    %c0_i32_0 = arith.constant 0 : i32
    %c0_i32_1 = arith.constant 0 : i32
    return %arg0, %c0_i32, %c0_i32_0 : i32, i32, i32
  }
  func.func @transform_1(%arg0: i32) -> (i32, i32) {
    %c0_i32 = arith.constant 0 : i32
    %c0_i32_0 = arith.constant 0 : i32
    %c0_i32_1 = arith.constant 0 : i32
    return %c0_i32, %c0_i32_0 : i32, i32
  }
  func.func @transform_2(%arg0: i32) -> (i32, i32) {
    %c0_i32 = arith.constant 0 : i32
    %c0_i32_0 = arith.constant 0 : i32
    %c0_i32_1 = arith.constant 0 : i32
    return %c0_i32, %c0_i32_0 : i32, i32
  }
  func.func @transform_3(%arg0: i32) -> (i32, i32) {
    %c0_i32 = arith.constant 0 : i32
    %c0_i32_0 = arith.constant 0 : i32
    %c0_i32_1 = arith.constant 0 : i32
    return %c0_i32, %c0_i32_0 : i32, i32
  }
  func.func @transform_4(%arg0: i32) -> (i32, i32) {
    %c0_i32 = arith.constant 0 : i32
    %c0_i32_0 = arith.constant 0 : i32
    %c0_i32_1 = arith.constant 0 : i32
    return %c0_i32, %c0_i32_0 : i32, i32
  }
  func.func @transform_5(%arg0: i32) -> (i32, i32) {
    %c0_i32 = arith.constant 0 : i32
    %c0_i32_0 = arith.constant 0 : i32
    %c0_i32_1 = arith.constant 0 : i32
    return %c0_i32, %c0_i32_0 : i32, i32
  }
  func.func @transform_6(%arg0: i32) -> (i32, i32) {
    %c0_i32 = arith.constant 0 : i32
    %c0_i32_0 = arith.constant 0 : i32
    %c0_i32_1 = arith.constant 0 : i32
    return %c0_i32, %c0_i32_0 : i32, i32
  }
  func.func @transform_7(%arg0: i32) -> (i32, i32) {
    %c0_i32 = arith.constant 0 : i32
    %c0_i32_0 = arith.constant 0 : i32
    %c0_i32_1 = arith.constant 0 : i32
    return %c0_i32, %c0_i32_0 : i32, i32
  }
  func.func @transform_8(%arg0: i32) -> (i32, i32) {
    %c0_i32 = arith.constant 0 : i32
    %c0_i32_0 = arith.constant 0 : i32
    %c0_i32_1 = arith.constant 0 : i32
    return %c0_i32, %c0_i32_0 : i32, i32
  }
  func.func @transform_9(%arg0: i32) -> (i32, i32) {
    %c0_i32 = arith.constant 0 : i32
    %c0_i32_0 = arith.constant 0 : i32
    %c0_i32_1 = arith.constant 0 : i32
    return %c0_i32, %c0_i32_0 : i32, i32
  }
  func.func @transform_10(%arg0: i32) -> (i32, i32, i32) {
    %c0_i32 = arith.constant 0 : i32
    %c0_i32_0 = arith.constant 0 : i32
    %c0_i32_1 = arith.constant 0 : i32
    return %arg0, %c0_i32, %c0_i32_0 : i32, i32, i32
  }
}

</mosaic_0001>

<llo_original>
// kernel: inconv_forward.1
$region0: #{inconv_forward.1}
  #allocation0 [shape = 'u32[]', space=smem, size = 0x4, offset = 0x4, fixed_abs, tag = 'smem constant byte address 0x4 - core index']
  #allocation1 [shape = 'u32[144,128]{1,0:T(1,128)}', space=vmem, size = 0x12000, scoped, tag = 'internal scratch']
  #allocation2 [shape = 'f32[2,18,512]{2,1,0:T(8,128)}', space=vmem, size = 0x18000, scoped, tag = 'scratch operand']
  %s0 = inlined_call_operand.vmem [shape: bf16[2,16,256], index: 0, kind: input, shape index: {}]
  %s1 = inlined_call_operand.hbm [shape: bf16[256,1024], index: 1, kind: input, shape index: {}]
  %s2 = inlined_call_operand.hbm [shape: f32[1,512], index: 2, kind: input, shape index: {}]
  %s3 = inlined_call_operand.hbm [shape: f32[1,512], index: 3, kind: input, shape index: {}]
  %s4 = inlined_call_operand.hbm [shape: bf16[1536,512], index: 4, kind: input, shape index: {}]
  %s5 = inlined_call_operand.hbm [shape: f32[1,512], index: 5, kind: input, shape index: {}]
  %s6 = inlined_call_operand.vmem [shape: bf16[512,32], index: 6, kind: input, shape index: {}]
  %s7 = inlined_call_operand.hbm [shape: f32[2,32], index: 7, kind: input, shape index: {}]
  %s8 = inlined_call_operand.hbm [shape: f32[2,32], index: 8, kind: input, shape index: {}]
  %s9 = inlined_call_operand.hbm [shape: bf16[32,512], index: 9, kind: input, shape index: {}]
  %s10 = inlined_call_operand.vmem [shape: f32[2,16,512], index: 10, kind: output, shape index: {}]
  %s11 = sld [smem:[#allocation0]]
  $region82: #{inconv_forward.1} parent=0
    _
  %s13 = ssub.s32 1, %s11
  %s14 = scalar_select 0, %s13, %s11
  $region1: #{inconv_forward.1} parent=0
    #allocation3 [shape = 'u8[524288]{0}', space=vmem, size = 0x80000, scoped, tag = 'input window, operand 1, single buffered']
    #allocation4 [shape = 's32[1]{0}', space=sflag, size = 0x4, scoped, tag = 'scoped memory for inconv_forward.1']
    #allocation5 [shape = 'u8[2048]{0}', space=vmem, size = 0x800, scoped, tag = 'input window, operand 2, single buffered']
    #allocation6 [shape = 's32[1]{0}', space=sflag, size = 0x4, scoped, tag = 'scoped memory for inconv_forward.1']
    #allocation7 [shape = 'u8[2048]{0}', space=vmem, size = 0x800, scoped, tag = 'input window, operand 3, single buffered']
    #allocation8 [shape = 'u8[1572864]{0}', space=vmem, size = 0x180000, scoped, tag = 'input window, operand 4, single buffered']
    #allocation9 [shape = 's32[1]{0}', space=sflag, size = 0x4, scoped, tag = 'scoped memory for inconv_forward.1']
    #allocation10 [shape = 'u8[2048]{0}', space=vmem, size = 0x800, scoped, tag = 'input window, operand 5, single buffered']
    #allocation11 [shape = 'u8[1024]{0}', space=vmem, size = 0x400, scoped, tag = 'input window, operand 7, single buffered']
    #allocation12 [shape = 's32[1]{0}', space=sflag, size = 0x4, scoped, tag = 'scoped memory for inconv_forward.1']
    #allocation13 [shape = 'u8[1024]{0}', space=vmem, size = 0x400, scoped, tag = 'input window, operand 8, single buffered']
    #allocation14 [shape = 'u8[32768]{0}', space=vmem, size = 0x8000, scoped, tag = 'input window, operand 9, single buffered']
    #allocation15 [shape = 's32[1]{0}', space=sflag, size = 0x4, scoped, tag = 'scoped memory for inconv_forward.1']
    %15 = vsyncpa [#allocation4], 0
    %16 = vsyncpa [#allocation6], 0
    %17 = vsyncpa [#allocation9], 0
    %18 = vsyncpa [#allocation12], 0
    %19 = vsyncpa [#allocation15], 0
    // Predicated region
    $region2: #{inconv_forward.1} parent=1 // pred_check
      _
    $region3: #{inconv_forward.1} parent=1 // pred_check_branch
      %21 = sbr.rel (0) target = $region5
    $region4: #{inconv_forward.1} parent=1 // pred_region
      _
    $region5: #{inconv_forward.1} parent=1 // pred_fallthru
      _
    // Predicated region
    $region6: #{inconv_forward.1} parent=1 // pred_check
      _
    $region7: #{inconv_forward.1} parent=1 // pred_check_branch
      %23 = sbr.rel (0) target = $region9
    $region8: #{inconv_forward.1} parent=1 // pred_region
      %s25 = ssub.s32 16384, 16384
      %26 = vsyncadd [#allocation4], %s25
      %s27 = sshll.u32 [#allocation3], 4
      %s28 = int_to_ptr.vmem [resolvable:$true] %s27
      %33 = dma.hbm_to_vmem [thread:$0]  %s1, 16384, %s28, [#allocation4], 512, 512, 32
    $region9: #{inconv_forward.1} parent=1 // pred_fallthru
      _
    // Predicated region
    $region10: #{inconv_forward.1} parent=1 // pred_check
      _
    $region11: #{inconv_forward.1} parent=1 // pred_check_branch
      %35 = sbr.rel (0) target = $region13
    $region12: #{inconv_forward.1} parent=1 // pred_region
      %s37 = ssub.s32 64, 64
      %38 = vsyncadd [#allocation6], %s37
      %s40 = sshll.u32 [#allocation5], 4
      %s41 = int_to_ptr.vmem [resolvable:$true] %s40
      %43 = dma.hbm_to_vmem [thread:$0]  %s2, 64, %s41, [#allocation6]
    $region13: #{inconv_forward.1} parent=1 // pred_fallthru
      _
    // Predicated region
    $region14: #{inconv_forward.1} parent=1 // pred_check
      _
    $region15: #{inconv_forward.1} parent=1 // pred_check_branch
      %45 = sbr.rel (0) target = $region17
    $region16: #{inconv_forward.1} parent=1 // pred_region
      %s47 = ssub.s32 64, 64
      %48 = vsyncadd [#allocation6], %s47
      %s50 = sshll.u32 [#allocation7], 4
      %s51 = int_to_ptr.vmem [resolvable:$true] %s50
      %53 = dma.hbm_to_vmem [thread:$0]  %s3, 64, %s51, [#allocation6]
    $region17: #{inconv_forward.1} parent=1 // pred_fallthru
      _
    // Predicated region
    $region18: #{inconv_forward.1} parent=1 // pred_check
      _
    $region19: #{inconv_forward.1} parent=1 // pred_check_branch
      %55 = sbr.rel (0) target = $region21
    $region20: #{inconv_forward.1} parent=1 // pred_region
      %s57 = ssub.s32 49152, 49152
      %58 = vsyncadd [#allocation9], %s57
      %s59 = sshll.u32 [#allocation8], 4
      %s60 = int_to_ptr.vmem [resolvable:$true] %s59
      %65 = dma.hbm_to_vmem [thread:$0]  %s4, 49152, %s60, [#allocation9], 256, 256, 16
    $region21: #{inconv_forward.1} parent=1 // pred_fallthru
      _
    // Predicated region
    $region22: #{inconv_forward.1} parent=1 // pred_check
      _
    $region23: #{inconv_forward.1} parent=1 // pred_check_branch
      %67 = sbr.rel (0) target = $region25
    $region24: #{inconv_forward.1} parent=1 // pred_region
      %s69 = ssub.s32 64, 64
      %70 = vsyncadd [#allocation9], %s69
      %s72 = sshll.u32 [#allocation10], 4
      %s73 = int_to_ptr.vmem [resolvable:$true] %s72
      %75 = dma.hbm_to_vmem [thread:$0]  %s5, 64, %s73, [#allocation9]
    $region25: #{inconv_forward.1} parent=1 // pred_fallthru
      _
    // Predicated region
    $region26: #{inconv_forward.1} parent=1 // pred_check
      _
    $region27: #{inconv_forward.1} parent=1 // pred_check_branch
      %77 = sbr.rel (0) target = $region29
    $region28: #{inconv_forward.1} parent=1 // pred_region
      _
    $region29: #{inconv_forward.1} parent=1 // pred_fallthru
      _
    // Predicated region
    $region30: #{inconv_forward.1} parent=1 // pred_check
      _
    $region31: #{inconv_forward.1} parent=1 // pred_check_branch
      %79 = sbr.rel (0) target = $region33
    $region32: #{inconv_forward.1} parent=1 // pred_region
      %s81 = ssub.s32 32, 32
      %82 = vsyncadd [#allocation12], %s81
      %s84 = sshll.u32 [#allocation11], 4
      %s85 = int_to_ptr.vmem [resolvable:$true] %s84
      %87 = dma.hbm_to_vmem [thread:$0]  %s7, 32, %s85, [#allocation12]
    $region33: #{inconv_forward.1} parent=1 // pred_fallthru
      _
    // Predicated region
    $region34: #{inconv_forward.1} parent=1 // pred_check
      _
    $region35: #{inconv_forward.1} parent=1 // pred_check_branch
      %89 = sbr.rel (0) target = $region37
    $region36: #{inconv_forward.1} parent=1 // pred_region
      %s91 = ssub.s32 32, 32
      %92 = vsyncadd [#allocation12], %s91
      %s94 = sshll.u32 [#allocation13], 4
      %s95 = int_to_ptr.vmem [resolvable:$true] %s94
      %97 = dma.hbm_to_vmem [thread:$0]  %s8, 32, %s95, [#allocation12]
    $region37: #{inconv_forward.1} parent=1 // pred_fallthru
      _
    // Predicated region
    $region38: #{inconv_forward.1} parent=1 // pred_check
      _
    $region39: #{inconv_forward.1} parent=1 // pred_check_branch
      %99 = sbr.rel (0) target = $region41
    $region40: #{inconv_forward.1} parent=1 // pred_region
      %s101 = ssub.s32 1024, 1024
      %102 = vsyncadd [#allocation15], %s101
      %s103 = sshll.u32 [#allocation14], 4
      %s104 = int_to_ptr.vmem [resolvable:$true] %s103
      %109 = dma.hbm_to_vmem [thread:$0]  %s9, 1024, %s104, [#allocation15], 256, 256, 16
    $region41: #{inconv_forward.1} parent=1 // pred_fallthru
      _
    // Predicated region
    $region42: #{inconv_forward.1} parent=1 // pred_check
      _
    $region43: #{inconv_forward.1} parent=1 // pred_check_branch
      %111 = sbr.rel (0) target = $region45
    $region44: #{inconv_forward.1} parent=1 // pred_region
      %112 = dma.done [#allocation4], 16384
    $region45: #{inconv_forward.1} parent=1 // pred_fallthru
      _
    // Predicated region
    $region46: #{inconv_forward.1} parent=1 // pred_check
      _
    $region47: #{inconv_forward.1} parent=1 // pred_check_branch
      %114 = sbr.rel (0) target = $region49
    $region48: #{inconv_forward.1} parent=1 // pred_region
      %115 = dma.done [#allocation6], 64
    $region49: #{inconv_forward.1} parent=1 // pred_fallthru
      _
    // Predicated region
    $region50: #{inconv_forward.1} parent=1 // pred_check
      _
    $region51: #{inconv_forward.1} parent=1 // pred_check_branch
      %117 = sbr.rel (0) target = $region53
    $region52: #{inconv_forward.1} parent=1 // pred_region
      %118 = dma.done [#allocation6], 64
    $region53: #{inconv_forward.1} parent=1 // pred_fallthru
      _
    // Predicated region
    $region54: #{inconv_forward.1} parent=1 // pred_check
      _
    $region55: #{inconv_forward.1} parent=1 // pred_check_branch
      %120 = sbr.rel (0) target = $region57
    $region56: #{inconv_forward.1} parent=1 // pred_region
      %121 = dma.done [#allocation9], 49152
    $region57: #{inconv_forward.1} parent=1 // pred_fallthru
      _
    // Predicated region
    $region58: #{inconv_forward.1} parent=1 // pred_check
      _
    $region59: #{inconv_forward.1} parent=1 // pred_check_branch
      %123 = sbr.rel (0) target = $region61
    $region60: #{inconv_forward.1} parent=1 // pred_region
      %124 = dma.done [#allocation9], 64
    $region61: #{inconv_forward.1} parent=1 // pred_fallthru
      _
    // Predicated region
    $region62: #{inconv_forward.1} parent=1 // pred_check
      _
    $region63: #{inconv_forward.1} parent=1 // pred_check_branch
      %126 = sbr.rel (0) target = $region65
    $region64: #{inconv_forward.1} parent=1 // pred_region
      %127 = dma.done [#allocation12], 32
    $region65: #{inconv_forward.1} parent=1 // pred_fallthru
      _
    // Predicated region
    $region66: #{inconv_forward.1} parent=1 // pred_check
      _
    $region67: #{inconv_forward.1} parent=1 // pred_check_branch
      %129 = sbr.rel (0) target = $region69
    $region68: #{inconv_forward.1} parent=1 // pred_region
      %130 = dma.done [#allocation12], 32
    $region69: #{inconv_forward.1} parent=1 // pred_fallthru
      _
    // Predicated region
    $region70: #{inconv_forward.1} parent=1 // pred_check
      _
    $region71: #{inconv_forward.1} parent=1 // pred_check_branch
      %132 = sbr.rel (0) target = $region73
    $region72: #{inconv_forward.1} parent=1 // pred_region
      %133 = dma.done [#allocation15], 1024
    $region73: #{inconv_forward.1} parent=1 // pred_fallthru
      _
    %v135 = vld [vmem:[%s0] sm:$0xff]
    %v136 = vld [vmem:[%s0 + $0x8] sm:$0xff]
    %v137 = vld [vmem:[%s0 + $0x10] sm:$0xff]
    %v138 = vld [vmem:[%s0 + $0x18] sm:$0xff]
    %v139 = vld [vmem:[#allocation3] sm:$0xff]
    %v140 = vld [vmem:[#allocation3 + $0x8] sm:$0xff]
    %v141 = vld [vmem:[#allocation3 + $0x10] sm:$0xff]
    %v142 = vld [vmem:[#allocation3 + $0x18] sm:$0xff]
    %v143 = vld [vmem:[#allocation3 + $0x20] sm:$0xff]
    %v144 = vld [vmem:[#allocation3 + $0x28] sm:$0xff]
    %v145 = vld [vmem:[#allocation3 + $0x30] sm:$0xff]
    %v146 = vld [vmem:[#allocation3 + $0x38] sm:$0xff]
    %v147 = vld [vmem:[#allocation3 + $0x40] sm:$0xff]
    %v148 = vld [vmem:[#allocation3 + $0x48] sm:$0xff]
    %v149 = vld [vmem:[#allocation3 + $0x50] sm:$0xff]
    %v150 = vld [vmem:[#allocation3 + $0x58] sm:$0xff]
    %v151 = vld [vmem:[#allocation3 + $0x60] sm:$0xff]
    %v152 = vld [vmem:[#allocation3 + $0x68] sm:$0xff]
    %v153 = vld [vmem:[#allocation3 + $0x70] sm:$0xff]
    %v154 = vld [vmem:[#allocation3 + $0x78] sm:$0xff]
    %v155 = vld [vmem:[#allocation3 + $0x80] sm:$0xff]
    %v156 = vld [vmem:[#allocation3 + $0x88] sm:$0xff]
    %v157 = vld [vmem:[#allocation3 + $0x90] sm:$0xff]
    %v158 = vld [vmem:[#allocation3 + $0x98] sm:$0xff]
    %v159 = vld [vmem:[#allocation3 + $0xa0] sm:$0xff]
    %v160 = vld [vmem:[#allocation3 + $0xa8] sm:$0xff]
    %v161 = vld [vmem:[#allocation3 + $0xb0] sm:$0xff]
    %v162 = vld [vmem:[#allocation3 + $0xb8] sm:$0xff]
    %v163 = vld [vmem:[#allocation3 + $0xc0] sm:$0xff]
    %v164 = vld [vmem:[#allocation3 + $0xc8] sm:$0xff]
    %v165 = vld [vmem:[#allocation3 + $0xd0] sm:$0xff]
    %v166 = vld [vmem:[#allocation3 + $0xd8] sm:$0xff]
    %v167 = vld [vmem:[#allocation3 + $0xe0] sm:$0xff]
    %v168 = vld [vmem:[#allocation3 + $0xe8] sm:$0xff]
    %v169 = vld [vmem:[#allocation3 + $0xf0] sm:$0xff]
    %v170 = vld [vmem:[#allocation3 + $0xf8] sm:$0xff]
    %v171 = vld [vmem:[#allocation3 + $0x100] sm:$0xff]
    %v172 = vld [vmem:[#allocation3 + $0x108] sm:$0xff]
    %v173 = vld [vmem:[#allocation3 + $0x110] sm:$0xff]
    %v174 = vld [vmem:[#allocation3 + $0x118] sm:$0xff]
    %v175 = vld [vmem:[#allocation3 + $0x120] sm:$0xff]
    %v176 = vld [vmem:[#allocation3 + $0x128] sm:$0xff]
    %v177 = vld [vmem:[#allocation3 + $0x130] sm:$0xff]
    %v178 = vld [vmem:[#allocation3 + $0x138] sm:$0xff]
    %v179 = vld [vmem:[#allocation3 + $0x140] sm:$0xff]
    %v180 = vld [vmem:[#allocation3 + $0x148] sm:$0xff]
    %v181 = vld [vmem:[#allocation3 + $0x150] sm:$0xff]
    %v182 = vld [vmem:[#allocation3 + $0x158] sm:$0xff]
    %v183 = vld [vmem:[#allocation3 + $0x160] sm:$0xff]
    %v184 = vld [vmem:[#allocation3 + $0x168] sm:$0xff]
    %v185 = vld [vmem:[#allocation3 + $0x170] sm:$0xff]
    %v186 = vld [vmem:[#allocation3 + $0x178] sm:$0xff]
    %v187 = vld [vmem:[#allocation3 + $0x180] sm:$0xff]
    %v188 = vld [vmem:[#allocation3 + $0x188] sm:$0xff]
    %v189 = vld [vmem:[#allocation3 + $0x190] sm:$0xff]
    %v190 = vld [vmem:[#allocation3 + $0x198] sm:$0xff]
    %v191 = vld [vmem:[#allocation3 + $0x1a0] sm:$0xff]
    %v192 = vld [vmem:[#allocation3 + $0x1a8] sm:$0xff]
    %v193 = vld [vmem:[#allocation3 + $0x1b0] sm:$0xff]
    %v194 = vld [vmem:[#allocation3 + $0x1b8] sm:$0xff]
    %v195 = vld [vmem:[#allocation3 + $0x1c0] sm:$0xff]
    %v196 = vld [vmem:[#allocation3 + $0x1c8] sm:$0xff]
    %v197 = vld [vmem:[#allocation3 + $0x1d0] sm:$0xff]
    %v198 = vld [vmem:[#allocation3 + $0x1d8] sm:$0xff]
    %v199 = vld [vmem:[#allocation3 + $0x1e0] sm:$0xff]
    %v200 = vld [vmem:[#allocation3 + $0x1e8] sm:$0xff]
    %v201 = vld [vmem:[#allocation3 + $0x1f0] sm:$0xff]
    %v202 = vld [vmem:[#allocation3 + $0x1f8] sm:$0xff]
    %v203 = vld [vmem:[#allocation3 + $0x200] sm:$0xff]
    %v204 = vld [vmem:[#allocation3 + $0x208] sm:$0xff]
    %v205 = vld [vmem:[#allocation3 + $0x210] sm:$0xff]
    %v206 = vld [vmem:[#allocation3 + $0x218] sm:$0xff]
    %v207 = vld [vmem:[#allocation3 + $0x220] sm:$0xff]
    %v208 = vld [vmem:[#allocation3 + $0x228] sm:$0xff]
    %v209 = vld [vmem:[#allocation3 + $0x230] sm:$0xff]
    %v210 = vld [vmem:[#allocation3 + $0x238] sm:$0xff]
    %v211 = vld [vmem:[#allocation3 + $0x240] sm:$0xff]
    %v212 = vld [vmem:[#allocation3 + $0x248] sm:$0xff]
    %v213 = vld [vmem:[#allocation3 + $0x250] sm:$0xff]
    %v214 = vld [vmem:[#allocation3 + $0x258] sm:$0xff]
    %v215 = vld [vmem:[#allocation3 + $0x260] sm:$0xff]
    %v216 = vld [vmem:[#allocation3 + $0x268] sm:$0xff]
    %v217 = vld [vmem:[#allocation3 + $0x270] sm:$0xff]
    %v218 = vld [vmem:[#allocation3 + $0x278] sm:$0xff]
    %v219 = vld [vmem:[#allocation3 + $0x280] sm:$0xff]
    %v220 = vld [vmem:[#allocation3 + $0x288] sm:$0xff]
    %v221 = vld [vmem:[#allocation3 + $0x290] sm:$0xff]
    %v222 = vld [vmem:[#allocation3 + $0x298] sm:$0xff]
    %v223 = vld [vmem:[#allocation3 + $0x2a0] sm:$0xff]
    %v224 = vld [vmem:[#allocation3 + $0x2a8] sm:$0xff]
    %v225 = vld [vmem:[#allocation3 + $0x2b0] sm:$0xff]
    %v226 = vld [vmem:[#allocation3 + $0x2b8] sm:$0xff]
    %v227 = vld [vmem:[#allocation3 + $0x2c0] sm:$0xff]
    %v228 = vld [vmem:[#allocation3 + $0x2c8] sm:$0xff]
    %v229 = vld [vmem:[#allocation3 + $0x2d0] sm:$0xff]
    %v230 = vld [vmem:[#allocation3 + $0x2d8] sm:$0xff]
    %v231 = vld [vmem:[#allocation3 + $0x2e0] sm:$0xff]
    %v232 = vld [vmem:[#allocation3 + $0x2e8] sm:$0xff]
    %v233 = vld [vmem:[#allocation3 + $0x2f0] sm:$0xff]
    %v234 = vld [vmem:[#allocation3 + $0x2f8] sm:$0xff]
    %v235 = vld [vmem:[#allocation3 + $0x300] sm:$0xff]
    %v236 = vld [vmem:[#allocation3 + $0x308] sm:$0xff]
    %v237 = vld [vmem:[#allocation3 + $0x310] sm:$0xff]
    %v238 = vld [vmem:[#allocation3 + $0x318] sm:$0xff]
    %v239 = vld [vmem:[#allocation3 + $0x320] sm:$0xff]
    %v240 = vld [vmem:[#allocation3 + $0x328] sm:$0xff]
    %v241 = vld [vmem:[#allocation3 + $0x330] sm:$0xff]
    %v242 = vld [vmem:[#allocation3 + $0x338] sm:$0xff]
    %v243 = vld [vmem:[#allocation3 + $0x340] sm:$0xff]
    %v244 = vld [vmem:[#allocation3 + $0x348] sm:$0xff]
    %v245 = vld [vmem:[#allocation3 + $0x350] sm:$0xff]
    %v246 = vld [vmem:[#allocation3 + $0x358] sm:$0xff]
    %v247 = vld [vmem:[#allocation3 + $0x360] sm:$0xff]
    %v248 = vld [vmem:[#allocation3 + $0x368] sm:$0xff]
    %v249 = vld [vmem:[#allocation3 + $0x370] sm:$0xff]
    %v250 = vld [vmem:[#allocation3 + $0x378] sm:$0xff]
    %v251 = vld [vmem:[#allocation3 + $0x380] sm:$0xff]
    %v252 = vld [vmem:[#allocation3 + $0x388] sm:$0xff]
    %v253 = vld [vmem:[#allocation3 + $0x390] sm:$0xff]
    %v254 = vld [vmem:[#allocation3 + $0x398] sm:$0xff]
    %v255 = vld [vmem:[#allocation3 + $0x3a0] sm:$0xff]
    %v256 = vld [vmem:[#allocation3 + $0x3a8] sm:$0xff]
    %v257 = vld [vmem:[#allocation3 + $0x3b0] sm:$0xff]
    %v258 = vld [vmem:[#allocation3 + $0x3b8] sm:$0xff]
    %v259 = vld [vmem:[#allocation3 + $0x3c0] sm:$0xff]
    %v260 = vld [vmem:[#allocation3 + $0x3c8] sm:$0xff]
    %v261 = vld [vmem:[#allocation3 + $0x3d0] sm:$0xff]
    %v262 = vld [vmem:[#allocation3 + $0x3d8] sm:$0xff]
    %v263 = vld [vmem:[#allocation3 + $0x3e0] sm:$0xff]
    %v264 = vld [vmem:[#allocation3 + $0x3e8] sm:$0xff]
    %v265 = vld [vmem:[#allocation3 + $0x3f0] sm:$0xff]
    %v266 = vld [vmem:[#allocation3 + $0x3f8] sm:$0xff]
    %v271 = vunpack.c.l.b16 %v135
    %v272 = vunpack.c.h.b16 %v135
    %v273 = vunpack.c.l.b16 %v136
    %v274 = vunpack.c.h.b16 %v136
    %v275 = vunpack.c.l.b16 %v137
    %v276 = vunpack.c.h.b16 %v137
    %v277 = vunpack.c.l.b16 %v138
    %v278 = vunpack.c.h.b16 %v138
    %v279 = vpack.c.b16 %v273, %v271
    %v280 = vpack.c.b16 %v274, %v272
    %v281 = vpack.c.b16 %v277, %v275
    %v282 = vpack.c.b16 %v278, %v276
    %v415 = vunpack.c.l.b16 %v139
    %v416 = vunpack.c.h.b16 %v139
    %v417 = vunpack.c.l.b16 %v140
    %v418 = vunpack.c.h.b16 %v140
    %v419 = vunpack.c.l.b16 %v141
    %v420 = vunpack.c.h.b16 %v141
    %v421 = vunpack.c.l.b16 %v142
    %v422 = vunpack.c.h.b16 %v142
    %v423 = vunpack.c.l.b16 %v143
    %v424 = vunpack.c.h.b16 %v143
    %v425 = vunpack.c.l.b16 %v144
    %v426 = vunpack.c.h.b16 %v144
    %v427 = vunpack.c.l.b16 %v145
    %v428 = vunpack.c.h.b16 %v145
    %v429 = vunpack.c.l.b16 %v146
    %v430 = vunpack.c.h.b16 %v146
    %v431 = vunpack.c.l.b16 %v147
    %v432 = vunpack.c.h.b16 %v147
    %v433 = vunpack.c.l.b16 %v148
    %v434 = vunpack.c.h.b16 %v148
    %v435 = vunpack.c.l.b16 %v149
    %v436 = vunpack.c.h.b16 %v149
    %v437 = vunpack.c.l.b16 %v150
    %v438 = vunpack.c.h.b16 %v150
    %v439 = vunpack.c.l.b16 %v151
    %v440 = vunpack.c.h.b16 %v151
    %v441 = vunpack.c.l.b16 %v152
    %v442 = vunpack.c.h.b16 %v152
    %v443 = vunpack.c.l.b16 %v153
    %v444 = vunpack.c.h.b16 %v153
    %v445 = vunpack.c.l.b16 %v154
    %v446 = vunpack.c.h.b16 %v154
    %v447 = vunpack.c.l.b16 %v155
    %v448 = vunpack.c.h.b16 %v155
    %v449 = vunpack.c.l.b16 %v156
    %v450 = vunpack.c.h.b16 %v156
    %v451 = vunpack.c.l.b16 %v157
    %v452 = vunpack.c.h.b16 %v157
    %v453 = vunpack.c.l.b16 %v158
    %v454 = vunpack.c.h.b16 %v158
    %v455 = vunpack.c.l.b16 %v159
    %v456 = vunpack.c.h.b16 %v159
    %v457 = vunpack.c.l.b16 %v160
    %v458 = vunpack.c.h.b16 %v160
    %v459 = vunpack.c.l.b16 %v161
    %v460 = vunpack.c.h.b16 %v161
    %v461 = vunpack.c.l.b16 %v162
    %v462 = vunpack.c.h.b16 %v162
    %v463 = vunpack.c.l.b16 %v163
    %v464 = vunpack.c.h.b16 %v163
    %v465 = vunpack.c.l.b16 %v164
    %v466 = vunpack.c.h.b16 %v164
    %v467 = vunpack.c.l.b16 %v165
    %v468 = vunpack.c.h.b16 %v165
    %v469 = vunpack.c.l.b16 %v166
    %v470 = vunpack.c.h.b16 %v166
    %v471 = vunpack.c.l.b16 %v167
    %v472 = vunpack.c.h.b16 %v167
    %v473 = vunpack.c.l.b16 %v168
    %v474 = vunpack.c.h.b16 %v168
    %v475 = vunpack.c.l.b16 %v169
    %v476 = vunpack.c.h.b16 %v169
    %v477 = vunpack.c.l.b16 %v170
    %v478 = vunpack.c.h.b16 %v170
    %v479 = vunpack.c.l.b16 %v171
    %v480 = vunpack.c.h.b16 %v171
    %v481 = vunpack.c.l.b16 %v172
    %v482 = vunpack.c.h.b16 %v172
    %v483 = vunpack.c.l.b16 %v173
    %v484 = vunpack.c.h.b16 %v173
    %v485 = vunpack.c.l.b16 %v174
    %v486 = vunpack.c.h.b16 %v174
    %v487 = vunpack.c.l.b16 %v175
    %v488 = vunpack.c.h.b16 %v175
    %v489 = vunpack.c.l.b16 %v176
    %v490 = vunpack.c.h.b16 %v176
    %v491 = vunpack.c.l.b16 %v177
    %v492 = vunpack.c.h.b16 %v177
    %v493 = vunpack.c.l.b16 %v178
    %v494 = vunpack.c.h.b16 %v178
    %v495 = vunpack.c.l.b16 %v179
    %v496 = vunpack.c.h.b16 %v179
    %v497 = vunpack.c.l.b16 %v180
    %v498 = vunpack.c.h.b16 %v180
    %v499 = vunpack.c.l.b16 %v181
    %v500 = vunpack.c.h.b16 %v181
    %v501 = vunpack.c.l.b16 %v182
    %v502 = vunpack.c.h.b16 %v182
    %v503 = vunpack.c.l.b16 %v183
    %v504 = vunpack.c.h.b16 %v183
    %v505 = vunpack.c.l.b16 %v184
    %v506 = vunpack.c.h.b16 %v184
    %v507 = vunpack.c.l.b16 %v185
    %v508 = vunpack.c.h.b16 %v185
    %v509 = vunpack.c.l.b16 %v186
    %v510 = vunpack.c.h.b16 %v186
    %v511 = vunpack.c.l.b16 %v187
    %v512 = vunpack.c.h.b16 %v187
    %v513 = vunpack.c.l.b16 %v188
    %v514 = vunpack.c.h.b16 %v188
    %v515 = vunpack.c.l.b16 %v189
    %v516 = vunpack.c.h.b16 %v189
    %v517 = vunpack.c.l.b16 %v190
    %v518 = vunpack.c.h.b16 %v190
    %v519 = vunpack.c.l.b16 %v191
    %v520 = vunpack.c.h.b16 %v191
    %v521 = vunpack.c.l.b16 %v192
    %v522 = vunpack.c.h.b16 %v192
    %v523 = vunpack.c.l.b16 %v193
    %v524 = vunpack.c.h.b16 %v193
    %v525 = vunpack.c.l.b16 %v194
    %v526 = vunpack.c.h.b16 %v194
    %v527 = vunpack.c.l.b16 %v195
    %v528 = vunpack.c.h.b16 %v195
    %v529 = vunpack.c.l.b16 %v196
    %v530 = vunpack.c.h.b16 %v196
    %v531 = vunpack.c.l.b16 %v197
    %v532 = vunpack.c.h.b16 %v197
    %v533 = vunpack.c.l.b16 %v198
    %v534 = vunpack.c.h.b16 %v198
    %v535 = vunpack.c.l.b16 %v199
    %v536 = vunpack.c.h.b16 %v199
    %v537 = vunpack.c.l.b16 %v200
    %v538 = vunpack.c.h.b16 %v200
    %v539 = vunpack.c.l.b16 %v201
    %v540 = vunpack.c.h.b16 %v201
    %v541 = vunpack.c.l.b16 %v202
    %v542 = vunpack.c.h.b16 %v202
    %v543 = vunpack.c.l.b16 %v203
    %v544 = vunpack.c.h.b16 %v203
    %v545 = vunpack.c.l.b16 %v204
    %v546 = vunpack.c.h.b16 %v204
    %v547 = vunpack.c.l.b16 %v205
    %v548 = vunpack.c.h.b16 %v205
    %v549 = vunpack.c.l.b16 %v206
    %v550 = vunpack.c.h.b16 %v206
    %v551 = vunpack.c.l.b16 %v207
    %v552 = vunpack.c.h.b16 %v207
    %v553 = vunpack.c.l.b16 %v208
    %v554 = vunpack.c.h.b16 %v208
    %v555 = vunpack.c.l.b16 %v209
    %v556 = vunpack.c.h.b16 %v209
    %v557 = vunpack.c.l.b16 %v210
    %v558 = vunpack.c.h.b16 %v210
    %v559 = vunpack.c.l.b16 %v211
    %v560 = vunpack.c.h.b16 %v211
    %v561 = vunpack.c.l.b16 %v212
    %v562 = vunpack.c.h.b16 %v212
    %v563 = vunpack.c.l.b16 %v213
    %v564 = vunpack.c.h.b16 %v213
    %v565 = vunpack.c.l.b16 %v214
    %v566 = vunpack.c.h.b16 %v214
    %v567 = vunpack.c.l.b16 %v215
    %v568 = vunpack.c.h.b16 %v215
    %v569 = vunpack.c.l.b16 %v216
    %v570 = vunpack.c.h.b16 %v216
    %v571 = vunpack.c.l.b16 %v217
    %v572 = vunpack.c.h.b16 %v217
    %v573 = vunpack.c.l.b16 %v218
    %v574 = vunpack.c.h.b16 %v218
    %v575 = vunpack.c.l.b16 %v219
    %v576 = vunpack.c.h.b16 %v219
    %v577 = vunpack.c.l.b16 %v220
    %v578 = vunpack.c.h.b16 %v220
    %v579 = vunpack.c.l.b16 %v221
    %v580 = vunpack.c.h.b16 %v221
    %v581 = vunpack.c.l.b16 %v222
    %v582 = vunpack.c.h.b16 %v222
    %v583 = vunpack.c.l.b16 %v223
    %v584 = vunpack.c.h.b16 %v223
    %v585 = vunpack.c.l.b16 %v224
    %v586 = vunpack.c.h.b16 %v224
    %v587 = vunpack.c.l.b16 %v225
    %v588 = vunpack.c.h.b16 %v225
    %v589 = vunpack.c.l.b16 %v226
    %v590 = vunpack.c.h.b16 %v226
    %v591 = vunpack.c.l.b16 %v227
    %v592 = vunpack.c.h.b16 %v227
    %v593 = vunpack.c.l.b16 %v228
    %v594 = vunpack.c.h.b16 %v228
    %v595 = vunpack.c.l.b16 %v229
    %v596 = vunpack.c.h.b16 %v229
    %v597 = vunpack.c.l.b16 %v230
    %v598 = vunpack.c.h.b16 %v230
    %v599 = vunpack.c.l.b16 %v231
    %v600 = vunpack.c.h.b16 %v231
    %v601 = vunpack.c.l.b16 %v232
    %v602 = vunpack.c.h.b16 %v232
    %v603 = vunpack.c.l.b16 %v233
    %v604 = vunpack.c.h.b16 %v233
    %v605 = vunpack.c.l.b16 %v234
    %v606 = vunpack.c.h.b16 %v234
    %v607 = vunpack.c.l.b16 %v235
    %v608 = vunpack.c.h.b16 %v235
    %v609 = vunpack.c.l.b16 %v236
    %v610 = vunpack.c.h.b16 %v236
    %v611 = vunpack.c.l.b16 %v237
    %v612 = vunpack.c.h.b16 %v237
    %v613 = vunpack.c.l.b16 %v238
    %v614 = vunpack.c.h.b16 %v238
    %v615 = vunpack.c.l.b16 %v239
    %v616 = vunpack.c.h.b16 %v239
    %v617 = vunpack.c.l.b16 %v240
    %v618 = vunpack.c.h.b16 %v240
    %v619 = vunpack.c.l.b16 %v241
    %v620 = vunpack.c.h.b16 %v241
    %v621 = vunpack.c.l.b16 %v242
    %v622 = vunpack.c.h.b16 %v242
    %v623 = vunpack.c.l.b16 %v243
    %v624 = vunpack.c.h.b16 %v243
    %v625 = vunpack.c.l.b16 %v244
    %v626 = vunpack.c.h.b16 %v244
    %v627 = vunpack.c.l.b16 %v245
    %v628 = vunpack.c.h.b16 %v245
    %v629 = vunpack.c.l.b16 %v246
    %v630 = vunpack.c.h.b16 %v246
    %v631 = vunpack.c.l.b16 %v247
    %v632 = vunpack.c.h.b16 %v247
    %v633 = vunpack.c.l.b16 %v248
    %v634 = vunpack.c.h.b16 %v248
    %v635 = vunpack.c.l.b16 %v249
    %v636 = vunpack.c.h.b16 %v249
    %v637 = vunpack.c.l.b16 %v250
    %v638 = vunpack.c.h.b16 %v250
    %v639 = vunpack.c.l.b16 %v251
    %v640 = vunpack.c.h.b16 %v251
    %v641 = vunpack.c.l.b16 %v252
    %v642 = vunpack.c.h.b16 %v252
    %v643 = vunpack.c.l.b16 %v253
    %v644 = vunpack.c.h.b16 %v253
    %v645 = vunpack.c.l.b16 %v254
    %v646 = vunpack.c.h.b16 %v254
    %v647 = vunpack.c.l.b16 %v255
    %v648 = vunpack.c.h.b16 %v255
    %v649 = vunpack.c.l.b16 %v256
    %v650 = vunpack.c.h.b16 %v256
    %v651 = vunpack.c.l.b16 %v257
    %v652 = vunpack.c.h.b16 %v257
    %v653 = vunpack.c.l.b16 %v258
    %v654 = vunpack.c.h.b16 %v258
    %v655 = vunpack.c.l.b16 %v259
    %v656 = vunpack.c.h.b16 %v259
    %v657 = vunpack.c.l.b16 %v260
    %v658 = vunpack.c.h.b16 %v260
    %v659 = vunpack.c.l.b16 %v261
    %v660 = vunpack.c.h.b16 %v261
    %v661 = vunpack.c.l.b16 %v262
    %v662 = vunpack.c.h.b16 %v262
    %v663 = vunpack.c.l.b16 %v263
    %v664 = vunpack.c.h.b16 %v263
    %v665 = vunpack.c.l.b16 %v264
    %v666 = vunpack.c.h.b16 %v264
    %v667 = vunpack.c.l.b16 %v265
    %v668 = vunpack.c.h.b16 %v265
    %v669 = vunpack.c.l.b16 %v266
    %v670 = vunpack.c.h.b16 %v266
    %v671 = vpack.c.b16 %v423, %v415
    %v672 = vpack.c.b16 %v424, %v416
    %v673 = vpack.c.b16 %v425, %v417
    %v674 = vpack.c.b16 %v426, %v418
    %v675 = vpack.c.b16 %v427, %v419
    %v676 = vpack.c.b16 %v428, %v420
    %v677 = vpack.c.b16 %v429, %v421
    %v678 = vpack.c.b16 %v430, %v422
    %v679 = vpack.c.b16 %v439, %v431
    %v680 = vpack.c.b16 %v440, %v432
    %v681 = vpack.c.b16 %v441, %v433
    %v682 = vpack.c.b16 %v442, %v434
    %v683 = vpack.c.b16 %v443, %v435
    %v684 = vpack.c.b16 %v444, %v436
    %v685 = vpack.c.b16 %v445, %v437
    %v686 = vpack.c.b16 %v446, %v438
    %v687 = vpack.c.b16 %v455, %v447
    %v688 = vpack.c.b16 %v456, %v448
    %v689 = vpack.c.b16 %v457, %v449
    %v690 = vpack.c.b16 %v458, %v450
    %v691 = vpack.c.b16 %v459, %v451
    %v692 = vpack.c.b16 %v460, %v452
    %v693 = vpack.c.b16 %v461, %v453
    %v694 = vpack.c.b16 %v462, %v454
    %v695 = vpack.c.b16 %v471, %v463
    %v696 = vpack.c.b16 %v472, %v464
    %v697 = vpack.c.b16 %v473, %v465
    %v698 = vpack.c.b16 %v474, %v466
    %v699 = vpack.c.b16 %v475, %v467
    %v700 = vpack.c.b16 %v476, %v468
    %v701 = vpack.c.b16 %v477, %v469
    %v702 = vpack.c.b16 %v478, %v470
    %v703 = vpack.c.b16 %v487, %v479
    %v704 = vpack.c.b16 %v488, %v480
    %v705 = vpack.c.b16 %v489, %v481
    %v706 = vpack.c.b16 %v490, %v482
    %v707 = vpack.c.b16 %v491, %v483
    %v708 = vpack.c.b16 %v492, %v484
    %v709 = vpack.c.b16 %v493, %v485
    %v710 = vpack.c.b16 %v494, %v486
    %v711 = vpack.c.b16 %v503, %v495
    %v712 = vpack.c.b16 %v504, %v496
    %v713 = vpack.c.b16 %v505, %v497
    %v714 = vpack.c.b16 %v506, %v498
    %v715 = vpack.c.b16 %v507, %v499
    %v716 = vpack.c.b16 %v508, %v500
    %v717 = vpack.c.b16 %v509, %v501
    %v718 = vpack.c.b16 %v510, %v502
    %v719 = vpack.c.b16 %v519, %v511
    %v720 = vpack.c.b16 %v520, %v512
    %v721 = vpack.c.b16 %v521, %v513
    %v722 = vpack.c.b16 %v522, %v514
    %v723 = vpack.c.b16 %v523, %v515
    %v724 = vpack.c.b16 %v524, %v516
    %v725 = vpack.c.b16 %v525, %v517
    %v726 = vpack.c.b16 %v526, %v518
    %v727 = vpack.c.b16 %v535, %v527
    %v728 = vpack.c.b16 %v536, %v528
    %v729 = vpack.c.b16 %v537, %v529
    %v730 = vpack.c.b16 %v538, %v530
    %v731 = vpack.c.b16 %v539, %v531
    %v732 = vpack.c.b16 %v540, %v532
    %v733 = vpack.c.b16 %v541, %v533
    %v734 = vpack.c.b16 %v542, %v534
    %v735 = vpack.c.b16 %v551, %v543
    %v736 = vpack.c.b16 %v552, %v544
    %v737 = vpack.c.b16 %v553, %v545
    %v738 = vpack.c.b16 %v554, %v546
    %v739 = vpack.c.b16 %v555, %v547
    %v740 = vpack.c.b16 %v556, %v548
    %v741 = vpack.c.b16 %v557, %v549
    %v742 = vpack.c.b16 %v558, %v550
    %v743 = vpack.c.b16 %v567, %v559
    %v744 = vpack.c.b16 %v568, %v560
    %v745 = vpack.c.b16 %v569, %v561
    %v746 = vpack.c.b16 %v570, %v562
    %v747 = vpack.c.b16 %v571, %v563
    %v748 = vpack.c.b16 %v572, %v564
    %v749 = vpack.c.b16 %v573, %v565
    %v750 = vpack.c.b16 %v574, %v566
    %v751 = vpack.c.b16 %v583, %v575
    %v752 = vpack.c.b16 %v584, %v576
    %v753 = vpack.c.b16 %v585, %v577
    %v754 = vpack.c.b16 %v586, %v578
    %v755 = vpack.c.b16 %v587, %v579
    %v756 = vpack.c.b16 %v588, %v580
    %v757 = vpack.c.b16 %v589, %v581
    %v758 = vpack.c.b16 %v590, %v582
    %v759 = vpack.c.b16 %v599, %v591
    %v760 = vpack.c.b16 %v600, %v592
    %v761 = vpack.c.b16 %v601, %v593
    %v762 = vpack.c.b16 %v602, %v594
    %v763 = vpack.c.b16 %v603, %v595
    %v764 = vpack.c.b16 %v604, %v596
    %v765 = vpack.c.b16 %v605, %v597
    %v766 = vpack.c.b16 %v606, %v598
    %v767 = vpack.c.b16 %v615, %v607
    %v768 = vpack.c.b16 %v616, %v608
    %v769 = vpack.c.b16 %v617, %v609
    %v770 = vpack.c.b16 %v618, %v610
    %v771 = vpack.c.b16 %v619, %v611
    %v772 = vpack.c.b16 %v620, %v612
    %v773 = vpack.c.b16 %v621, %v613
    %v774 = vpack.c.b16 %v622, %v614
    %v775 = vpack.c.b16 %v631, %v623
    %v776 = vpack.c.b16 %v632, %v624
    %v777 = vpack.c.b16 %v633, %v625
    %v778 = vpack.c.b16 %v634, %v626
    %v779 = vpack.c.b16 %v635, %v627
    %v780 = vpack.c.b16 %v636, %v628
    %v781 = vpack.c.b16 %v637, %v629
    %v782 = vpack.c.b16 %v638, %v630
    %v783 = vpack.c.b16 %v647, %v639
    %v784 = vpack.c.b16 %v648, %v640
    %v785 = vpack.c.b16 %v649, %v641
    %v786 = vpack.c.b16 %v650, %v642
    %v787 = vpack.c.b16 %v651, %v643
    %v788 = vpack.c.b16 %v652, %v644
    %v789 = vpack.c.b16 %v653, %v645
    %v790 = vpack.c.b16 %v654, %v646
    %v791 = vpack.c.b16 %v663, %v655
    %v792 = vpack.c.b16 %v664, %v656
    %v793 = vpack.c.b16 %v665, %v657
    %v794 = vpack.c.b16 %v666, %v658
    %v795 = vpack.c.b16 %v667, %v659
    %v796 = vpack.c.b16 %v668, %v660
    %v797 = vpack.c.b16 %v669, %v661
    %v798 = vpack.c.b16 %v670, %v662
    %927 = vmatprep.subr.bf16.mxu0 %v672
    %928 = vmatpush1.bf16.msra.mxu0 %v671
    %929 = vmatprep.subr.bf16.mxu0 %v680
    %930 = vmatpush1.bf16.msra.mxu0 %v679
    %931 = vmatprep.subr.bf16.mxu0 %v688
    %932 = vmatpush1.bf16.msra.mxu0 %v687
    %933 = vmatprep.subr.bf16.mxu0 %v696
    %934 = vmatpush1.bf16.msra.mxu0 %v695
    %935 = vmatprep.subr.bf16.mxu0 %v704
    %936 = vmatpush1.bf16.msra.mxu0 %v703
    %937 = vmatprep.subr.bf16.mxu0 %v712
    %938 = vmatpush1.bf16.msra.mxu0 %v711
    %939 = vmatprep.subr.bf16.mxu0 %v720
    %940 = vmatpush1.bf16.msra.mxu0 %v719
    %941 = vmatprep.subr.bf16.mxu0 %v728
    %942 = vmatpush1.bf16.msra.mxu0 %v727
    %943 = vmatprep.subr.bf16.mxu0 %v736
    %944 = vmatpush1.bf16.msra.mxu0 %v735
    %945 = vmatprep.subr.bf16.mxu0 %v744
    %946 = vmatpush1.bf16.msra.mxu0 %v743
    %947 = vmatprep.subr.bf16.mxu0 %v752
    %948 = vmatpush1.bf16.msra.mxu0 %v751
    %949 = vmatprep.subr.bf16.mxu0 %v760
    %950 = vmatpush1.bf16.msra.mxu0 %v759
    %951 = vmatprep.subr.bf16.mxu0 %v768
    %952 = vmatpush1.bf16.msra.mxu0 %v767
    %953 = vmatprep.subr.bf16.mxu0 %v776
    %954 = vmatpush1.bf16.msra.mxu0 %v775
    %955 = vmatprep.subr.bf16.mxu0 %v784
    %956 = vmatpush1.bf16.msra.mxu0 %v783
    %957 = vmatprep.subr.bf16.mxu0 %v792
    %958 = vmatpush1.bf16.msra.mxu0 %v791
    %959 = vmatprep.mubr.bf16.mxu0 %v280
    %960 = vmatmul.mubr.bf16.gmra.mrb[0].mxu0 %v279
    %v961 = vpop.f32.mrb[0].mxu0
    %v962 = vadd.f32 0.0, %v961
    %v963 = vpop.f32.mrb[0].mxu0
    %v964 = vadd.f32 0.0, %v963
    %v965 = vpop.f32.mrb[0].mxu0
    %v966 = vadd.f32 0.0, %v965
    %v967 = vpop.f32.mrb[0].mxu0
    %v968 = vadd.f32 0.0, %v967
    %969 = vmatprep.mubr.bf16.mxu0 %v282
    %970 = vmatmul.mubr.bf16.gmra.mrb[0].mxu0 %v281
    %v971 = vpop.f32.mrb[0].mxu0
    %v972 = vadd.f32 0.0, %v971
    %v973 = vpop.f32.mrb[0].mxu0
    %v974 = vadd.f32 0.0, %v973
    %v975 = vpop.f32.mrb[0].mxu0
    %v976 = vadd.f32 0.0, %v975
    %v977 = vpop.f32.mrb[0].mxu0
    %v978 = vadd.f32 0.0, %v977
    %979 = vdwg.mxu0
    %980 = vmatprep.subr.bf16.mxu0 %v674
    %981 = vmatpush1.bf16.msra.mxu0 %v673
    %982 = vmatprep.subr.bf16.mxu0 %v682
    %983 = vmatpush1.bf16.msra.mxu0 %v681
    %984 = vmatprep.subr.bf16.mxu0 %v690
    %985 = vmatpush1.bf16.msra.mxu0 %v689
    %986 = vmatprep.subr.bf16.mxu0 %v698
    %987 = vmatpush1.bf16.msra.mxu0 %v697
    %988 = vmatprep.subr.bf16.mxu0 %v706
    %989 = vmatpush1.bf16.msra.mxu0 %v705
    %990 = vmatprep.subr.bf16.mxu0 %v714
    %991 = vmatpush1.bf16.msra.mxu0 %v713
    %992 = vmatprep.subr.bf16.mxu0 %v722
    %993 = vmatpush1.bf16.msra.mxu0 %v721
    %994 = vmatprep.subr.bf16.mxu0 %v730
    %995 = vmatpush1.bf16.msra.mxu0 %v729
    %996 = vmatprep.subr.bf16.mxu0 %v738
    %997 = vmatpush1.bf16.msra.mxu0 %v737
    %998 = vmatprep.subr.bf16.mxu0 %v746
    %999 = vmatpush1.bf16.msra.mxu0 %v745
    %1000 = vmatprep.subr.bf16.mxu0 %v754
    %1001 = vmatpush1.bf16.msra.mxu0 %v753
    %1002 = vmatprep.subr.bf16.mxu0 %v762
    %1003 = vmatpush1.bf16.msra.mxu0 %v761
    %1004 = vmatprep.subr.bf16.mxu0 %v770
    %1005 = vmatpush1.bf16.msra.mxu0 %v769
    %1006 = vmatprep.subr.bf16.mxu0 %v778
    %1007 = vmatpush1.bf16.msra.mxu0 %v777
    %1008 = vmatprep.subr.bf16.mxu0 %v786
    %1009 = vmatpush1.bf16.msra.mxu0 %v785
    %1010 = vmatprep.subr.bf16.mxu0 %v794
    %1011 = vmatpush1.bf16.msra.mxu0 %v793
    %1012 = vmatprep.mubr.bf16.mxu0 %v280
    %1013 = vmatmul.mubr.bf16.gmra.mrb[0].mxu0 %v279
    %v1014 = vpop.f32.mrb[0].mxu0
    %v1015 = vadd.f32 0.0, %v1014
    %v1016 = vpop.f32.mrb[0].mxu0
    %v1017 = vadd.f32 0.0, %v1016
    %v1018 = vpop.f32.mrb[0].mxu0
    %v1019 = vadd.f32 0.0, %v1018
    %v1020 = vpop.f32.mrb[0].mxu0
    %v1021 = vadd.f32 0.0, %v1020
    %1022 = vmatprep.mubr.bf16.mxu0 %v282
    %1023 = vmatmul.mubr.bf16.gmra.mrb[0].mxu0 %v281
    %v1024 = vpop.f32.mrb[0].mxu0
    %v1025 = vadd.f32 0.0, %v1024
    %v1026 = vpop.f32.mrb[0].mxu0
    %v1027 = vadd.f32 0.0, %v1026
    %v1028 = vpop.f32.mrb[0].mxu0
    %v1029 = vadd.f32 0.0, %v1028
    %v1030 = vpop.f32.mrb[0].mxu0
    %v1031 = vadd.f32 0.0, %v1030
    %1032 = vdwg.mxu0
    %1033 = vmatprep.subr.bf16.mxu0 %v676
    %1034 = vmatpush1.bf16.msra.mxu0 %v675
    %1035 = vmatprep.subr.bf16.mxu0 %v684
    %1036 = vmatpush1.bf16.msra.mxu0 %v683
    %1037 = vmatprep.subr.bf16.mxu0 %v692
    %1038 = vmatpush1.bf16.msra.mxu0 %v691
    %1039 = vmatprep.subr.bf16.mxu0 %v700
    %1040 = vmatpush1.bf16.msra.mxu0 %v699
    %1041 = vmatprep.subr.bf16.mxu0 %v708
    %1042 = vmatpush1.bf16.msra.mxu0 %v707
    %1043 = vmatprep.subr.bf16.mxu0 %v716
    %1044 = vmatpush1.bf16.msra.mxu0 %v715
    %1045 = vmatprep.subr.bf16.mxu0 %v724
    %1046 = vmatpush1.bf16.msra.mxu0 %v723
    %1047 = vmatprep.subr.bf16.mxu0 %v732
    %1048 = vmatpush1.bf16.msra.mxu0 %v731
    %1049 = vmatprep.subr.bf16.mxu0 %v740
    %1050 = vmatpush1.bf16.msra.mxu0 %v739
    %1051 = vmatprep.subr.bf16.mxu0 %v748
    %1052 = vmatpush1.bf16.msra.mxu0 %v747
    %1053 = vmatprep.subr.bf16.mxu0 %v756
    %1054 = vmatpush1.bf16.msra.mxu0 %v755
    %1055 = vmatprep.subr.bf16.mxu0 %v764
    %1056 = vmatpush1.bf16.msra.mxu0 %v763
    %1057 = vmatprep.subr.bf16.mxu0 %v772
    %1058 = vmatpush1.bf16.msra.mxu0 %v771
    %1059 = vmatprep.subr.bf16.mxu0 %v780
    %1060 = vmatpush1.bf16.msra.mxu0 %v779
    %1061 = vmatprep.subr.bf16.mxu0 %v788
    %1062 = vmatpush1.bf16.msra.mxu0 %v787
    %1063 = vmatprep.subr.bf16.mxu0 %v796
    %1064 = vmatpush1.bf16.msra.mxu0 %v795
    %1065 = vmatprep.mubr.bf16.mxu0 %v280
    %1066 = vmatmul.mubr.bf16.gmra.mrb[0].mxu0 %v279
    %v1067 = vpop.f32.mrb[0].mxu0
    %v1068 = vadd.f32 0.0, %v1067
    %v1069 = vpop.f32.mrb[0].mxu0
    %v1070 = vadd.f32 0.0, %v1069
    %v1071 = vpop.f32.mrb[0].mxu0
    %v1072 = vadd.f32 0.0, %v1071
    %v1073 = vpop.f32.mrb[0].mxu0
    %v1074 = vadd.f32 0.0, %v1073
    %1075 = vmatprep.mubr.bf16.mxu0 %v282
    %1076 = vmatmul.mubr.bf16.gmra.mrb[0].mxu0 %v281
    %v1077 = vpop.f32.mrb[0].mxu0
    %v1078 = vadd.f32 0.0, %v1077
    %v1079 = vpop.f32.mrb[0].mxu0
    %v1080 = vadd.f32 0.0, %v1079
    %v1081 = vpop.f32.mrb[0].mxu0
    %v1082 = vadd.f32 0.0, %v1081
    %v1083 = vpop.f32.mrb[0].mxu0
    %v1084 = vadd.f32 0.0, %v1083
    %1085 = vdwg.mxu0
    %1086 = vmatprep.subr.bf16.mxu0 %v678
    %1087 = vmatpush1.bf16.msra.mxu0 %v677
    %1088 = vmatprep.subr.bf16.mxu0 %v686
    %1089 = vmatpush1.bf16.msra.mxu0 %v685
    %1090 = vmatprep.subr.bf16.mxu0 %v694
    %1091 = vmatpush1.bf16.msra.mxu0 %v693
    %1092 = vmatprep.subr.bf16.mxu0 %v702
    %1093 = vmatpush1.bf16.msra.mxu0 %v701
    %1094 = vmatprep.subr.bf16.mxu0 %v710
    %1095 = vmatpush1.bf16.msra.mxu0 %v709
    %1096 = vmatprep.subr.bf16.mxu0 %v718
    %1097 = vmatpush1.bf16.msra.mxu0 %v717
    %1098 = vmatprep.subr.bf16.mxu0 %v726
    %1099 = vmatpush1.bf16.msra.mxu0 %v725
    %1100 = vmatprep.subr.bf16.mxu0 %v734
    %1101 = vmatpush1.bf16.msra.mxu0 %v733
    %1102 = vmatprep.subr.bf16.mxu0 %v742
    %1103 = vmatpush1.bf16.msra.mxu0 %v741
    %1104 = vmatprep.subr.bf16.mxu0 %v750
    %1105 = vmatpush1.bf16.msra.mxu0 %v749
    %1106 = vmatprep.subr.bf16.mxu0 %v758
    %1107 = vmatpush1.bf16.msra.mxu0 %v757
    %1108 = vmatprep.subr.bf16.mxu0 %v766
    %1109 = vmatpush1.bf16.msra.mxu0 %v765
    %1110 = vmatprep.subr.bf16.mxu0 %v774
    %1111 = vmatpush1.bf16.msra.mxu0 %v773
    %1112 = vmatprep.subr.bf16.mxu0 %v782
    %1113 = vmatpush1.bf16.msra.mxu0 %v781
    %1114 = vmatprep.subr.bf16.mxu0 %v790
    %1115 = vmatpush1.bf16.msra.mxu0 %v789
    %1116 = vmatprep.subr.bf16.mxu0 %v798
    %1117 = vmatpush1.bf16.msra.mxu0 %v797
    %1118 = vmatprep.mubr.bf16.mxu0 %v280
    %1119 = vmatmul.mubr.bf16.gmra.mrb[0].mxu0 %v279
    %v1120 = vpop.f32.mrb[0].mxu0
    %v1121 = vadd.f32 0.0, %v1120
    %v1122 = vpop.f32.mrb[0].mxu0
    %v1123 = vadd.f32 0.0, %v1122
    %v1124 = vpop.f32.mrb[0].mxu0
    %v1125 = vadd.f32 0.0, %v1124
    %v1126 = vpop.f32.mrb[0].mxu0
    %v1127 = vadd.f32 0.0, %v1126
    %1128 = vmatprep.mubr.bf16.mxu0 %v282
    %1129 = vmatmul.mubr.bf16.gmra.mrb[0].mxu0 %v281
    %v1130 = vpop.f32.mrb[0].mxu0
    %v1131 = vadd.f32 0.0, %v1130
    %v1132 = vpop.f32.mrb[0].mxu0
    %v1133 = vadd.f32 0.0, %v1132
    %v1134 = vpop.f32.mrb[0].mxu0
    %v1135 = vadd.f32 0.0, %v1134
    %v1136 = vpop.f32.mrb[0].mxu0
    %v1137 = vadd.f32 0.0, %v1136
    %1138 = vdwg.mxu0
    %v1139 = vld [vmem:[#allocation5] sm:$0xf]
    %v1141 = vlaneseq
    %v1142 = vshrl.u32 %v1141, 7
    %v1143 = vsub.s32 0, %v1142
    %v1144 = vrot.slane %v1139, %v1143
    %v1145 = vlaneseq
    %v1146 = vshrl.u32 %v1145, 7
    %v1147 = vsub.s32 1, %v1146
    %v1148 = vrot.slane %v1139, %v1147
    %v1149 = vlaneseq
    %v1150 = vshrl.u32 %v1149, 7
    %v1151 = vsub.s32 2, %v1150
    %v1152 = vrot.slane %v1139, %v1151
    %v1153 = vlaneseq
    %v1154 = vshrl.u32 %v1153, 7
    %v1155 = vsub.s32 3, %v1154
    %v1156 = vrot.slane %v1139, %v1155
    %v1161 = vadd.f32 %v962, %v1144
    %v1162 = vadd.f32 %v964, %v1148
    %v1163 = vadd.f32 %v1015, %v1152
    %v1164 = vadd.f32 %v1017, %v1156
    %v1165 = vadd.f32 %v966, %v1144
    %v1166 = vadd.f32 %v968, %v1148
    %v1167 = vadd.f32 %v1019, %v1152
    %v1168 = vadd.f32 %v1021, %v1156
    %v1169 = vadd.f32 %v972, %v1144
    %v1170 = vadd.f32 %v974, %v1148
    %v1171 = vadd.f32 %v1025, %v1152
    %v1172 = vadd.f32 %v1027, %v1156
    %v1173 = vadd.f32 %v976, %v1144
    %v1174 = vadd.f32 %v978, %v1148
    %v1175 = vadd.f32 %v1029, %v1152
    %v1176 = vadd.f32 %v1031, %v1156
    %v1177 = vmax.f32 %v1161, 0.0
    %v1178 = vmax.f32 %v1162, 0.0
    %v1179 = vmax.f32 %v1163, 0.0
    %v1180 = vmax.f32 %v1164, 0.0
    %v1181 = vmax.f32 %v1165, 0.0
    %v1182 = vmax.f32 %v1166, 0.0
    %v1183 = vmax.f32 %v1167, 0.0
    %v1184 = vmax.f32 %v1168, 0.0
    %v1185 = vmax.f32 %v1169, 0.0
    %v1186 = vmax.f32 %v1170, 0.0
    %v1187 = vmax.f32 %v1171, 0.0
    %v1188 = vmax.f32 %v1172, 0.0
    %v1189 = vmax.f32 %v1173, 0.0
    %v1190 = vmax.f32 %v1174, 0.0
    %v1191 = vmax.f32 %v1175, 0.0
    %v1192 = vmax.f32 %v1176, 0.0
    %v1193 = vld [vmem:[#allocation7] sm:$0xf]
    %v1195 = vlaneseq
    %v1196 = vshrl.u32 %v1195, 7
    %v1197 = vsub.s32 0, %v1196
    %v1198 = vrot.slane %v1193, %v1197
    %v1199 = vlaneseq
    %v1200 = vshrl.u32 %v1199, 7
    %v1201 = vsub.s32 1, %v1200
    %v1202 = vrot.slane %v1193, %v1201
    %v1203 = vlaneseq
    %v1204 = vshrl.u32 %v1203, 7
    %v1205 = vsub.s32 2, %v1204
    %v1206 = vrot.slane %v1193, %v1205
    %v1207 = vlaneseq
    %v1208 = vshrl.u32 %v1207, 7
    %v1209 = vsub.s32 3, %v1208
    %v1210 = vrot.slane %v1193, %v1209
    %v1215 = vadd.f32 %v1068, %v1198
    %v1216 = vadd.f32 %v1070, %v1202
    %v1217 = vadd.f32 %v1121, %v1206
    %v1218 = vadd.f32 %v1123, %v1210
    %v1219 = vadd.f32 %v1072, %v1198
    %v1220 = vadd.f32 %v1074, %v1202
    %v1221 = vadd.f32 %v1125, %v1206
    %v1222 = vadd.f32 %v1127, %v1210
    %v1223 = vadd.f32 %v1078, %v1198
    %v1224 = vadd.f32 %v1080, %v1202
    %v1225 = vadd.f32 %v1131, %v1206
    %v1226 = vadd.f32 %v1133, %v1210
    %v1227 = vadd.f32 %v1082, %v1198
    %v1228 = vadd.f32 %v1084, %v1202
    %v1229 = vadd.f32 %v1135, %v1206
    %v1230 = vadd.f32 %v1137, %v1210
    %v1231 = vlaneseq
    %vm1232 = vcmp.ge.s32.totalorder %v1231, 0
    %vm1233 = vcmp.lt.s32.totalorder %v1231, 512
    %vm1234 = vmand %vm1232, %vm1233
    %1235 = vst.msk [vmem:[#allocation2] ss:$8 sm:$0xf] %vm1234, 0.0
    %1236 = vst.msk [vmem:[#allocation2] ss:$8 sm:$0x0] %vm1234, 0.0
    %s1237 = scalar_lea.vmem [#allocation2], 96
    %1238 = vst.msk [vmem:[%s1237] ss:$8 sm:$0xf] %vm1234, 0.0
    %1239 = vst.msk [vmem:[%s1237] ss:$8 sm:$0x0] %vm1234, 0.0
    %s1240 = scalar_lea.vmem [#allocation2], 65
    %1241 = vst.msk [vmem:[%s1240] ss:$8 sm:$0xf] %vm1234, 0.0
    %1242 = vst.msk [vmem:[%s1240] ss:$8 sm:$0x0] %vm1234, 0.0
    %s1243 = scalar_lea.vmem [#allocation2], 161
    %1244 = vst.msk [vmem:[%s1243] ss:$8 sm:$0xf] %vm1234, 0.0
    %1245 = vst.msk [vmem:[%s1243] ss:$8 sm:$0x0] %vm1234, 0.0
    %vm1262 = vcmask 1040384
    %v1263 = vrot.slane %v1177, 7
    %v1264 = vrot.slane %v1178, 7
    %v1265 = vrot.slane %v1179, 7
    %v1266 = vrot.slane %v1180, 7
    %v1267 = vrot.slane %v1181, 7
    %v1268 = vsel %vm1262, %v1263, %v1267
    %v1269 = vrot.slane %v1182, 7
    %v1270 = vsel %vm1262, %v1264, %v1269
    %v1271 = vrot.slane %v1183, 7
    %v1272 = vsel %vm1262, %v1265, %v1271
    %v1273 = vrot.slane %v1184, 7
    %v1274 = vsel %vm1262, %v1266, %v1273
    %v1275 = vrot.slane %v1185, 7
    %v1276 = vrot.slane %v1186, 7
    %v1277 = vrot.slane %v1187, 7
    %v1278 = vrot.slane %v1188, 7
    %v1279 = vrot.slane %v1189, 7
    %v1280 = vsel %vm1262, %v1275, %v1279
    %v1281 = vrot.slane %v1190, 7
    %v1282 = vsel %vm1262, %v1276, %v1281
    %v1283 = vrot.slane %v1191, 7
    %v1284 = vsel %vm1262, %v1277, %v1283
    %v1285 = vrot.slane %v1192, 7
    %v1286 = vsel %vm1262, %v1278, %v1285
    %1311 = vst [vmem:[#allocation2] sm:$0xfe] %v1263
    %1312 = vst [vmem:[#allocation2 + $0x8] sm:$0xfe] %v1264
    %1313 = vst [vmem:[#allocation2 + $0x10] sm:$0xfe] %v1265
    %1314 = vst [vmem:[#allocation2 + $0x18] sm:$0xfe] %v1266
    %1315 = vst [vmem:[#allocation2 + $0x20] sm:$0xff] %v1268
    %1316 = vst [vmem:[#allocation2 + $0x28] sm:$0xff] %v1270
    %1317 = vst [vmem:[#allocation2 + $0x30] sm:$0xff] %v1272
    %1318 = vst [vmem:[#allocation2 + $0x38] sm:$0xff] %v1274
    %1319 = vst [vmem:[#allocation2 + $0x40] sm:$0x1] %v1267
    %1320 = vst [vmem:[#allocation2 + $0x48] sm:$0x1] %v1269
    %1321 = vst [vmem:[#allocation2 + $0x50] sm:$0x1] %v1271
    %1322 = vst [vmem:[#allocation2 + $0x58] sm:$0x1] %v1273
    %1323 = vst [vmem:[#allocation2 + $0x60] sm:$0xfe] %v1275
    %1324 = vst [vmem:[#allocation2 + $0x68] sm:$0xfe] %v1276
    %1325 = vst [vmem:[#allocation2 + $0x70] sm:$0xfe] %v1277
    %1326 = vst [vmem:[#allocation2 + $0x78] sm:$0xfe] %v1278
    %1327 = vst [vmem:[#allocation2 + $0x80] sm:$0xff] %v1280
    %1328 = vst [vmem:[#allocation2 + $0x88] sm:$0xff] %v1282
    %1329 = vst [vmem:[#allocation2 + $0x90] sm:$0xff] %v1284
    %1330 = vst [vmem:[#allocation2 + $0x98] sm:$0xff] %v1286
    %1331 = vst [vmem:[#allocation2 + $0xa0] sm:$0x1] %v1279
    %1332 = vst [vmem:[#allocation2 + $0xa8] sm:$0x1] %v1281
    %1333 = vst [vmem:[#allocation2 + $0xb0] sm:$0x1] %v1283
    %1334 = vst [vmem:[#allocation2 + $0xb8] sm:$0x1] %v1285
    %v1335 = vld [vmem:[#allocation2] sm:$0xff]
    %v1336 = vld [vmem:[#allocation2 + $0x8] sm:$0xff]
    %v1337 = vld [vmem:[#allocation2 + $0x10] sm:$0xff]
    %v1338 = vld [vmem:[#allocation2 + $0x18] sm:$0xff]
    %v1339 = vld [vmem:[#allocation2 + $0x20] sm:$0xff]
    %v1340 = vld [vmem:[#allocation2 + $0x28] sm:$0xff]
    %v1341 = vld [vmem:[#allocation2 + $0x30] sm:$0xff]
    %v1342 = vld [vmem:[#allocation2 + $0x38] sm:$0xff]
    %v1343 = vld [vmem:[#allocation2 + $0x60] sm:$0xff]
    %v1344 = vld [vmem:[#allocation2 + $0x68] sm:$0xff]
    %v1345 = vld [vmem:[#allocation2 + $0x70] sm:$0xff]
    %v1346 = vld [vmem:[#allocation2 + $0x78] sm:$0xff]
    %v1347 = vld [vmem:[#allocation2 + $0x80] sm:$0xff]
    %v1348 = vld [vmem:[#allocation2 + $0x88] sm:$0xff]
    %v1349 = vld [vmem:[#allocation2 + $0x90] sm:$0xff]
    %v1350 = vld [vmem:[#allocation2 + $0x98] sm:$0xff]
    %v1351 = vld [vmem:[#allocation2] sm:$0xfe]
    %v1352 = vld [vmem:[#allocation2 + $0x8] sm:$0xfe]
    %v1353 = vld [vmem:[#allocation2 + $0x10] sm:$0xfe]
    %v1354 = vld [vmem:[#allocation2 + $0x18] sm:$0xfe]
    %v1355 = vld [vmem:[#allocation2 + $0x40] sm:$0x1]
    %v1356 = vld [vmem:[#allocation2 + $0x48] sm:$0x1]
    %v1357 = vld [vmem:[#allocation2 + $0x50] sm:$0x1]
    %v1358 = vld [vmem:[#allocation2 + $0x58] sm:$0x1]
    %v1359 = vld [vmem:[#allocation2 + $0x60] sm:$0xfe]
    %v1360 = vld [vmem:[#allocation2 + $0x68] sm:$0xfe]
    %v1361 = vld [vmem:[#allocation2 + $0x70] sm:$0xfe]
    %v1362 = vld [vmem:[#allocation2 + $0x78] sm:$0xfe]
    %v1363 = vld [vmem:[#allocation2 + $0xa0] sm:$0x1]
    %v1364 = vld [vmem:[#allocation2 + $0xa8] sm:$0x1]
    %v1365 = vld [vmem:[#allocation2 + $0xb0] sm:$0x1]
    %v1366 = vld [vmem:[#allocation2 + $0xb8] sm:$0x1]
    %vm1391 = vcmask 1046528
    %v1392 = vrot.slane %v1351, 1
    %v1393 = vrot.slane %v1339, 1
    %v1394 = vsel %vm1391, %v1392, %v1393
    %v1395 = vrot.slane %v1352, 1
    %v1396 = vrot.slane %v1340, 1
    %v1397 = vsel %vm1391, %v1395, %v1396
    %v1398 = vrot.slane %v1353, 1
    %v1399 = vrot.slane %v1341, 1
    %v1400 = vsel %vm1391, %v1398, %v1399
    %v1401 = vrot.slane %v1354, 1
    %v1402 = vrot.slane %v1342, 1
    %v1403 = vsel %vm1391, %v1401, %v1402
    %v1404 = vrot.slane %v1355, 1
    %v1405 = vsel %vm1391, %v1393, %v1404
    %v1406 = vrot.slane %v1356, 1
    %v1407 = vsel %vm1391, %v1396, %v1406
    %v1408 = vrot.slane %v1357, 1
    %v1409 = vsel %vm1391, %v1399, %v1408
    %v1410 = vrot.slane %v1358, 1
    %v1411 = vsel %vm1391, %v1402, %v1410
    %v1412 = vrot.slane %v1359, 1
    %v1413 = vrot.slane %v1347, 1
    %v1414 = vsel %vm1391, %v1412, %v1413
    %v1415 = vrot.slane %v1360, 1
    %v1416 = vrot.slane %v1348, 1
    %v1417 = vsel %vm1391, %v1415, %v1416
    %v1418 = vrot.slane %v1361, 1
    %v1419 = vrot.slane %v1349, 1
    %v1420 = vsel %vm1391, %v1418, %v1419
    %v1421 = vrot.slane %v1362, 1
    %v1422 = vrot.slane %v1350, 1
    %v1423 = vsel %vm1391, %v1421, %v1422
    %v1424 = vrot.slane %v1363, 1
    %v1425 = vsel %vm1391, %v1413, %v1424
    %v1426 = vrot.slane %v1364, 1
    %v1427 = vsel %vm1391, %v1416, %v1426
    %v1428 = vrot.slane %v1365, 1
    %v1429 = vsel %vm1391, %v1419, %v1428
    %v1430 = vrot.slane %v1366, 1
    %v1431 = vsel %vm1391, %v1422, %v1430
    %v1448 = vld [vmem:[#allocation2] sm:$0xfc]
    %v1449 = vld [vmem:[#allocation2 + $0x8] sm:$0xfc]
    %v1450 = vld [vmem:[#allocation2 + $0x10] sm:$0xfc]
    %v1451 = vld [vmem:[#allocation2 + $0x18] sm:$0xfc]
    %v1452 = vld [vmem:[#allocation2 + $0x40] sm:$0x3]
    %v1453 = vld [vmem:[#allocation2 + $0x48] sm:$0x3]
    %v1454 = vld [vmem:[#allocation2 + $0x50] sm:$0x3]
    %v1455 = vld [vmem:[#allocation2 + $0x58] sm:$0x3]
    %v1456 = vld [vmem:[#allocation2 + $0x60] sm:$0xfc]
    %v1457 = vld [vmem:[#allocation2 + $0x68] sm:$0xfc]
    %v1458 = vld [vmem:[#allocation2 + $0x70] sm:$0xfc]
    %v1459 = vld [vmem:[#allocation2 + $0x78] sm:$0xfc]
    %v1460 = vld [vmem:[#allocation2 + $0xa0] sm:$0x3]
    %v1461 = vld [vmem:[#allocation2 + $0xa8] sm:$0x3]
    %v1462 = vld [vmem:[#allocation2 + $0xb0] sm:$0x3]
    %v1463 = vld [vmem:[#allocation2 + $0xb8] sm:$0x3]
    %vm1480 = vcmask 1045504
    %v1481 = vrot.slane %v1448, 2
    %v1482 = vrot.slane %v1339, 2
    %v1483 = vsel %vm1480, %v1481, %v1482
    %v1484 = vrot.slane %v1449, 2
    %v1485 = vrot.slane %v1340, 2
    %v1486 = vsel %vm1480, %v1484, %v1485
    %v1487 = vrot.slane %v1450, 2
    %v1488 = vrot.slane %v1341, 2
    %v1489 = vsel %vm1480, %v1487, %v1488
    %v1490 = vrot.slane %v1451, 2
    %v1491 = vrot.slane %v1342, 2
    %v1492 = vsel %vm1480, %v1490, %v1491
    %v1493 = vrot.slane %v1452, 2
    %v1494 = vsel %vm1480, %v1482, %v1493
    %v1495 = vrot.slane %v1453, 2
    %v1496 = vsel %vm1480, %v1485, %v1495
    %v1497 = vrot.slane %v1454, 2
    %v1498 = vsel %vm1480, %v1488, %v1497
    %v1499 = vrot.slane %v1455, 2
    %v1500 = vsel %vm1480, %v1491, %v1499
    %v1501 = vrot.slane %v1456, 2
    %v1502 = vrot.slane %v1347, 2
    %v1503 = vsel %vm1480, %v1501, %v1502
    %v1504 = vrot.slane %v1457, 2
    %v1505 = vrot.slane %v1348, 2
    %v1506 = vsel %vm1480, %v1504, %v1505
    %v1507 = vrot.slane %v1458, 2
    %v1508 = vrot.slane %v1349, 2
    %v1509 = vsel %vm1480, %v1507, %v1508
    %v1510 = vrot.slane %v1459, 2
    %v1511 = vrot.slane %v1350, 2
    %v1512 = vsel %vm1480, %v1510, %v1511
    %v1513 = vrot.slane %v1460, 2
    %v1514 = vsel %vm1480, %v1502, %v1513
    %v1515 = vrot.slane %v1461, 2
    %v1516 = vsel %vm1480, %v1505, %v1515
    %v1517 = vrot.slane %v1462, 2
    %v1518 = vsel %vm1480, %v1508, %v1517
    %v1519 = vrot.slane %v1463, 2
    %v1520 = vsel %vm1480, %v1511, %v1519
    %v1537 = vpack.c.bf16 %v1339, %v1335
    %v1538 = vpack.c.bf16 %v1340, %v1336
    %v1539 = vpack.c.bf16 %v1341, %v1337
    %v1540 = vpack.c.bf16 %v1342, %v1338
    %v1541 = vpack.c.bf16 %v1405, %v1394
    %v1542 = vpack.c.bf16 %v1407, %v1397
    %v1543 = vpack.c.bf16 %v1409, %v1400
    %v1544 = vpack.c.bf16 %v1411, %v1403
    %v1545 = vpack.c.bf16 %v1494, %v1483
    %v1546 = vpack.c.bf16 %v1496, %v1486
    %v1547 = vpack.c.bf16 %v1498, %v1489
    %v1548 = vpack.c.bf16 %v1500, %v1492
    %v1549 = vpack.c.bf16 %v1347, %v1343
    %v1550 = vpack.c.bf16 %v1348, %v1344
    %v1551 = vpack.c.bf16 %v1349, %v1345
    %v1552 = vpack.c.bf16 %v1350, %v1346
    %v1553 = vpack.c.bf16 %v1425, %v1414
    %v1554 = vpack.c.bf16 %v1427, %v1417
    %v1555 = vpack.c.bf16 %v1429, %v1420
    %v1556 = vpack.c.bf16 %v1431, %v1423
    %v1557 = vpack.c.bf16 %v1514, %v1503
    %v1558 = vpack.c.bf16 %v1516, %v1506
    %v1559 = vpack.c.bf16 %v1518, %v1509
    %v1560 = vpack.c.bf16 %v1520, %v1512
    %v1561 = vld [vmem:[#allocation8] sm:$0xff]
    %v1562 = vld [vmem:[#allocation8 + $0x8] sm:$0xff]
    %v1563 = vld [vmem:[#allocation8 + $0x10] sm:$0xff]
    %v1564 = vld [vmem:[#allocation8 + $0x18] sm:$0xff]
    %v1565 = vld [vmem:[#allocation8 + $0x20] sm:$0xff]
    %v1566 = vld [vmem:[#allocation8 + $0x28] sm:$0xff]
    %v1567 = vld [vmem:[#allocation8 + $0x30] sm:$0xff]
    %v1568 = vld [vmem:[#allocation8 + $0x38] sm:$0xff]
    %v1569 = vld [vmem:[#allocation8 + $0x40] sm:$0xff]
    %v1570 = vld [vmem:[#allocation8 + $0x48] sm:$0xff]
    %v1571 = vld [vmem:[#allocation8 + $0x50] sm:$0xff]
    %v1572 = vld [vmem:[#allocation8 + $0x58] sm:$0xff]
    %v1573 = vld [vmem:[#allocation8 + $0x60] sm:$0xff]
    %v1574 = vld [vmem:[#allocation8 + $0x68] sm:$0xff]
    %v1575 = vld [vmem:[#allocation8 + $0x70] sm:$0xff]
    %v1576 = vld [vmem:[#allocation8 + $0x78] sm:$0xff]
    %v1577 = vld [vmem:[#allocation8 + $0x80] sm:$0xff]
    %v1578 = vld [vmem:[#allocation8 + $0x88] sm:$0xff]
    %v1579 = vld [vmem:[#allocation8 + $0x90] sm:$0xff]
    %v1580 = vld [vmem:[#allocation8 + $0x98] sm:$0xff]
    %v1581 = vld [vmem:[#allocation8 + $0xa0] sm:$0xff]
    %v1582 = vld [vmem:[#allocation8 + $0xa8] sm:$0xff]
    %v1583 = vld [vmem:[#allocation8 + $0xb0] sm:$0xff]
    %v1584 = vld [vmem:[#allocation8 + $0xb8] sm:$0xff]
    %v1585 = vld [vmem:[#allocation8 + $0xc0] sm:$0xff]
    %v1586 = vld [vmem:[#allocation8 + $0xc8] sm:$0xff]
    %v1587 = vld [vmem:[#allocation8 + $0xd0] sm:$0xff]
    %v1588 = vld [vmem:[#allocation8 + $0xd8] sm:$0xff]
    %v1589 = vld [vmem:[#allocation8 + $0xe0] sm:$0xff]
    %v1590 = vld [vmem:[#allocation8 + $0xe8] sm:$0xff]
    %v1591 = vld [vmem:[#allocation8 + $0xf0] sm:$0xff]
    %v1592 = vld [vmem:[#allocation8 + $0xf8] sm:$0xff]
    %v1593 = vld [vmem:[#allocation8 + $0x100] sm:$0xff]
    %v1594 = vld [vmem:[#allocation8 + $0x108] sm:$0xff]
    %v1595 = vld [vmem:[#allocation8 + $0x110] sm:$0xff]
    %v1596 = vld [vmem:[#allocation8 + $0x118] sm:$0xff]
    %v1597 = vld [vmem:[#allocation8 + $0x120] sm:$0xff]
    %v1598 = vld [vmem:[#allocation8 + $0x128] sm:$0xff]
    %v1599 = vld [vmem:[#allocation8 + $0x130] sm:$0xff]
    %v1600 = vld [vmem:[#allocation8 + $0x138] sm:$0xff]
    %v1601 = vld [vmem:[#allocation8 + $0x140] sm:$0xff]
    %v1602 = vld [vmem:[#allocation8 + $0x148] sm:$0xff]
    %v1603 = vld [vmem:[#allocation8 + $0x150] sm:$0xff]
    %v1604 = vld [vmem:[#allocation8 + $0x158] sm:$0xff]
    %v1605 = vld [vmem:[#allocation8 + $0x160] sm:$0xff]
    %v1606 = vld [vmem:[#allocation8 + $0x168] sm:$0xff]
    %v1607 = vld [vmem:[#allocation8 + $0x170] sm:$0xff]
    %v1608 = vld [vmem:[#allocation8 + $0x178] sm:$0xff]
    %v1609 = vld [vmem:[#allocation8 + $0x180] sm:$0xff]
    %v1610 = vld [vmem:[#allocation8 + $0x188] sm:$0xff]
    %v1611 = vld [vmem:[#allocation8 + $0x190] sm:$0xff]
    %v1612 = vld [vmem:[#allocation8 + $0x198] sm:$0xff]
    %v1613 = vld [vmem:[#allocation8 + $0x1a0] sm:$0xff]
    %v1614 = vld [vmem:[#allocation8 + $0x1a8] sm:$0xff]
    %v1615 = vld [vmem:[#allocation8 + $0x1b0] sm:$0xff]
    %v1616 = vld [vmem:[#allocation8 + $0x1b8] sm:$0xff]
    %v1617 = vld [vmem:[#allocation8 + $0x1c0] sm:$0xff]
    %v1618 = vld [vmem:[#allocation8 + $0x1c8] sm:$0xff]
    %v1619 = vld [vmem:[#allocation8 + $0x1d0] sm:$0xff]
    %v1620 = vld [vmem:[#allocation8 + $0x1d8] sm:$0xff]
    %v1621 = vld [vmem:[#allocation8 + $0x1e0] sm:$0xff]
    %v1622 = vld [vmem:[#allocation8 + $0x1e8] sm:$0xff]
    %v1623 = vld [vmem:[#allocation8 + $0x1f0] sm:$0xff]
    %v1624 = vld [vmem:[#allocation8 + $0x1f8] sm:$0xff]
    %v1625 = vld [vmem:[#allocation8 + $0x200] sm:$0xff]
    %v1626 = vld [vmem:[#allocation8 + $0x208] sm:$0xff]
    %v1627 = vld [vmem:[#allocation8 + $0x210] sm:$0xff]
    %v1628 = vld [vmem:[#allocation8 + $0x218] sm:$0xff]
    %v1629 = vld [vmem:[#allocation8 + $0x220] sm:$0xff]
    %v1630 = vld [vmem:[#allocation8 + $0x228] sm:$0xff]
    %v1631 = vld [vmem:[#allocation8 + $0x230] sm:$0xff]
    %v1632 = vld [vmem:[#allocation8 + $0x238] sm:$0xff]
    %v1633 = vld [vmem:[#allocation8 + $0x240] sm:$0xff]
    %v1634 = vld [vmem:[#allocation8 + $0x248] sm:$0xff]
    %v1635 = vld [vmem:[#allocation8 + $0x250] sm:$0xff]
    %v1636 = vld [vmem:[#allocation8 + $0x258] sm:$0xff]
    %v1637 = vld [vmem:[#allocation8 + $0x260] sm:$0xff]
    %v1638 = vld [vmem:[#allocation8 + $0x268] sm:$0xff]
    %v1639 = vld [vmem:[#allocation8 + $0x270] sm:$0xff]
    %v1640 = vld [vmem:[#allocation8 + $0x278] sm:$0xff]
    %v1641 = vld [vmem:[#allocation8 + $0x280] sm:$0xff]
    %v1642 = vld [vmem:[#allocation8 + $0x288] sm:$0xff]
    %v1643 = vld [vmem:[#allocation8 + $0x290] sm:$0xff]
    %v1644 = vld [vmem:[#allocation8 + $0x298] sm:$0xff]
    %v1645 = vld [vmem:[#allocation8 + $0x2a0] sm:$0xff]
    %v1646 = vld [vmem:[#allocation8 + $0x2a8] sm:$0xff]
    %v1647 = vld [vmem:[#allocation8 + $0x2b0] sm:$0xff]
    %v1648 = vld [vmem:[#allocation8 + $0x2b8] sm:$0xff]
    %v1649 = vld [vmem:[#allocation8 + $0x2c0] sm:$0xff]
    %v1650 = vld [vmem:[#allocation8 + $0x2c8] sm:$0xff]
    %v1651 = vld [vmem:[#allocation8 + $0x2d0] sm:$0xff]
    %v1652 = vld [vmem:[#allocation8 + $0x2d8] sm:$0xff]
    %v1653 = vld [vmem:[#allocation8 + $0x2e0] sm:$0xff]
    %v1654 = vld [vmem:[#allocation8 + $0x2e8] sm:$0xff]
    %v1655 = vld [vmem:[#allocation8 + $0x2f0] sm:$0xff]
    %v1656 = vld [vmem:[#allocation8 + $0x2f8] sm:$0xff]
    %v1657 = vld [vmem:[#allocation8 + $0x300] sm:$0xff]
    %v1658 = vld [vmem:[#allocation8 + $0x308] sm:$0xff]
    %v1659 = vld [vmem:[#allocation8 + $0x310] sm:$0xff]
    %v1660 = vld [vmem:[#allocation8 + $0x318] sm:$0xff]
    %v1661 = vld [vmem:[#allocation8 + $0x320] sm:$0xff]
    %v1662 = vld [vmem:[#allocation8 + $0x328] sm:$0xff]
    %v1663 = vld [vmem:[#allocation8 + $0x330] sm:$0xff]
    %v1664 = vld [vmem:[#allocation8 + $0x338] sm:$0xff]
    %v1665 = vld [vmem:[#allocation8 + $0x340] sm:$0xff]
    %v1666 = vld [vmem:[#allocation8 + $0x348] sm:$0xff]
    %v1667 = vld [vmem:[#allocation8 + $0x350] sm:$0xff]
    %v1668 = vld [vmem:[#allocation8 + $0x358] sm:$0xff]
    %v1669 = vld [vmem:[#allocation8 + $0x360] sm:$0xff]
    %v1670 = vld [vmem:[#allocation8 + $0x368] sm:$0xff]
    %v1671 = vld [vmem:[#allocation8 + $0x370] sm:$0xff]
    %v1672 = vld [vmem:[#allocation8 + $0x378] sm:$0xff]
    %v1673 = vld [vmem:[#allocation8 + $0x380] sm:$0xff]
    %v1674 = vld [vmem:[#allocation8 + $0x388] sm:$0xff]
    %v1675 = vld [vmem:[#allocation8 + $0x390] sm:$0xff]
    %v1676 = vld [vmem:[#allocation8 + $0x398] sm:$0xff]
    %v1677 = vld [vmem:[#allocation8 + $0x3a0] sm:$0xff]
    %v1678 = vld [vmem:[#allocation8 + $0x3a8] sm:$0xff]
    %v1679 = vld [vmem:[#allocation8 + $0x3b0] sm:$0xff]
    %v1680 = vld [vmem:[#allocation8 + $0x3b8] sm:$0xff]
    %v1681 = vld [vmem:[#allocation8 + $0x3c0] sm:$0xff]
    %v1682 = vld [vmem:[#allocation8 + $0x3c8] sm:$0xff]
    %v1683 = vld [vmem:[#allocation8 + $0x3d0] sm:$0xff]
    %v1684 = vld [vmem:[#allocation8 + $0x3d8] sm:$0xff]
    %v1685 = vld [vmem:[#allocation8 + $0x3e0] sm:$0xff]
    %v1686 = vld [vmem:[#allocation8 + $0x3e8] sm:$0xff]
    %v1687 = vld [vmem:[#allocation8 + $0x3f0] sm:$0xff]
    %v1688 = vld [vmem:[#allocation8 + $0x3f8] sm:$0xff]
    %v1689 = vld [vmem:[#allocation8 + $0x400] sm:$0xff]
    %v1690 = vld [vmem:[#allocation8 + $0x408] sm:$0xff]
    %v1691 = vld [vmem:[#allocation8 + $0x410] sm:$0xff]
    %v1692 = vld [vmem:[#allocation8 + $0x418] sm:$0xff]
    %v1693 = vld [vmem:[#allocation8 + $0x420] sm:$0xff]
    %v1694 = vld [vmem:[#allocation8 + $0x428] sm:$0xff]
    %v1695 = vld [vmem:[#allocation8 + $0x430] sm:$0xff]
    %v1696 = vld [vmem:[#allocation8 + $0x438] sm:$0xff]
    %v1697 = vld [vmem:[#allocation8 + $0x440] sm:$0xff]
    %v1698 = vld [vmem:[#allocation8 + $0x448] sm:$0xff]
    %v1699 = vld [vmem:[#allocation8 + $0x450] sm:$0xff]
    %v1700 = vld [vmem:[#allocation8 + $0x458] sm:$0xff]
    %v1701 = vld [vmem:[#allocation8 + $0x460] sm:$0xff]
    %v1702 = vld [vmem:[#allocation8 + $0x468] sm:$0xff]
    %v1703 = vld [vmem:[#allocation8 + $0x470] sm:$0xff]
    %v1704 = vld [vmem:[#allocation8 + $0x478] sm:$0xff]
    %v1705 = vld [vmem:[#allocation8 + $0x480] sm:$0xff]
    %v1706 = vld [vmem:[#allocation8 + $0x488] sm:$0xff]
    %v1707 = vld [vmem:[#allocation8 + $0x490] sm:$0xff]
    %v1708 = vld [vmem:[#allocation8 + $0x498] sm:$0xff]
    %v1709 = vld [vmem:[#allocation8 + $0x4a0] sm:$0xff]
    %v1710 = vld [vmem:[#allocation8 + $0x4a8] sm:$0xff]
    %v1711 = vld [vmem:[#allocation8 + $0x4b0] sm:$0xff]
    %v1712 = vld [vmem:[#allocation8 + $0x4b8] sm:$0xff]
    %v1713 = vld [vmem:[#allocation8 + $0x4c0] sm:$0xff]
    %v1714 = vld [vmem:[#allocation8 + $0x4c8] sm:$0xff]
    %v1715 = vld [vmem:[#allocation8 + $0x4d0] sm:$0xff]
    %v1716 = vld [vmem:[#allocation8 + $0x4d8] sm:$0xff]
    %v1717 = vld [vmem:[#allocation8 + $0x4e0] sm:$0xff]
    %v1718 = vld [vmem:[#allocation8 + $0x4e8] sm:$0xff]
    %v1719 = vld [vmem:[#allocation8 + $0x4f0] sm:$0xff]
    %v1720 = vld [vmem:[#allocation8 + $0x4f8] sm:$0xff]
    %v1721 = vld [vmem:[#allocation8 + $0x500] sm:$0xff]
    %v1722 = vld [vmem:[#allocation8 + $0x508] sm:$0xff]
    %v1723 = vld [vmem:[#allocation8 + $0x510] sm:$0xff]
    %v1724 = vld [vmem:[#allocation8 + $0x518] sm:$0xff]
    %v1725 = vld [vmem:[#allocation8 + $0x520] sm:$0xff]
    %v1726 = vld [vmem:[#allocation8 + $0x528] sm:$0xff]
    %v1727 = vld [vmem:[#allocation8 + $0x530] sm:$0xff]
    %v1728 = vld [vmem:[#allocation8 + $0x538] sm:$0xff]
    %v1729 = vld [vmem:[#allocation8 + $0x540] sm:$0xff]
    %v1730 = vld [vmem:[#allocation8 + $0x548] sm:$0xff]
    %v1731 = vld [vmem:[#allocation8 + $0x550] sm:$0xff]
    %v1732 = vld [vmem:[#allocation8 + $0x558] sm:$0xff]
    %v1733 = vld [vmem:[#allocation8 + $0x560] sm:$0xff]
    %v1734 = vld [vmem:[#allocation8 + $0x568] sm:$0xff]
    %v1735 = vld [vmem:[#allocation8 + $0x570] sm:$0xff]
    %v1736 = vld [vmem:[#allocation8 + $0x578] sm:$0xff]
    %v1737 = vld [vmem:[#allocation8 + $0x580] sm:$0xff]
    %v1738 = vld [vmem:[#allocation8 + $0x588] sm:$0xff]
    %v1739 = vld [vmem:[#allocation8 + $0x590] sm:$0xff]
    %v1740 = vld [vmem:[#allocation8 + $0x598] sm:$0xff]
    %v1741 = vld [vmem:[#allocation8 + $0x5a0] sm:$0xff]
    %v1742 = vld [vmem:[#allocation8 + $0x5a8] sm:$0xff]
    %v1743 = vld [vmem:[#allocation8 + $0x5b0] sm:$0xff]
    %v1744 = vld [vmem:[#allocation8 + $0x5b8] sm:$0xff]
    %v1745 = vld [vmem:[#allocation8 + $0x5c0] sm:$0xff]
    %v1746 = vld [vmem:[#allocation8 + $0x5c8] sm:$0xff]
    %v1747 = vld [vmem:[#allocation8 + $0x5d0] sm:$0xff]
    %v1748 = vld [vmem:[#allocation8 + $0x5d8] sm:$0xff]
    %v1749 = vld [vmem:[#allocation8 + $0x5e0] sm:$0xff]
    %v1750 = vld [vmem:[#allocation8 + $0x5e8] sm:$0xff]
    %v1751 = vld [vmem:[#allocation8 + $0x5f0] sm:$0xff]
    %v1752 = vld [vmem:[#allocation8 + $0x5f8] sm:$0xff]
    %v1753 = vld [vmem:[#allocation8 + $0x600] sm:$0xff]
    %v1754 = vld [vmem:[#allocation8 + $0x608] sm:$0xff]
    %v1755 = vld [vmem:[#allocation8 + $0x610] sm:$0xff]
    %v1756 = vld [vmem:[#allocation8 + $0x618] sm:$0xff]
    %v1757 = vld [vmem:[#allocation8 + $0x620] sm:$0xff]
    %v1758 = vld [vmem:[#allocation8 + $0x628] sm:$0xff]
    %v1759 = vld [vmem:[#allocation8 + $0x630] sm:$0xff]
    %v1760 = vld [vmem:[#allocation8 + $0x638] sm:$0xff]
    %v1761 = vld [vmem:[#allocation8 + $0x640] sm:$0xff]
    %v1762 = vld [vmem:[#allocation8 + $0x648] sm:$0xff]
    %v1763 = vld [vmem:[#allocation8 + $0x650] sm:$0xff]
    %v1764 = vld [vmem:[#allocation8 + $0x658] sm:$0xff]
    %v1765 = vld [vmem:[#allocation8 + $0x660] sm:$0xff]
    %v1766 = vld [vmem:[#allocation8 + $0x668] sm:$0xff]
    %v1767 = vld [vmem:[#allocation8 + $0x670] sm:$0xff]
    %v1768 = vld [vmem:[#allocation8 + $0x678] sm:$0xff]
    %v1769 = vld [vmem:[#allocation8 + $0x680] sm:$0xff]
    %v1770 = vld [vmem:[#allocation8 + $0x688] sm:$0xff]
    %v1771 = vld [vmem:[#allocation8 + $0x690] sm:$0xff]
    %v1772 = vld [vmem:[#allocation8 + $0x698] sm:$0xff]
    %v1773 = vld [vmem:[#allocation8 + $0x6a0] sm:$0xff]
    %v1774 = vld [vmem:[#allocation8 + $0x6a8] sm:$0xff]
    %v1775 = vld [vmem:[#allocation8 + $0x6b0] sm:$0xff]
    %v1776 = vld [vmem:[#allocation8 + $0x6b8] sm:$0xff]
    %v1777 = vld [vmem:[#allocation8 + $0x6c0] sm:$0xff]
    %v1778 = vld [vmem:[#allocation8 + $0x6c8] sm:$0xff]
    %v1779 = vld [vmem:[#allocation8 + $0x6d0] sm:$0xff]
    %v1780 = vld [vmem:[#allocation8 + $0x6d8] sm:$0xff]
    %v1781 = vld [vmem:[#allocation8 + $0x6e0] sm:$0xff]
    %v1782 = vld [vmem:[#allocation8 + $0x6e8] sm:$0xff]
    %v1783 = vld [vmem:[#allocation8 + $0x6f0] sm:$0xff]
    %v1784 = vld [vmem:[#allocation8 + $0x6f8] sm:$0xff]
    %v1785 = vld [vmem:[#allocation8 + $0x700] sm:$0xff]
    %v1786 = vld [vmem:[#allocation8 + $0x708] sm:$0xff]
    %v1787 = vld [vmem:[#allocation8 + $0x710] sm:$0xff]
    %v1788 = vld [vmem:[#allocation8 + $0x718] sm:$0xff]
    %v1789 = vld [vmem:[#allocation8 + $0x720] sm:$0xff]
    %v1790 = vld [vmem:[#allocation8 + $0x728] sm:$0xff]
    %v1791 = vld [vmem:[#allocation8 + $0x730] sm:$0xff]
    %v1792 = vld [vmem:[#allocation8 + $0x738] sm:$0xff]
    %v1793 = vld [vmem:[#allocation8 + $0x740] sm:$0xff]
    %v1794 = vld [vmem:[#allocation8 + $0x748] sm:$0xff]
    %v1795 = vld [vmem:[#allocation8 + $0x750] sm:$0xff]
    %v1796 = vld [vmem:[#allocation8 + $0x758] sm:$0xff]
    %v1797 = vld [vmem:[#allocation8 + $0x760] sm:$0xff]
    %v1798 = vld [vmem:[#allocation8 + $0x768] sm:$0xff]
    %v1799 = vld [vmem:[#allocation8 + $0x770] sm:$0xff]
    %v1800 = vld [vmem:[#allocation8 + $0x778] sm:$0xff]
    %v1801 = vld [vmem:[#allocation8 + $0x780] sm:$0xff]
    %v1802 = vld [vmem:[#allocation8 + $0x788] sm:$0xff]
    %v1803 = vld [vmem:[#allocation8 + $0x790] sm:$0xff]
    %v1804 = vld [vmem:[#allocation8 + $0x798] sm:$0xff]
    %v1805 = vld [vmem:[#allocation8 + $0x7a0] sm:$0xff]
    %v1806 = vld [vmem:[#allocation8 + $0x7a8] sm:$0xff]
    %v1807 = vld [vmem:[#allocation8 + $0x7b0] sm:$0xff]
    %v1808 = vld [vmem:[#allocation8 + $0x7b8] sm:$0xff]
    %v1809 = vld [vmem:[#allocation8 + $0x7c0] sm:$0xff]
    %v1810 = vld [vmem:[#allocation8 + $0x7c8] sm:$0xff]
    %v1811 = vld [vmem:[#allocation8 + $0x7d0] sm:$0xff]
    %v1812 = vld [vmem:[#allocation8 + $0x7d8] sm:$0xff]
    %v1813 = vld [vmem:[#allocation8 + $0x7e0] sm:$0xff]
    %v1814 = vld [vmem:[#allocation8 + $0x7e8] sm:$0xff]
    %v1815 = vld [vmem:[#allocation8 + $0x7f0] sm:$0xff]
    %v1816 = vld [vmem:[#allocation8 + $0x7f8] sm:$0xff]
    %v1817 = vld [vmem:[#allocation8 + $0x800] sm:$0xff]
    %v1818 = vld [vmem:[#allocation8 + $0x808] sm:$0xff]
    %v1819 = vld [vmem:[#allocation8 + $0x810] sm:$0xff]
    %v1820 = vld [vmem:[#allocation8 + $0x818] sm:$0xff]
    %v1821 = vld [vmem:[#allocation8 + $0x820] sm:$0xff]
    %v1822 = vld [vmem:[#allocation8 + $0x828] sm:$0xff]
    %v1823 = vld [vmem:[#allocation8 + $0x830] sm:$0xff]
    %v1824 = vld [vmem:[#allocation8 + $0x838] sm:$0xff]
    %v1825 = vld [vmem:[#allocation8 + $0x840] sm:$0xff]
    %v1826 = vld [vmem:[#allocation8 + $0x848] sm:$0xff]
    %v1827 = vld [vmem:[#allocation8 + $0x850] sm:$0xff]
    %v1828 = vld [vmem:[#allocation8 + $0x858] sm:$0xff]
    %v1829 = vld [vmem:[#allocation8 + $0x860] sm:$0xff]
    %v1830 = vld [vmem:[#allocation8 + $0x868] sm:$0xff]
    %v1831 = vld [vmem:[#allocation8 + $0x870] sm:$0xff]
    %v1832 = vld [vmem:[#allocation8 + $0x878] sm:$0xff]
    %v1833 = vld [vmem:[#allocation8 + $0x880] sm:$0xff]
    %v1834 = vld [vmem:[#allocation8 + $0x888] sm:$0xff]
    %v1835 = vld [vmem:[#allocation8 + $0x890] sm:$0xff]
    %v1836 = vld [vmem:[#allocation8 + $0x898] sm:$0xff]
    %v1837 = vld [vmem:[#allocation8 + $0x8a0] sm:$0xff]
    %v1838 = vld [vmem:[#allocation8 + $0x8a8] sm:$0xff]
    %v1839 = vld [vmem:[#allocation8 + $0x8b0] sm:$0xff]
    %v1840 = vld [vmem:[#allocation8 + $0x8b8] sm:$0xff]
    %v1841 = vld [vmem:[#allocation8 + $0x8c0] sm:$0xff]
    %v1842 = vld [vmem:[#allocation8 + $0x8c8] sm:$0xff]
    %v1843 = vld [vmem:[#allocation8 + $0x8d0] sm:$0xff]
    %v1844 = vld [vmem:[#allocation8 + $0x8d8] sm:$0xff]
    %v1845 = vld [vmem:[#allocation8 + $0x8e0] sm:$0xff]
    %v1846 = vld [vmem:[#allocation8 + $0x8e8] sm:$0xff]
    %v1847 = vld [vmem:[#allocation8 + $0x8f0] sm:$0xff]
    %v1848 = vld [vmem:[#allocation8 + $0x8f8] sm:$0xff]
    %v1849 = vld [vmem:[#allocation8 + $0x900] sm:$0xff]
    %v1850 = vld [vmem:[#allocation8 + $0x908] sm:$0xff]
    %v1851 = vld [vmem:[#allocation8 + $0x910] sm:$0xff]
    %v1852 = vld [vmem:[#allocation8 + $0x918] sm:$0xff]
    %v1853 = vld [vmem:[#allocation8 + $0x920] sm:$0xff]
    %v1854 = vld [vmem:[#allocation8 + $0x928] sm:$0xff]
    %v1855 = vld [vmem:[#allocation8 + $0x930] sm:$0xff]
    %v1856 = vld [vmem:[#allocation8 + $0x938] sm:$0xff]
    %v1857 = vld [vmem:[#allocation8 + $0x940] sm:$0xff]
    %v1858 = vld [vmem:[#allocation8 + $0x948] sm:$0xff]
    %v1859 = vld [vmem:[#allocation8 + $0x950] sm:$0xff]
    %v1860 = vld [vmem:[#allocation8 + $0x958] sm:$0xff]
    %v1861 = vld [vmem:[#allocation8 + $0x960] sm:$0xff]
    %v1862 = vld [vmem:[#allocation8 + $0x968] sm:$0xff]
    %v1863 = vld [vmem:[#allocation8 + $0x970] sm:$0xff]
    %v1864 = vld [vmem:[#allocation8 + $0x978] sm:$0xff]
    %v1865 = vld [vmem:[#allocation8 + $0x980] sm:$0xff]
    %v1866 = vld [vmem:[#allocation8 + $0x988] sm:$0xff]
    %v1867 = vld [vmem:[#allocation8 + $0x990] sm:$0xff]
    %v1868 = vld [vmem:[#allocation8 + $0x998] sm:$0xff]
    %v1869 = vld [vmem:[#allocation8 + $0x9a0] sm:$0xff]
    %v1870 = vld [vmem:[#allocation8 + $0x9a8] sm:$0xff]
    %v1871 = vld [vmem:[#allocation8 + $0x9b0] sm:$0xff]
    %v1872 = vld [vmem:[#allocation8 + $0x9b8] sm:$0xff]
    %v1873 = vld [vmem:[#allocation8 + $0x9c0] sm:$0xff]
    %v1874 = vld [vmem:[#allocation8 + $0x9c8] sm:$0xff]
    %v1875 = vld [vmem:[#allocation8 + $0x9d0] sm:$0xff]
    %v1876 = vld [vmem:[#allocation8 + $0x9d8] sm:$0xff]
    %v1877 = vld [vmem:[#allocation8 + $0x9e0] sm:$0xff]
    %v1878 = vld [vmem:[#allocation8 + $0x9e8] sm:$0xff]
    %v1879 = vld [vmem:[#allocation8 + $0x9f0] sm:$0xff]
    %v1880 = vld [vmem:[#allocation8 + $0x9f8] sm:$0xff]
    %v1881 = vld [vmem:[#allocation8 + $0xa00] sm:$0xff]
    %v1882 = vld [vmem:[#allocation8 + $0xa08] sm:$0xff]
    %v1883 = vld [vmem:[#allocation8 + $0xa10] sm:$0xff]
    %v1884 = vld [vmem:[#allocation8 + $0xa18] sm:$0xff]
    %v1885 = vld [vmem:[#allocation8 + $0xa20] sm:$0xff]
    %v1886 = vld [vmem:[#allocation8 + $0xa28] sm:$0xff]
    %v1887 = vld [vmem:[#allocation8 + $0xa30] sm:$0xff]
    %v1888 = vld [vmem:[#allocation8 + $0xa38] sm:$0xff]
    %v1889 = vld [vmem:[#allocation8 + $0xa40] sm:$0xff]
    %v1890 = vld [vmem:[#allocation8 + $0xa48] sm:$0xff]
    %v1891 = vld [vmem:[#allocation8 + $0xa50] sm:$0xff]
    %v1892 = vld [vmem:[#allocation8 + $0xa58] sm:$0xff]
    %v1893 = vld [vmem:[#allocation8 + $0xa60] sm:$0xff]
    %v1894 = vld [vmem:[#allocation8 + $0xa68] sm:$0xff]
    %v1895 = vld [vmem:[#allocation8 + $0xa70] sm:$0xff]
    %v1896 = vld [vmem:[#allocation8 + $0xa78] sm:$0xff]
    %v1897 = vld [vmem:[#allocation8 + $0xa80] sm:$0xff]
    %v1898 = vld [vmem:[#allocation8 + $0xa88] sm:$0xff]
    %v1899 = vld [vmem:[#allocation8 + $0xa90] sm:$0xff]
    %v1900 = vld [vmem:[#allocation8 + $0xa98] sm:$0xff]
    %v1901 = vld [vmem:[#allocation8 + $0xaa0] sm:$0xff]
    %v1902 = vld [vmem:[#allocation8 + $0xaa8] sm:$0xff]
    %v1903 = vld [vmem:[#allocation8 + $0xab0] sm:$0xff]
    %v1904 = vld [vmem:[#allocation8 + $0xab8] sm:$0xff]
    %v1905 = vld [vmem:[#allocation8 + $0xac0] sm:$0xff]
    %v1906 = vld [vmem:[#allocation8 + $0xac8] sm:$0xff]
    %v1907 = vld [vmem:[#allocation8 + $0xad0] sm:$0xff]
    %v1908 = vld [vmem:[#allocation8 + $0xad8] sm:$0xff]
    %v1909 = vld [vmem:[#allocation8 + $0xae0] sm:$0xff]
    %v1910 = vld [vmem:[#allocation8 + $0xae8] sm:$0xff]
    %v1911 = vld [vmem:[#allocation8 + $0xaf0] sm:$0xff]
    %v1912 = vld [vmem:[#allocation8 + $0xaf8] sm:$0xff]
    %v1913 = vld [vmem:[#allocation8 + $0xb00] sm:$0xff]
    %v1914 = vld [vmem:[#allocation8 + $0xb08] sm:$0xff]
    %v1915 = vld [vmem:[#allocation8 + $0xb10] sm:$0xff]
    %v1916 = vld [vmem:[#allocation8 + $0xb18] sm:$0xff]
    %v1917 = vld [vmem:[#allocation8 + $0xb20] sm:$0xff]
    %v1918 = vld [vmem:[#allocation8 + $0xb28] sm:$0xff]
    %v1919 = vld [vmem:[#allocation8 + $0xb30] sm:$0xff]
    %v1920 = vld [vmem:[#allocation8 + $0xb38] sm:$0xff]
    %v1921 = vld [vmem:[#allocation8 + $0xb40] sm:$0xff]
    %v1922 = vld [vmem:[#allocation8 + $0xb48] sm:$0xff]
    %v1923 = vld [vmem:[#allocation8 + $0xb50] sm:$0xff]
    %v1924 = vld [vmem:[#allocation8 + $0xb58] sm:$0xff]
    %v1925 = vld [vmem:[#allocation8 + $0xb60] sm:$0xff]
    %v1926 = vld [vmem:[#allocation8 + $0xb68] sm:$0xff]
    %v1927 = vld [vmem:[#allocation8 + $0xb70] sm:$0xff]
    %v1928 = vld [vmem:[#allocation8 + $0xb78] sm:$0xff]
    %v1929 = vld [vmem:[#allocation8 + $0xb80] sm:$0xff]
    %v1930 = vld [vmem:[#allocation8 + $0xb88] sm:$0xff]
    %v1931 = vld [vmem:[#allocation8 + $0xb90] sm:$0xff]
    %v1932 = vld [vmem:[#allocation8 + $0xb98] sm:$0xff]
    %v1933 = vld [vmem:[#allocation8 + $0xba0] sm:$0xff]
    %v1934 = vld [vmem:[#allocation8 + $0xba8] sm:$0xff]
    %v1935 = vld [vmem:[#allocation8 + $0xbb0] sm:$0xff]
    %v1936 = vld [vmem:[#allocation8 + $0xbb8] sm:$0xff]
    %v1937 = vld [vmem:[#allocation8 + $0xbc0] sm:$0xff]
    %v1938 = vld [vmem:[#allocation8 + $0xbc8] sm:$0xff]
    %v1939 = vld [vmem:[#allocation8 + $0xbd0] sm:$0xff]
    %v1940 = vld [vmem:[#allocation8 + $0xbd8] sm:$0xff]
    %v1941 = vld [vmem:[#allocation8 + $0xbe0] sm:$0xff]
    %v1942 = vld [vmem:[#allocation8 + $0xbe8] sm:$0xff]
    %v1943 = vld [vmem:[#allocation8 + $0xbf0] sm:$0xff]
    %v1944 = vld [vmem:[#allocation8 + $0xbf8] sm:$0xff]
    %v1945 = vld [vmem:[#allocation10] sm:$0xf]
    %v1947 = vlaneseq
    %v1948 = vshrl.u32 %v1947, 7
    %v1949 = vsub.s32 0, %v1948
    %v1950 = vrot.slane %v1945, %v1949
    %v1951 = vlaneseq
    %v1952 = vshrl.u32 %v1951, 7
    %v1953 = vsub.s32 1, %v1952
    %v1954 = vrot.slane %v1945, %v1953
    %v1955 = vlaneseq
    %v1956 = vshrl.u32 %v1955, 7
    %v1957 = vsub.s32 2, %v1956
    %v1958 = vrot.slane %v1945, %v1957
    %v1959 = vlaneseq
    %v1960 = vshrl.u32 %v1959, 7
    %v1961 = vsub.s32 3, %v1960
    %v1962 = vrot.slane %v1945, %v1961
    %v2351 = vunpack.c.l.b16 %v1561
    %v2352 = vunpack.c.h.b16 %v1561
    %v2353 = vunpack.c.l.b16 %v1562
    %v2354 = vunpack.c.h.b16 %v1562
    %v2355 = vunpack.c.l.b16 %v1563
    %v2356 = vunpack.c.h.b16 %v1563
    %v2357 = vunpack.c.l.b16 %v1564
    %v2358 = vunpack.c.h.b16 %v1564
    %v2359 = vunpack.c.l.b16 %v1565
    %v2360 = vunpack.c.h.b16 %v1565
    %v2361 = vunpack.c.l.b16 %v1566
    %v2362 = vunpack.c.h.b16 %v1566
    %v2363 = vunpack.c.l.b16 %v1567
    %v2364 = vunpack.c.h.b16 %v1567
    %v2365 = vunpack.c.l.b16 %v1568
    %v2366 = vunpack.c.h.b16 %v1568
    %v2367 = vunpack.c.l.b16 %v1569
    %v2368 = vunpack.c.h.b16 %v1569
    %v2369 = vunpack.c.l.b16 %v1570
    %v2370 = vunpack.c.h.b16 %v1570
    %v2371 = vunpack.c.l.b16 %v1571
    %v2372 = vunpack.c.h.b16 %v1571
    %v2373 = vunpack.c.l.b16 %v1572
    %v2374 = vunpack.c.h.b16 %v1572
    %v2375 = vunpack.c.l.b16 %v1573
    %v2376 = vunpack.c.h.b16 %v1573
    %v2377 = vunpack.c.l.b16 %v1574
    %v2378 = vunpack.c.h.b16 %v1574
    %v2379 = vunpack.c.l.b16 %v1575
    %v2380 = vunpack.c.h.b16 %v1575
    %v2381 = vunpack.c.l.b16 %v1576
    %v2382 = vunpack.c.h.b16 %v1576
    %v2383 = vunpack.c.l.b16 %v1577
    %v2384 = vunpack.c.h.b16 %v1577
    %v2385 = vunpack.c.l.b16 %v1578
    %v2386 = vunpack.c.h.b16 %v1578
    %v2387 = vunpack.c.l.b16 %v1579
    %v2388 = vunpack.c.h.b16 %v1579
    %v2389 = vunpack.c.l.b16 %v1580
    %v2390 = vunpack.c.h.b16 %v1580
    %v2391 = vunpack.c.l.b16 %v1581
    %v2392 = vunpack.c.h.b16 %v1581
    %v2393 = vunpack.c.l.b16 %v1582
    %v2394 = vunpack.c.h.b16 %v1582
    %v2395 = vunpack.c.l.b16 %v1583
    %v2396 = vunpack.c.h.b16 %v1583
    %v2397 = vunpack.c.l.b16 %v1584
    %v2398 = vunpack.c.h.b16 %v1584
    %v2399 = vunpack.c.l.b16 %v1585
    %v2400 = vunpack.c.h.b16 %v1585
    %v2401 = vunpack.c.l.b16 %v1586
    %v2402 = vunpack.c.h.b16 %v1586
    %v2403 = vunpack.c.l.b16 %v1587
    %v2404 = vunpack.c.h.b16 %v1587
    %v2405 = vunpack.c.l.b16 %v1588
    %v2406 = vunpack.c.h.b16 %v1588
    %v2407 = vunpack.c.l.b16 %v1589
    %v2408 = vunpack.c.h.b16 %v1589
    %v2409 = vunpack.c.l.b16 %v1590
    %v2410 = vunpack.c.h.b16 %v1590
    %v2411 = vunpack.c.l.b16 %v1591
    %v2412 = vunpack.c.h.b16 %v1591
    %v2413 = vunpack.c.l.b16 %v1592
    %v2414 = vunpack.c.h.b16 %v1592
    %v2415 = vunpack.c.l.b16 %v1593
    %v2416 = vunpack.c.h.b16 %v1593
    %v2417 = vunpack.c.l.b16 %v1594
    %v2418 = vunpack.c.h.b16 %v1594
    %v2419 = vunpack.c.l.b16 %v1595
    %v2420 = vunpack.c.h.b16 %v1595
    %v2421 = vunpack.c.l.b16 %v1596
    %v2422 = vunpack.c.h.b16 %v1596
    %v2423 = vunpack.c.l.b16 %v1597
    %v2424 = vunpack.c.h.b16 %v1597
    %v2425 = vunpack.c.l.b16 %v1598
    %v2426 = vunpack.c.h.b16 %v1598
    %v2427 = vunpack.c.l.b16 %v1599
    %v2428 = vunpack.c.h.b16 %v1599
    %v2429 = vunpack.c.l.b16 %v1600
    %v2430 = vunpack.c.h.b16 %v1600
    %v2431 = vunpack.c.l.b16 %v1601
    %v2432 = vunpack.c.h.b16 %v1601
    %v2433 = vunpack.c.l.b16 %v1602
    %v2434 = vunpack.c.h.b16 %v1602
    %v2435 = vunpack.c.l.b16 %v1603
    %v2436 = vunpack.c.h.b16 %v1603
    %v2437 = vunpack.c.l.b16 %v1604
    %v2438 = vunpack.c.h.b16 %v1604
    %v2439 = vunpack.c.l.b16 %v1605
    %v2440 = vunpack.c.h.b16 %v1605
    %v2441 = vunpack.c.l.b16 %v1606
    %v2442 = vunpack.c.h.b16 %v1606
    %v2443 = vunpack.c.l.b16 %v1607
    %v2444 = vunpack.c.h.b16 %v1607
    %v2445 = vunpack.c.l.b16 %v1608
    %v2446 = vunpack.c.h.b16 %v1608
    %v2447 = vunpack.c.l.b16 %v1609
    %v2448 = vunpack.c.h.b16 %v1609
    %v2449 = vunpack.c.l.b16 %v1610
    %v2450 = vunpack.c.h.b16 %v1610
    %v2451 = vunpack.c.l.b16 %v1611
    %v2452 = vunpack.c.h.b16 %v1611
    %v2453 = vunpack.c.l.b16 %v1612
    %v2454 = vunpack.c.h.b16 %v1612
    %v2455 = vunpack.c.l.b16 %v1613
    %v2456 = vunpack.c.h.b16 %v1613
    %v2457 = vunpack.c.l.b16 %v1614
    %v2458 = vunpack.c.h.b16 %v1614
    %v2459 = vunpack.c.l.b16 %v1615
    %v2460 = vunpack.c.h.b16 %v1615
    %v2461 = vunpack.c.l.b16 %v1616
    %v2462 = vunpack.c.h.b16 %v1616
    %v2463 = vunpack.c.l.b16 %v1617
    %v2464 = vunpack.c.h.b16 %v1617
    %v2465 = vunpack.c.l.b16 %v1618
    %v2466 = vunpack.c.h.b16 %v1618
    %v2467 = vunpack.c.l.b16 %v1619
    %v2468 = vunpack.c.h.b16 %v1619
    %v2469 = vunpack.c.l.b16 %v1620
    %v2470 = vunpack.c.h.b16 %v1620
    %v2471 = vunpack.c.l.b16 %v1621
    %v2472 = vunpack.c.h.b16 %v1621
    %v2473 = vunpack.c.l.b16 %v1622
    %v2474 = vunpack.c.h.b16 %v1622
    %v2475 = vunpack.c.l.b16 %v1623
    %v2476 = vunpack.c.h.b16 %v1623
    %v2477 = vunpack.c.l.b16 %v1624
    %v2478 = vunpack.c.h.b16 %v1624
    %v2479 = vunpack.c.l.b16 %v1625
    %v2480 = vunpack.c.h.b16 %v1625
    %v2481 = vunpack.c.l.b16 %v1626
    %v2482 = vunpack.c.h.b16 %v1626
    %v2483 = vunpack.c.l.b16 %v1627
    %v2484 = vunpack.c.h.b16 %v1627
    %v2485 = vunpack.c.l.b16 %v1628
    %v2486 = vunpack.c.h.b16 %v1628
    %v2487 = vunpack.c.l.b16 %v1629
    %v2488 = vunpack.c.h.b16 %v1629
    %v2489 = vunpack.c.l.b16 %v1630
    %v2490 = vunpack.c.h.b16 %v1630
    %v2491 = vunpack.c.l.b16 %v1631
    %v2492 = vunpack.c.h.b16 %v1631
    %v2493 = vunpack.c.l.b16 %v1632
    %v2494 = vunpack.c.h.b16 %v1632
    %v2495 = vunpack.c.l.b16 %v1633
    %v2496 = vunpack.c.h.b16 %v1633
    %v2497 = vunpack.c.l.b16 %v1634
    %v2498 = vunpack.c.h.b16 %v1634
    %v2499 = vunpack.c.l.b16 %v1635
    %v2500 = vunpack.c.h.b16 %v1635
    %v2501 = vunpack.c.l.b16 %v1636
    %v2502 = vunpack.c.h.b16 %v1636
    %v2503 = vunpack.c.l.b16 %v1637
    %v2504 = vunpack.c.h.b16 %v1637
    %v2505 = vunpack.c.l.b16 %v1638
    %v2506 = vunpack.c.h.b16 %v1638
    %v2507 = vunpack.c.l.b16 %v1639
    %v2508 = vunpack.c.h.b16 %v1639
    %v2509 = vunpack.c.l.b16 %v1640
    %v2510 = vunpack.c.h.b16 %v1640
    %v2511 = vunpack.c.l.b16 %v1641
    %v2512 = vunpack.c.h.b16 %v1641
    %v2513 = vunpack.c.l.b16 %v1642
    %v2514 = vunpack.c.h.b16 %v1642
    %v2515 = vunpack.c.l.b16 %v1643
    %v2516 = vunpack.c.h.b16 %v1643
    %v2517 = vunpack.c.l.b16 %v1644
    %v2518 = vunpack.c.h.b16 %v1644
    %v2519 = vunpack.c.l.b16 %v1645
    %v2520 = vunpack.c.h.b16 %v1645
    %v2521 = vunpack.c.l.b16 %v1646
    %v2522 = vunpack.c.h.b16 %v1646
    %v2523 = vunpack.c.l.b16 %v1647
    %v2524 = vunpack.c.h.b16 %v1647
    %v2525 = vunpack.c.l.b16 %v1648
    %v2526 = vunpack.c.h.b16 %v1648
    %v2527 = vunpack.c.l.b16 %v1649
    %v2528 = vunpack.c.h.b16 %v1649
    %v2529 = vunpack.c.l.b16 %v1650
    %v2530 = vunpack.c.h.b16 %v1650
    %v2531 = vunpack.c.l.b16 %v1651
    %v2532 = vunpack.c.h.b16 %v1651
    %v2533 = vunpack.c.l.b16 %v1652
    %v2534 = vunpack.c.h.b16 %v1652
    %v2535 = vunpack.c.l.b16 %v1653
    %v2536 = vunpack.c.h.b16 %v1653
    %v2537 = vunpack.c.l.b16 %v1654
    %v2538 = vunpack.c.h.b16 %v1654
    %v2539 = vunpack.c.l.b16 %v1655
    %v2540 = vunpack.c.h.b16 %v1655
    %v2541 = vunpack.c.l.b16 %v1656
    %v2542 = vunpack.c.h.b16 %v1656
    %v2543 = vunpack.c.l.b16 %v1657
    %v2544 = vunpack.c.h.b16 %v1657
    %v2545 = vunpack.c.l.b16 %v1658
    %v2546 = vunpack.c.h.b16 %v1658
    %v2547 = vunpack.c.l.b16 %v1659
    %v2548 = vunpack.c.h.b16 %v1659
    %v2549 = vunpack.c.l.b16 %v1660
    %v2550 = vunpack.c.h.b16 %v1660
    %v2551 = vunpack.c.l.b16 %v1661
    %v2552 = vunpack.c.h.b16 %v1661
    %v2553 = vunpack.c.l.b16 %v1662
    %v2554 = vunpack.c.h.b16 %v1662
    %v2555 = vunpack.c.l.b16 %v1663
    %v2556 = vunpack.c.h.b16 %v1663
    %v2557 = vunpack.c.l.b16 %v1664
    %v2558 = vunpack.c.h.b16 %v1664
    %v2559 = vunpack.c.l.b16 %v1665
    %v2560 = vunpack.c.h.b16 %v1665
    %v2561 = vunpack.c.l.b16 %v1666
    %v2562 = vunpack.c.h.b16 %v1666
    %v2563 = vunpack.c.l.b16 %v1667
    %v2564 = vunpack.c.h.b16 %v1667
    %v2565 = vunpack.c.l.b16 %v1668
    %v2566 = vunpack.c.h.b16 %v1668
    %v2567 = vunpack.c.l.b16 %v1669
    %v2568 = vunpack.c.h.b16 %v1669
    %v2569 = vunpack.c.l.b16 %v1670
    %v2570 = vunpack.c.h.b16 %v1670
    %v2571 = vunpack.c.l.b16 %v1671
    %v2572 = vunpack.c.h.b16 %v1671
    %v2573 = vunpack.c.l.b16 %v1672
    %v2574 = vunpack.c.h.b16 %v1672
    %v2575 = vunpack.c.l.b16 %v1673
    %v2576 = vunpack.c.h.b16 %v1673
    %v2577 = vunpack.c.l.b16 %v1674
    %v2578 = vunpack.c.h.b16 %v1674
    %v2579 = vunpack.c.l.b16 %v1675
    %v2580 = vunpack.c.h.b16 %v1675
    %v2581 = vunpack.c.l.b16 %v1676
    %v2582 = vunpack.c.h.b16 %v1676
    %v2583 = vunpack.c.l.b16 %v1677
    %v2584 = vunpack.c.h.b16 %v1677
    %v2585 = vunpack.c.l.b16 %v1678
    %v2586 = vunpack.c.h.b16 %v1678
    %v2587 = vunpack.c.l.b16 %v1679
    %v2588 = vunpack.c.h.b16 %v1679
    %v2589 = vunpack.c.l.b16 %v1680
    %v2590 = vunpack.c.h.b16 %v1680
    %v2591 = vunpack.c.l.b16 %v1681
    %v2592 = vunpack.c.h.b16 %v1681
    %v2593 = vunpack.c.l.b16 %v1682
    %v2594 = vunpack.c.h.b16 %v1682
    %v2595 = vunpack.c.l.b16 %v1683
    %v2596 = vunpack.c.h.b16 %v1683
    %v2597 = vunpack.c.l.b16 %v1684
    %v2598 = vunpack.c.h.b16 %v1684
    %v2599 = vunpack.c.l.b16 %v1685
    %v2600 = vunpack.c.h.b16 %v1685
    %v2601 = vunpack.c.l.b16 %v1686
    %v2602 = vunpack.c.h.b16 %v1686
    %v2603 = vunpack.c.l.b16 %v1687
    %v2604 = vunpack.c.h.b16 %v1687
    %v2605 = vunpack.c.l.b16 %v1688
    %v2606 = vunpack.c.h.b16 %v1688
    %v2607 = vunpack.c.l.b16 %v1689
    %v2608 = vunpack.c.h.b16 %v1689
    %v2609 = vunpack.c.l.b16 %v1690
    %v2610 = vunpack.c.h.b16 %v1690
    %v2611 = vunpack.c.l.b16 %v1691
    %v2612 = vunpack.c.h.b16 %v1691
    %v2613 = vunpack.c.l.b16 %v1692
    %v2614 = vunpack.c.h.b16 %v1692
    %v2615 = vunpack.c.l.b16 %v1693
    %v2616 = vunpack.c.h.b16 %v1693
    %v2617 = vunpack.c.l.b16 %v1694
    %v2618 = vunpack.c.h.b16 %v1694
    %v2619 = vunpack.c.l.b16 %v1695
    %v2620 = vunpack.c.h.b16 %v1695
    %v2621 = vunpack.c.l.b16 %v1696
    %v2622 = vunpack.c.h.b16 %v1696
    %v2623 = vunpack.c.l.b16 %v1697
    %v2624 = vunpack.c.h.b16 %v1697
    %v2625 = vunpack.c.l.b16 %v1698
    %v2626 = vunpack.c.h.b16 %v1698
    %v2627 = vunpack.c.l.b16 %v1699
    %v2628 = vunpack.c.h.b16 %v1699
    %v2629 = vunpack.c.l.b16 %v1700
    %v2630 = vunpack.c.h.b16 %v1700
    %v2631 = vunpack.c.l.b16 %v1701
    %v2632 = vunpack.c.h.b16 %v1701
    %v2633 = vunpack.c.l.b16 %v1702
    %v2634 = vunpack.c.h.b16 %v1702
    %v2635 = vunpack.c.l.b16 %v1703
    %v2636 = vunpack.c.h.b16 %v1703
    %v2637 = vunpack.c.l.b16 %v1704
    %v2638 = vunpack.c.h.b16 %v1704
    %v2639 = vunpack.c.l.b16 %v1705
    %v2640 = vunpack.c.h.b16 %v1705
    %v2641 = vunpack.c.l.b16 %v1706
    %v2642 = vunpack.c.h.b16 %v1706
    %v2643 = vunpack.c.l.b16 %v1707
    %v2644 = vunpack.c.h.b16 %v1707
    %v2645 = vunpack.c.l.b16 %v1708
    %v2646 = vunpack.c.h.b16 %v1708
    %v2647 = vunpack.c.l.b16 %v1709
    %v2648 = vunpack.c.h.b16 %v1709
    %v2649 = vunpack.c.l.b16 %v1710
    %v2650 = vunpack.c.h.b16 %v1710
    %v2651 = vunpack.c.l.b16 %v1711
    %v2652 = vunpack.c.h.b16 %v1711
    %v2653 = vunpack.c.l.b16 %v1712
    %v2654 = vunpack.c.h.b16 %v1712
    %v2655 = vunpack.c.l.b16 %v1713
    %v2656 = vunpack.c.h.b16 %v1713
    %v2657 = vunpack.c.l.b16 %v1714
    %v2658 = vunpack.c.h.b16 %v1714
    %v2659 = vunpack.c.l.b16 %v1715
    %v2660 = vunpack.c.h.b16 %v1715
    %v2661 = vunpack.c.l.b16 %v1716
    %v2662 = vunpack.c.h.b16 %v1716
    %v2663 = vunpack.c.l.b16 %v1717
    %v2664 = vunpack.c.h.b16 %v1717
    %v2665 = vunpack.c.l.b16 %v1718
    %v2666 = vunpack.c.h.b16 %v1718
    %v2667 = vunpack.c.l.b16 %v1719
    %v2668 = vunpack.c.h.b16 %v1719
    %v2669 = vunpack.c.l.b16 %v1720
    %v2670 = vunpack.c.h.b16 %v1720
    %v2671 = vunpack.c.l.b16 %v1721
    %v2672 = vunpack.c.h.b16 %v1721
    %v2673 = vunpack.c.l.b16 %v1722
    %v2674 = vunpack.c.h.b16 %v1722
    %v2675 = vunpack.c.l.b16 %v1723
    %v2676 = vunpack.c.h.b16 %v1723
    %v2677 = vunpack.c.l.b16 %v1724
    %v2678 = vunpack.c.h.b16 %v1724
    %v2679 = vunpack.c.l.b16 %v1725
    %v2680 = vunpack.c.h.b16 %v1725
    %v2681 = vunpack.c.l.b16 %v1726
    %v2682 = vunpack.c.h.b16 %v1726
    %v2683 = vunpack.c.l.b16 %v1727
    %v2684 = vunpack.c.h.b16 %v1727
    %v2685 = vunpack.c.l.b16 %v1728
    %v2686 = vunpack.c.h.b16 %v1728
    %v2687 = vunpack.c.l.b16 %v1729
    %v2688 = vunpack.c.h.b16 %v1729
    %v2689 = vunpack.c.l.b16 %v1730
    %v2690 = vunpack.c.h.b16 %v1730
    %v2691 = vunpack.c.l.b16 %v1731
    %v2692 = vunpack.c.h.b16 %v1731
    %v2693 = vunpack.c.l.b16 %v1732
    %v2694 = vunpack.c.h.b16 %v1732
    %v2695 = vunpack.c.l.b16 %v1733
    %v2696 = vunpack.c.h.b16 %v1733
    %v2697 = vunpack.c.l.b16 %v1734
    %v2698 = vunpack.c.h.b16 %v1734
    %v2699 = vunpack.c.l.b16 %v1735
    %v2700 = vunpack.c.h.b16 %v1735
    %v2701 = vunpack.c.l.b16 %v1736
    %v2702 = vunpack.c.h.b16 %v1736
    %v2703 = vunpack.c.l.b16 %v1737
    %v2704 = vunpack.c.h.b16 %v1737
    %v2705 = vunpack.c.l.b16 %v1738
    %v2706 = vunpack.c.h.b16 %v1738
    %v2707 = vunpack.c.l.b16 %v1739
    %v2708 = vunpack.c.h.b16 %v1739
    %v2709 = vunpack.c.l.b16 %v1740
    %v2710 = vunpack.c.h.b16 %v1740
    %v2711 = vunpack.c.l.b16 %v1741
    %v2712 = vunpack.c.h.b16 %v1741
    %v2713 = vunpack.c.l.b16 %v1742
    %v2714 = vunpack.c.h.b16 %v1742
    %v2715 = vunpack.c.l.b16 %v1743
    %v2716 = vunpack.c.h.b16 %v1743
    %v2717 = vunpack.c.l.b16 %v1744
    %v2718 = vunpack.c.h.b16 %v1744
    %v2719 = vunpack.c.l.b16 %v1745
    %v2720 = vunpack.c.h.b16 %v1745
    %v2721 = vunpack.c.l.b16 %v1746
    %v2722 = vunpack.c.h.b16 %v1746
    %v2723 = vunpack.c.l.b16 %v1747
    %v2724 = vunpack.c.h.b16 %v1747
    %v2725 = vunpack.c.l.b16 %v1748
    %v2726 = vunpack.c.h.b16 %v1748
    %v2727 = vunpack.c.l.b16 %v1749
    %v2728 = vunpack.c.h.b16 %v1749
    %v2729 = vunpack.c.l.b16 %v1750
    %v2730 = vunpack.c.h.b16 %v1750
    %v2731 = vunpack.c.l.b16 %v1751
    %v2732 = vunpack.c.h.b16 %v1751
    %v2733 = vunpack.c.l.b16 %v1752
    %v2734 = vunpack.c.h.b16 %v1752
    %v2735 = vunpack.c.l.b16 %v1753
    %v2736 = vunpack.c.h.b16 %v1753
    %v2737 = vunpack.c.l.b16 %v1754
    %v2738 = vunpack.c.h.b16 %v1754
    %v2739 = vunpack.c.l.b16 %v1755
    %v2740 = vunpack.c.h.b16 %v1755
    %v2741 = vunpack.c.l.b16 %v1756
    %v2742 = vunpack.c.h.b16 %v1756
    %v2743 = vunpack.c.l.b16 %v1757
    %v2744 = vunpack.c.h.b16 %v1757
    %v2745 = vunpack.c.l.b16 %v1758
    %v2746 = vunpack.c.h.b16 %v1758
    %v2747 = vunpack.c.l.b16 %v1759
    %v2748 = vunpack.c.h.b16 %v1759
    %v2749 = vunpack.c.l.b16 %v1760
    %v2750 = vunpack.c.h.b16 %v1760
    %v2751 = vunpack.c.l.b16 %v1761
    %v2752 = vunpack.c.h.b16 %v1761
    %v2753 = vunpack.c.l.b16 %v1762
    %v2754 = vunpack.c.h.b16 %v1762
    %v2755 = vunpack.c.l.b16 %v1763
    %v2756 = vunpack.c.h.b16 %v1763
    %v2757 = vunpack.c.l.b16 %v1764
    %v2758 = vunpack.c.h.b16 %v1764
    %v2759 = vunpack.c.l.b16 %v1765
    %v2760 = vunpack.c.h.b16 %v1765
    %v2761 = vunpack.c.l.b16 %v1766
    %v2762 = vunpack.c.h.b16 %v1766
    %v2763 = vunpack.c.l.b16 %v1767
    %v2764 = vunpack.c.h.b16 %v1767
    %v2765 = vunpack.c.l.b16 %v1768
    %v2766 = vunpack.c.h.b16 %v1768
    %v2767 = vunpack.c.l.b16 %v1769
    %v2768 = vunpack.c.h.b16 %v1769
    %v2769 = vunpack.c.l.b16 %v1770
    %v2770 = vunpack.c.h.b16 %v1770
    %v2771 = vunpack.c.l.b16 %v1771
    %v2772 = vunpack.c.h.b16 %v1771
    %v2773 = vunpack.c.l.b16 %v1772
    %v2774 = vunpack.c.h.b16 %v1772
    %v2775 = vunpack.c.l.b16 %v1773
    %v2776 = vunpack.c.h.b16 %v1773
    %v2777 = vunpack.c.l.b16 %v1774
    %v2778 = vunpack.c.h.b16 %v1774
    %v2779 = vunpack.c.l.b16 %v1775
    %v2780 = vunpack.c.h.b16 %v1775
    %v2781 = vunpack.c.l.b16 %v1776
    %v2782 = vunpack.c.h.b16 %v1776
    %v2783 = vunpack.c.l.b16 %v1777
    %v2784 = vunpack.c.h.b16 %v1777
    %v2785 = vunpack.c.l.b16 %v1778
    %v2786 = vunpack.c.h.b16 %v1778
    %v2787 = vunpack.c.l.b16 %v1779
    %v2788 = vunpack.c.h.b16 %v1779
    %v2789 = vunpack.c.l.b16 %v1780
    %v2790 = vunpack.c.h.b16 %v1780
    %v2791 = vunpack.c.l.b16 %v1781
    %v2792 = vunpack.c.h.b16 %v1781
    %v2793 = vunpack.c.l.b16 %v1782
    %v2794 = vunpack.c.h.b16 %v1782
    %v2795 = vunpack.c.l.b16 %v1783
    %v2796 = vunpack.c.h.b16 %v1783
    %v2797 = vunpack.c.l.b16 %v1784
    %v2798 = vunpack.c.h.b16 %v1784
    %v2799 = vunpack.c.l.b16 %v1785
    %v2800 = vunpack.c.h.b16 %v1785
    %v2801 = vunpack.c.l.b16 %v1786
    %v2802 = vunpack.c.h.b16 %v1786
    %v2803 = vunpack.c.l.b16 %v1787
    %v2804 = vunpack.c.h.b16 %v1787
    %v2805 = vunpack.c.l.b16 %v1788
    %v2806 = vunpack.c.h.b16 %v1788
    %v2807 = vunpack.c.l.b16 %v1789
    %v2808 = vunpack.c.h.b16 %v1789
    %v2809 = vunpack.c.l.b16 %v1790
    %v2810 = vunpack.c.h.b16 %v1790
    %v2811 = vunpack.c.l.b16 %v1791
    %v2812 = vunpack.c.h.b16 %v1791
    %v2813 = vunpack.c.l.b16 %v1792
    %v2814 = vunpack.c.h.b16 %v1792
    %v2815 = vunpack.c.l.b16 %v1793
    %v2816 = vunpack.c.h.b16 %v1793
    %v2817 = vunpack.c.l.b16 %v1794
    %v2818 = vunpack.c.h.b16 %v1794
    %v2819 = vunpack.c.l.b16 %v1795
    %v2820 = vunpack.c.h.b16 %v1795
    %v2821 = vunpack.c.l.b16 %v1796
    %v2822 = vunpack.c.h.b16 %v1796
    %v2823 = vunpack.c.l.b16 %v1797
    %v2824 = vunpack.c.h.b16 %v1797
    %v2825 = vunpack.c.l.b16 %v1798
    %v2826 = vunpack.c.h.b16 %v1798
    %v2827 = vunpack.c.l.b16 %v1799
    %v2828 = vunpack.c.h.b16 %v1799
    %v2829 = vunpack.c.l.b16 %v1800
    %v2830 = vunpack.c.h.b16 %v1800
    %v2831 = vunpack.c.l.b16 %v1801
    %v2832 = vunpack.c.h.b16 %v1801
    %v2833 = vunpack.c.l.b16 %v1802
    %v2834 = vunpack.c.h.b16 %v1802
    %v2835 = vunpack.c.l.b16 %v1803
    %v2836 = vunpack.c.h.b16 %v1803
    %v2837 = vunpack.c.l.b16 %v1804
    %v2838 = vunpack.c.h.b16 %v1804
    %v2839 = vunpack.c.l.b16 %v1805
    %v2840 = vunpack.c.h.b16 %v1805
    %v2841 = vunpack.c.l.b16 %v1806
    %v2842 = vunpack.c.h.b16 %v1806
    %v2843 = vunpack.c.l.b16 %v1807
    %v2844 = vunpack.c.h.b16 %v1807
    %v2845 = vunpack.c.l.b16 %v1808
    %v2846 = vunpack.c.h.b16 %v1808
    %v2847 = vunpack.c.l.b16 %v1809
    %v2848 = vunpack.c.h.b16 %v1809
    %v2849 = vunpack.c.l.b16 %v1810
    %v2850 = vunpack.c.h.b16 %v1810
    %v2851 = vunpack.c.l.b16 %v1811
    %v2852 = vunpack.c.h.b16 %v1811
    %v2853 = vunpack.c.l.b16 %v1812
    %v2854 = vunpack.c.h.b16 %v1812
    %v2855 = vunpack.c.l.b16 %v1813
    %v2856 = vunpack.c.h.b16 %v1813
    %v2857 = vunpack.c.l.b16 %v1814
    %v2858 = vunpack.c.h.b16 %v1814
    %v2859 = vunpack.c.l.b16 %v1815
    %v2860 = vunpack.c.h.b16 %v1815
    %v2861 = vunpack.c.l.b16 %v1816
    %v2862 = vunpack.c.h.b16 %v1816
    %v2863 = vunpack.c.l.b16 %v1817
    %v2864 = vunpack.c.h.b16 %v1817
    %v2865 = vunpack.c.l.b16 %v1818
    %v2866 = vunpack.c.h.b16 %v1818
    %v2867 = vunpack.c.l.b16 %v1819
    %v2868 = vunpack.c.h.b16 %v1819
    %v2869 = vunpack.c.l.b16 %v1820
    %v2870 = vunpack.c.h.b16 %v1820
    %v2871 = vunpack.c.l.b16 %v1821
    %v2872 = vunpack.c.h.b16 %v1821
    %v2873 = vunpack.c.l.b16 %v1822
    %v2874 = vunpack.c.h.b16 %v1822
    %v2875 = vunpack.c.l.b16 %v1823
    %v2876 = vunpack.c.h.b16 %v1823
    %v2877 = vunpack.c.l.b16 %v1824
    %v2878 = vunpack.c.h.b16 %v1824
    %v2879 = vunpack.c.l.b16 %v1825
    %v2880 = vunpack.c.h.b16 %v1825
    %v2881 = vunpack.c.l.b16 %v1826
    %v2882 = vunpack.c.h.b16 %v1826
    %v2883 = vunpack.c.l.b16 %v1827
    %v2884 = vunpack.c.h.b16 %v1827
    %v2885 = vunpack.c.l.b16 %v1828
    %v2886 = vunpack.c.h.b16 %v1828
    %v2887 = vunpack.c.l.b16 %v1829
    %v2888 = vunpack.c.h.b16 %v1829
    %v2889 = vunpack.c.l.b16 %v1830
    %v2890 = vunpack.c.h.b16 %v1830
    %v2891 = vunpack.c.l.b16 %v1831
    %v2892 = vunpack.c.h.b16 %v1831
    %v2893 = vunpack.c.l.b16 %v1832
    %v2894 = vunpack.c.h.b16 %v1832
    %v2895 = vunpack.c.l.b16 %v1833
    %v2896 = vunpack.c.h.b16 %v1833
    %v2897 = vunpack.c.l.b16 %v1834
    %v2898 = vunpack.c.h.b16 %v1834
    %v2899 = vunpack.c.l.b16 %v1835
    %v2900 = vunpack.c.h.b16 %v1835
    %v2901 = vunpack.c.l.b16 %v1836
    %v2902 = vunpack.c.h.b16 %v1836
    %v2903 = vunpack.c.l.b16 %v1837
    %v2904 = vunpack.c.h.b16 %v1837
    %v2905 = vunpack.c.l.b16 %v1838
    %v2906 = vunpack.c.h.b16 %v1838
    %v2907 = vunpack.c.l.b16 %v1839
    %v2908 = vunpack.c.h.b16 %v1839
    %v2909 = vunpack.c.l.b16 %v1840
    %v2910 = vunpack.c.h.b16 %v1840
    %v2911 = vunpack.c.l.b16 %v1841
    %v2912 = vunpack.c.h.b16 %v1841
    %v2913 = vunpack.c.l.b16 %v1842
    %v2914 = vunpack.c.h.b16 %v1842
    %v2915 = vunpack.c.l.b16 %v1843
    %v2916 = vunpack.c.h.b16 %v1843
    %v2917 = vunpack.c.l.b16 %v1844
    %v2918 = vunpack.c.h.b16 %v1844
    %v2919 = vunpack.c.l.b16 %v1845
    %v2920 = vunpack.c.h.b16 %v1845
    %v2921 = vunpack.c.l.b16 %v1846
    %v2922 = vunpack.c.h.b16 %v1846
    %v2923 = vunpack.c.l.b16 %v1847
    %v2924 = vunpack.c.h.b16 %v1847
    %v2925 = vunpack.c.l.b16 %v1848
    %v2926 = vunpack.c.h.b16 %v1848
    %v2927 = vunpack.c.l.b16 %v1849
    %v2928 = vunpack.c.h.b16 %v1849
    %v2929 = vunpack.c.l.b16 %v1850
    %v2930 = vunpack.c.h.b16 %v1850
    %v2931 = vunpack.c.l.b16 %v1851
    %v2932 = vunpack.c.h.b16 %v1851
    %v2933 = vunpack.c.l.b16 %v1852
    %v2934 = vunpack.c.h.b16 %v1852
    %v2935 = vunpack.c.l.b16 %v1853
    %v2936 = vunpack.c.h.b16 %v1853
    %v2937 = vunpack.c.l.b16 %v1854
    %v2938 = vunpack.c.h.b16 %v1854
    %v2939 = vunpack.c.l.b16 %v1855
    %v2940 = vunpack.c.h.b16 %v1855
    %v2941 = vunpack.c.l.b16 %v1856
    %v2942 = vunpack.c.h.b16 %v1856
    %v2943 = vunpack.c.l.b16 %v1857
    %v2944 = vunpack.c.h.b16 %v1857
    %v2945 = vunpack.c.l.b16 %v1858
    %v2946 = vunpack.c.h.b16 %v1858
    %v2947 = vunpack.c.l.b16 %v1859
    %v2948 = vunpack.c.h.b16 %v1859
    %v2949 = vunpack.c.l.b16 %v1860
    %v2950 = vunpack.c.h.b16 %v1860
    %v2951 = vunpack.c.l.b16 %v1861
    %v2952 = vunpack.c.h.b16 %v1861
    %v2953 = vunpack.c.l.b16 %v1862
    %v2954 = vunpack.c.h.b16 %v1862
    %v2955 = vunpack.c.l.b16 %v1863
    %v2956 = vunpack.c.h.b16 %v1863
    %v2957 = vunpack.c.l.b16 %v1864
    %v2958 = vunpack.c.h.b16 %v1864
    %v2959 = vunpack.c.l.b16 %v1865
    %v2960 = vunpack.c.h.b16 %v1865
    %v2961 = vunpack.c.l.b16 %v1866
    %v2962 = vunpack.c.h.b16 %v1866
    %v2963 = vunpack.c.l.b16 %v1867
    %v2964 = vunpack.c.h.b16 %v1867
    %v2965 = vunpack.c.l.b16 %v1868
    %v2966 = vunpack.c.h.b16 %v1868
    %v2967 = vunpack.c.l.b16 %v1869
    %v2968 = vunpack.c.h.b16 %v1869
    %v2969 = vunpack.c.l.b16 %v1870
    %v2970 = vunpack.c.h.b16 %v1870
    %v2971 = vunpack.c.l.b16 %v1871
    %v2972 = vunpack.c.h.b16 %v1871
    %v2973 = vunpack.c.l.b16 %v1872
    %v2974 = vunpack.c.h.b16 %v1872
    %v2975 = vunpack.c.l.b16 %v1873
    %v2976 = vunpack.c.h.b16 %v1873
    %v2977 = vunpack.c.l.b16 %v1874
    %v2978 = vunpack.c.h.b16 %v1874
    %v2979 = vunpack.c.l.b16 %v1875
    %v2980 = vunpack.c.h.b16 %v1875
    %v2981 = vunpack.c.l.b16 %v1876
    %v2982 = vunpack.c.h.b16 %v1876
    %v2983 = vunpack.c.l.b16 %v1877
    %v2984 = vunpack.c.h.b16 %v1877
    %v2985 = vunpack.c.l.b16 %v1878
    %v2986 = vunpack.c.h.b16 %v1878
    %v2987 = vunpack.c.l.b16 %v1879
    %v2988 = vunpack.c.h.b16 %v1879
    %v2989 = vunpack.c.l.b16 %v1880
    %v2990 = vunpack.c.h.b16 %v1880
    %v2991 = vunpack.c.l.b16 %v1881
    %v2992 = vunpack.c.h.b16 %v1881
    %v2993 = vunpack.c.l.b16 %v1882
    %v2994 = vunpack.c.h.b16 %v1882
    %v2995 = vunpack.c.l.b16 %v1883
    %v2996 = vunpack.c.h.b16 %v1883
    %v2997 = vunpack.c.l.b16 %v1884
    %v2998 = vunpack.c.h.b16 %v1884
    %v2999 = vunpack.c.l.b16 %v1885
    %v3000 = vunpack.c.h.b16 %v1885
    %v3001 = vunpack.c.l.b16 %v1886
    %v3002 = vunpack.c.h.b16 %v1886
    %v3003 = vunpack.c.l.b16 %v1887
    %v3004 = vunpack.c.h.b16 %v1887
    %v3005 = vunpack.c.l.b16 %v1888
    %v3006 = vunpack.c.h.b16 %v1888
    %v3007 = vunpack.c.l.b16 %v1889
    %v3008 = vunpack.c.h.b16 %v1889
    %v3009 = vunpack.c.l.b16 %v1890
    %v3010 = vunpack.c.h.b16 %v1890
    %v3011 = vunpack.c.l.b16 %v1891
    %v3012 = vunpack.c.h.b16 %v1891
    %v3013 = vunpack.c.l.b16 %v1892
    %v3014 = vunpack.c.h.b16 %v1892
    %v3015 = vunpack.c.l.b16 %v1893
    %v3016 = vunpack.c.h.b16 %v1893
    %v3017 = vunpack.c.l.b16 %v1894
    %v3018 = vunpack.c.h.b16 %v1894
    %v3019 = vunpack.c.l.b16 %v1895
    %v3020 = vunpack.c.h.b16 %v1895
    %v3021 = vunpack.c.l.b16 %v1896
    %v3022 = vunpack.c.h.b16 %v1896
    %v3023 = vunpack.c.l.b16 %v1897
    %v3024 = vunpack.c.h.b16 %v1897
    %v3025 = vunpack.c.l.b16 %v1898
    %v3026 = vunpack.c.h.b16 %v1898
    %v3027 = vunpack.c.l.b16 %v1899
    %v3028 = vunpack.c.h.b16 %v1899
    %v3029 = vunpack.c.l.b16 %v1900
    %v3030 = vunpack.c.h.b16 %v1900
    %v3031 = vunpack.c.l.b16 %v1901
    %v3032 = vunpack.c.h.b16 %v1901
    %v3033 = vunpack.c.l.b16 %v1902
    %v3034 = vunpack.c.h.b16 %v1902
    %v3035 = vunpack.c.l.b16 %v1903
    %v3036 = vunpack.c.h.b16 %v1903
    %v3037 = vunpack.c.l.b16 %v1904
    %v3038 = vunpack.c.h.b16 %v1904
    %v3039 = vunpack.c.l.b16 %v1905
    %v3040 = vunpack.c.h.b16 %v1905
    %v3041 = vunpack.c.l.b16 %v1906
    %v3042 = vunpack.c.h.b16 %v1906
    %v3043 = vunpack.c.l.b16 %v1907
    %v3044 = vunpack.c.h.b16 %v1907
    %v3045 = vunpack.c.l.b16 %v1908
    %v3046 = vunpack.c.h.b16 %v1908
    %v3047 = vunpack.c.l.b16 %v1909
    %v3048 = vunpack.c.h.b16 %v1909
    %v3049 = vunpack.c.l.b16 %v1910
    %v3050 = vunpack.c.h.b16 %v1910
    %v3051 = vunpack.c.l.b16 %v1911
    %v3052 = vunpack.c.h.b16 %v1911
    %v3053 = vunpack.c.l.b16 %v1912
    %v3054 = vunpack.c.h.b16 %v1912
    %v3055 = vunpack.c.l.b16 %v1913
    %v3056 = vunpack.c.h.b16 %v1913
    %v3057 = vunpack.c.l.b16 %v1914
    %v3058 = vunpack.c.h.b16 %v1914
    %v3059 = vunpack.c.l.b16 %v1915
    %v3060 = vunpack.c.h.b16 %v1915
    %v3061 = vunpack.c.l.b16 %v1916
    %v3062 = vunpack.c.h.b16 %v1916
    %v3063 = vunpack.c.l.b16 %v1917
    %v3064 = vunpack.c.h.b16 %v1917
    %v3065 = vunpack.c.l.b16 %v1918
    %v3066 = vunpack.c.h.b16 %v1918
    %v3067 = vunpack.c.l.b16 %v1919
    %v3068 = vunpack.c.h.b16 %v1919
    %v3069 = vunpack.c.l.b16 %v1920
    %v3070 = vunpack.c.h.b16 %v1920
    %v3071 = vunpack.c.l.b16 %v1921
    %v3072 = vunpack.c.h.b16 %v1921
    %v3073 = vunpack.c.l.b16 %v1922
    %v3074 = vunpack.c.h.b16 %v1922
    %v3075 = vunpack.c.l.b16 %v1923
    %v3076 = vunpack.c.h.b16 %v1923
    %v3077 = vunpack.c.l.b16 %v1924
    %v3078 = vunpack.c.h.b16 %v1924
    %v3079 = vunpack.c.l.b16 %v1925
    %v3080 = vunpack.c.h.b16 %v1925
    %v3081 = vunpack.c.l.b16 %v1926
    %v3082 = vunpack.c.h.b16 %v1926
    %v3083 = vunpack.c.l.b16 %v1927
    %v3084 = vunpack.c.h.b16 %v1927
    %v3085 = vunpack.c.l.b16 %v1928
    %v3086 = vunpack.c.h.b16 %v1928
    %v3087 = vunpack.c.l.b16 %v1929
    %v3088 = vunpack.c.h.b16 %v1929
    %v3089 = vunpack.c.l.b16 %v1930
    %v3090 = vunpack.c.h.b16 %v1930
    %v3091 = vunpack.c.l.b16 %v1931
    %v3092 = vunpack.c.h.b16 %v1931
    %v3093 = vunpack.c.l.b16 %v1932
    %v3094 = vunpack.c.h.b16 %v1932
    %v3095 = vunpack.c.l.b16 %v1933
    %v3096 = vunpack.c.h.b16 %v1933
    %v3097 = vunpack.c.l.b16 %v1934
    %v3098 = vunpack.c.h.b16 %v1934
    %v3099 = vunpack.c.l.b16 %v1935
    %v3100 = vunpack.c.h.b16 %v1935
    %v3101 = vunpack.c.l.b16 %v1936
    %v3102 = vunpack.c.h.b16 %v1936
    %v3103 = vunpack.c.l.b16 %v1937
    %v3104 = vunpack.c.h.b16 %v1937
    %v3105 = vunpack.c.l.b16 %v1938
    %v3106 = vunpack.c.h.b16 %v1938
    %v3107 = vunpack.c.l.b16 %v1939
    %v3108 = vunpack.c.h.b16 %v1939
    %v3109 = vunpack.c.l.b16 %v1940
    %v3110 = vunpack.c.h.b16 %v1940
    %v3111 = vunpack.c.l.b16 %v1941
    %v3112 = vunpack.c.h.b16 %v1941
    %v3113 = vunpack.c.l.b16 %v1942
    %v3114 = vunpack.c.h.b16 %v1942
    %v3115 = vunpack.c.l.b16 %v1943
    %v3116 = vunpack.c.h.b16 %v1943
    %v3117 = vunpack.c.l.b16 %v1944
    %v3118 = vunpack.c.h.b16 %v1944
    %v3119 = vpack.c.b16 %v2355, %v2351
    %v3120 = vpack.c.b16 %v2356, %v2352
    %v3121 = vpack.c.b16 %v2357, %v2353
    %v3122 = vpack.c.b16 %v2358, %v2354
    %v3123 = vpack.c.b16 %v2363, %v2359
    %v3124 = vpack.c.b16 %v2364, %v2360
    %v3125 = vpack.c.b16 %v2365, %v2361
    %v3126 = vpack.c.b16 %v2366, %v2362
    %v3127 = vpack.c.b16 %v2371, %v2367
    %v3128 = vpack.c.b16 %v2372, %v2368
    %v3129 = vpack.c.b16 %v2373, %v2369
    %v3130 = vpack.c.b16 %v2374, %v2370
    %v3131 = vpack.c.b16 %v2379, %v2375
    %v3132 = vpack.c.b16 %v2380, %v2376
    %v3133 = vpack.c.b16 %v2381, %v2377
    %v3134 = vpack.c.b16 %v2382, %v2378
    %v3135 = vpack.c.b16 %v2387, %v2383
    %v3136 = vpack.c.b16 %v2388, %v2384
    %v3137 = vpack.c.b16 %v2389, %v2385
    %v3138 = vpack.c.b16 %v2390, %v2386
    %v3139 = vpack.c.b16 %v2395, %v2391
    %v3140 = vpack.c.b16 %v2396, %v2392
    %v3141 = vpack.c.b16 %v2397, %v2393
    %v3142 = vpack.c.b16 %v2398, %v2394
    %v3143 = vpack.c.b16 %v2403, %v2399
    %v3144 = vpack.c.b16 %v2404, %v2400
    %v3145 = vpack.c.b16 %v2405, %v2401
    %v3146 = vpack.c.b16 %v2406, %v2402
    %v3147 = vpack.c.b16 %v2411, %v2407
    %v3148 = vpack.c.b16 %v2412, %v2408
    %v3149 = vpack.c.b16 %v2413, %v2409
    %v3150 = vpack.c.b16 %v2414, %v2410
    %v3151 = vpack.c.b16 %v2419, %v2415
    %v3152 = vpack.c.b16 %v2420, %v2416
    %v3153 = vpack.c.b16 %v2421, %v2417
    %v3154 = vpack.c.b16 %v2422, %v2418
    %v3155 = vpack.c.b16 %v2427, %v2423
    %v3156 = vpack.c.b16 %v2428, %v2424
    %v3157 = vpack.c.b16 %v2429, %v2425
    %v3158 = vpack.c.b16 %v2430, %v2426
    %v3159 = vpack.c.b16 %v2435, %v2431
    %v3160 = vpack.c.b16 %v2436, %v2432
    %v3161 = vpack.c.b16 %v2437, %v2433
    %v3162 = vpack.c.b16 %v2438, %v2434
    %v3163 = vpack.c.b16 %v2443, %v2439
    %v3164 = vpack.c.b16 %v2444, %v2440
    %v3165 = vpack.c.b16 %v2445, %v2441
    %v3166 = vpack.c.b16 %v2446, %v2442
    %v3167 = vpack.c.b16 %v2451, %v2447
    %v3168 = vpack.c.b16 %v2452, %v2448
    %v3169 = vpack.c.b16 %v2453, %v2449
    %v3170 = vpack.c.b16 %v2454, %v2450
    %v3171 = vpack.c.b16 %v2459, %v2455
    %v3172 = vpack.c.b16 %v2460, %v2456
    %v3173 = vpack.c.b16 %v2461, %v2457
    %v3174 = vpack.c.b16 %v2462, %v2458
    %v3175 = vpack.c.b16 %v2467, %v2463
    %v3176 = vpack.c.b16 %v2468, %v2464
    %v3177 = vpack.c.b16 %v2469, %v2465
    %v3178 = vpack.c.b16 %v2470, %v2466
    %v3179 = vpack.c.b16 %v2475, %v2471
    %v3180 = vpack.c.b16 %v2476, %v2472
    %v3181 = vpack.c.b16 %v2477, %v2473
    %v3182 = vpack.c.b16 %v2478, %v2474
    %v3183 = vpack.c.b16 %v2483, %v2479
    %v3184 = vpack.c.b16 %v2484, %v2480
    %v3185 = vpack.c.b16 %v2485, %v2481
    %v3186 = vpack.c.b16 %v2486, %v2482
    %v3187 = vpack.c.b16 %v2491, %v2487
    %v3188 = vpack.c.b16 %v2492, %v2488
    %v3189 = vpack.c.b16 %v2493, %v2489
    %v3190 = vpack.c.b16 %v2494, %v2490
    %v3191 = vpack.c.b16 %v2499, %v2495
    %v3192 = vpack.c.b16 %v2500, %v2496
    %v3193 = vpack.c.b16 %v2501, %v2497
    %v3194 = vpack.c.b16 %v2502, %v2498
    %v3195 = vpack.c.b16 %v2507, %v2503
    %v3196 = vpack.c.b16 %v2508, %v2504
    %v3197 = vpack.c.b16 %v2509, %v2505
    %v3198 = vpack.c.b16 %v2510, %v2506
    %v3199 = vpack.c.b16 %v2515, %v2511
    %v3200 = vpack.c.b16 %v2516, %v2512
    %v3201 = vpack.c.b16 %v2517, %v2513
    %v3202 = vpack.c.b16 %v2518, %v2514
    %v3203 = vpack.c.b16 %v2523, %v2519
    %v3204 = vpack.c.b16 %v2524, %v2520
    %v3205 = vpack.c.b16 %v2525, %v2521
    %v3206 = vpack.c.b16 %v2526, %v2522
    %v3207 = vpack.c.b16 %v2531, %v2527
    %v3208 = vpack.c.b16 %v2532, %v2528
    %v3209 = vpack.c.b16 %v2533, %v2529
    %v3210 = vpack.c.b16 %v2534, %v2530
    %v3211 = vpack.c.b16 %v2539, %v2535
    %v3212 = vpack.c.b16 %v2540, %v2536
    %v3213 = vpack.c.b16 %v2541, %v2537
    %v3214 = vpack.c.b16 %v2542, %v2538
    %v3215 = vpack.c.b16 %v2547, %v2543
    %v3216 = vpack.c.b16 %v2548, %v2544
    %v3217 = vpack.c.b16 %v2549, %v2545
    %v3218 = vpack.c.b16 %v2550, %v2546
    %v3219 = vpack.c.b16 %v2555, %v2551
    %v3220 = vpack.c.b16 %v2556, %v2552
    %v3221 = vpack.c.b16 %v2557, %v2553
    %v3222 = vpack.c.b16 %v2558, %v2554
    %v3223 = vpack.c.b16 %v2563, %v2559
    %v3224 = vpack.c.b16 %v2564, %v2560
    %v3225 = vpack.c.b16 %v2565, %v2561
    %v3226 = vpack.c.b16 %v2566, %v2562
    %v3227 = vpack.c.b16 %v2571, %v2567
    %v3228 = vpack.c.b16 %v2572, %v2568
    %v3229 = vpack.c.b16 %v2573, %v2569
    %v3230 = vpack.c.b16 %v2574, %v2570
    %v3231 = vpack.c.b16 %v2579, %v2575
    %v3232 = vpack.c.b16 %v2580, %v2576
    %v3233 = vpack.c.b16 %v2581, %v2577
    %v3234 = vpack.c.b16 %v2582, %v2578
    %v3235 = vpack.c.b16 %v2587, %v2583
    %v3236 = vpack.c.b16 %v2588, %v2584
    %v3237 = vpack.c.b16 %v2589, %v2585
    %v3238 = vpack.c.b16 %v2590, %v2586
    %v3239 = vpack.c.b16 %v2595, %v2591
    %v3240 = vpack.c.b16 %v2596, %v2592
    %v3241 = vpack.c.b16 %v2597, %v2593
    %v3242 = vpack.c.b16 %v2598, %v2594
    %v3243 = vpack.c.b16 %v2603, %v2599
    %v3244 = vpack.c.b16 %v2604, %v2600
    %v3245 = vpack.c.b16 %v2605, %v2601
    %v3246 = vpack.c.b16 %v2606, %v2602
    %v3247 = vpack.c.b16 %v2611, %v2607
    %v3248 = vpack.c.b16 %v2612, %v2608
    %v3249 = vpack.c.b16 %v2613, %v2609
    %v3250 = vpack.c.b16 %v2614, %v2610
    %v3251 = vpack.c.b16 %v2619, %v2615
    %v3252 = vpack.c.b16 %v2620, %v2616
    %v3253 = vpack.c.b16 %v2621, %v2617
    %v3254 = vpack.c.b16 %v2622, %v2618
    %v3255 = vpack.c.b16 %v2627, %v2623
    %v3256 = vpack.c.b16 %v2628, %v2624
    %v3257 = vpack.c.b16 %v2629, %v2625
    %v3258 = vpack.c.b16 %v2630, %v2626
    %v3259 = vpack.c.b16 %v2635, %v2631
    %v3260 = vpack.c.b16 %v2636, %v2632
    %v3261 = vpack.c.b16 %v2637, %v2633
    %v3262 = vpack.c.b16 %v2638, %v2634
    %v3263 = vpack.c.b16 %v2643, %v2639
    %v3264 = vpack.c.b16 %v2644, %v2640
    %v3265 = vpack.c.b16 %v2645, %v2641
    %v3266 = vpack.c.b16 %v2646, %v2642
    %v3267 = vpack.c.b16 %v2651, %v2647
    %v3268 = vpack.c.b16 %v2652, %v2648
    %v3269 = vpack.c.b16 %v2653, %v2649
    %v3270 = vpack.c.b16 %v2654, %v2650
    %v3271 = vpack.c.b16 %v2659, %v2655
    %v3272 = vpack.c.b16 %v2660, %v2656
    %v3273 = vpack.c.b16 %v2661, %v2657
    %v3274 = vpack.c.b16 %v2662, %v2658
    %v3275 = vpack.c.b16 %v2667, %v2663
    %v3276 = vpack.c.b16 %v2668, %v2664
    %v3277 = vpack.c.b16 %v2669, %v2665
    %v3278 = vpack.c.b16 %v2670, %v2666
    %v3279 = vpack.c.b16 %v2675, %v2671
    %v3280 = vpack.c.b16 %v2676, %v2672
    %v3281 = vpack.c.b16 %v2677, %v2673
    %v3282 = vpack.c.b16 %v2678, %v2674
    %v3283 = vpack.c.b16 %v2683, %v2679
    %v3284 = vpack.c.b16 %v2684, %v2680
    %v3285 = vpack.c.b16 %v2685, %v2681
    %v3286 = vpack.c.b16 %v2686, %v2682
    %v3287 = vpack.c.b16 %v2691, %v2687
    %v3288 = vpack.c.b16 %v2692, %v2688
    %v3289 = vpack.c.b16 %v2693, %v2689
    %v3290 = vpack.c.b16 %v2694, %v2690
    %v3291 = vpack.c.b16 %v2699, %v2695
    %v3292 = vpack.c.b16 %v2700, %v2696
    %v3293 = vpack.c.b16 %v2701, %v2697
    %v3294 = vpack.c.b16 %v2702, %v2698
    %v3295 = vpack.c.b16 %v2707, %v2703
    %v3296 = vpack.c.b16 %v2708, %v2704
    %v3297 = vpack.c.b16 %v2709, %v2705
    %v3298 = vpack.c.b16 %v2710, %v2706
    %v3299 = vpack.c.b16 %v2715, %v2711
    %v3300 = vpack.c.b16 %v2716, %v2712
    %v3301 = vpack.c.b16 %v2717, %v2713
    %v3302 = vpack.c.b16 %v2718, %v2714
    %v3303 = vpack.c.b16 %v2723, %v2719
    %v3304 = vpack.c.b16 %v2724, %v2720
    %v3305 = vpack.c.b16 %v2725, %v2721
    %v3306 = vpack.c.b16 %v2726, %v2722
    %v3307 = vpack.c.b16 %v2731, %v2727
    %v3308 = vpack.c.b16 %v2732, %v2728
    %v3309 = vpack.c.b16 %v2733, %v2729
    %v3310 = vpack.c.b16 %v2734, %v2730
    %v3311 = vpack.c.b16 %v2739, %v2735
    %v3312 = vpack.c.b16 %v2740, %v2736
    %v3313 = vpack.c.b16 %v2741, %v2737
    %v3314 = vpack.c.b16 %v2742, %v2738
    %v3315 = vpack.c.b16 %v2747, %v2743
    %v3316 = vpack.c.b16 %v2748, %v2744
    %v3317 = vpack.c.b16 %v2749, %v2745
    %v3318 = vpack.c.b16 %v2750, %v2746
    %v3319 = vpack.c.b16 %v2755, %v2751
    %v3320 = vpack.c.b16 %v2756, %v2752
    %v3321 = vpack.c.b16 %v2757, %v2753
    %v3322 = vpack.c.b16 %v2758, %v2754
    %v3323 = vpack.c.b16 %v2763, %v2759
    %v3324 = vpack.c.b16 %v2764, %v2760
    %v3325 = vpack.c.b16 %v2765, %v2761
    %v3326 = vpack.c.b16 %v2766, %v2762
    %v3327 = vpack.c.b16 %v2771, %v2767
    %v3328 = vpack.c.b16 %v2772, %v2768
    %v3329 = vpack.c.b16 %v2773, %v2769
    %v3330 = vpack.c.b16 %v2774, %v2770
    %v3331 = vpack.c.b16 %v2779, %v2775
    %v3332 = vpack.c.b16 %v2780, %v2776
    %v3333 = vpack.c.b16 %v2781, %v2777
    %v3334 = vpack.c.b16 %v2782, %v2778
    %v3335 = vpack.c.b16 %v2787, %v2783
    %v3336 = vpack.c.b16 %v2788, %v2784
    %v3337 = vpack.c.b16 %v2789, %v2785
    %v3338 = vpack.c.b16 %v2790, %v2786
    %v3339 = vpack.c.b16 %v2795, %v2791
    %v3340 = vpack.c.b16 %v2796, %v2792
    %v3341 = vpack.c.b16 %v2797, %v2793
    %v3342 = vpack.c.b16 %v2798, %v2794
    %v3343 = vpack.c.b16 %v2803, %v2799
    %v3344 = vpack.c.b16 %v2804, %v2800
    %v3345 = vpack.c.b16 %v2805, %v2801
    %v3346 = vpack.c.b16 %v2806, %v2802
    %v3347 = vpack.c.b16 %v2811, %v2807
    %v3348 = vpack.c.b16 %v2812, %v2808
    %v3349 = vpack.c.b16 %v2813, %v2809
    %v3350 = vpack.c.b16 %v2814, %v2810
    %v3351 = vpack.c.b16 %v2819, %v2815
    %v3352 = vpack.c.b16 %v2820, %v2816
    %v3353 = vpack.c.b16 %v2821, %v2817
    %v3354 = vpack.c.b16 %v2822, %v2818
    %v3355 = vpack.c.b16 %v2827, %v2823
    %v3356 = vpack.c.b16 %v2828, %v2824
    %v3357 = vpack.c.b16 %v2829, %v2825
    %v3358 = vpack.c.b16 %v2830, %v2826
    %v3359 = vpack.c.b16 %v2835, %v2831
    %v3360 = vpack.c.b16 %v2836, %v2832
    %v3361 = vpack.c.b16 %v2837, %v2833
    %v3362 = vpack.c.b16 %v2838, %v2834
    %v3363 = vpack.c.b16 %v2843, %v2839
    %v3364 = vpack.c.b16 %v2844, %v2840
    %v3365 = vpack.c.b16 %v2845, %v2841
    %v3366 = vpack.c.b16 %v2846, %v2842
    %v3367 = vpack.c.b16 %v2851, %v2847
    %v3368 = vpack.c.b16 %v2852, %v2848
    %v3369 = vpack.c.b16 %v2853, %v2849
    %v3370 = vpack.c.b16 %v2854, %v2850
    %v3371 = vpack.c.b16 %v2859, %v2855
    %v3372 = vpack.c.b16 %v2860, %v2856
    %v3373 = vpack.c.b16 %v2861, %v2857
    %v3374 = vpack.c.b16 %v2862, %v2858
    %v3375 = vpack.c.b16 %v2867, %v2863
    %v3376 = vpack.c.b16 %v2868, %v2864
    %v3377 = vpack.c.b16 %v2869, %v2865
    %v3378 = vpack.c.b16 %v2870, %v2866
    %v3379 = vpack.c.b16 %v2875, %v2871
    %v3380 = vpack.c.b16 %v2876, %v2872
    %v3381 = vpack.c.b16 %v2877, %v2873
    %v3382 = vpack.c.b16 %v2878, %v2874
    %v3383 = vpack.c.b16 %v2883, %v2879
    %v3384 = vpack.c.b16 %v2884, %v2880
    %v3385 = vpack.c.b16 %v2885, %v2881
    %v3386 = vpack.c.b16 %v2886, %v2882
    %v3387 = vpack.c.b16 %v2891, %v2887
    %v3388 = vpack.c.b16 %v2892, %v2888
    %v3389 = vpack.c.b16 %v2893, %v2889
    %v3390 = vpack.c.b16 %v2894, %v2890
    %v3391 = vpack.c.b16 %v2899, %v2895
    %v3392 = vpack.c.b16 %v2900, %v2896
    %v3393 = vpack.c.b16 %v2901, %v2897
    %v3394 = vpack.c.b16 %v2902, %v2898
    %v3395 = vpack.c.b16 %v2907, %v2903
    %v3396 = vpack.c.b16 %v2908, %v2904
    %v3397 = vpack.c.b16 %v2909, %v2905
    %v3398 = vpack.c.b16 %v2910, %v2906
    %v3399 = vpack.c.b16 %v2915, %v2911
    %v3400 = vpack.c.b16 %v2916, %v2912
    %v3401 = vpack.c.b16 %v2917, %v2913
    %v3402 = vpack.c.b16 %v2918, %v2914
    %v3403 = vpack.c.b16 %v2923, %v2919
    %v3404 = vpack.c.b16 %v2924, %v2920
    %v3405 = vpack.c.b16 %v2925, %v2921
    %v3406 = vpack.c.b16 %v2926, %v2922
    %v3407 = vpack.c.b16 %v2931, %v2927
    %v3408 = vpack.c.b16 %v2932, %v2928
    %v3409 = vpack.c.b16 %v2933, %v2929
    %v3410 = vpack.c.b16 %v2934, %v2930
    %v3411 = vpack.c.b16 %v2939, %v2935
    %v3412 = vpack.c.b16 %v2940, %v2936
    %v3413 = vpack.c.b16 %v2941, %v2937
    %v3414 = vpack.c.b16 %v2942, %v2938
    %v3415 = vpack.c.b16 %v2947, %v2943
    %v3416 = vpack.c.b16 %v2948, %v2944
    %v3417 = vpack.c.b16 %v2949, %v2945
    %v3418 = vpack.c.b16 %v2950, %v2946
    %v3419 = vpack.c.b16 %v2955, %v2951
    %v3420 = vpack.c.b16 %v2956, %v2952
    %v3421 = vpack.c.b16 %v2957, %v2953
    %v3422 = vpack.c.b16 %v2958, %v2954
    %v3423 = vpack.c.b16 %v2963, %v2959
    %v3424 = vpack.c.b16 %v2964, %v2960
    %v3425 = vpack.c.b16 %v2965, %v2961
    %v3426 = vpack.c.b16 %v2966, %v2962
    %v3427 = vpack.c.b16 %v2971, %v2967
    %v3428 = vpack.c.b16 %v2972, %v2968
    %v3429 = vpack.c.b16 %v2973, %v2969
    %v3430 = vpack.c.b16 %v2974, %v2970
    %v3431 = vpack.c.b16 %v2979, %v2975
    %v3432 = vpack.c.b16 %v2980, %v2976
    %v3433 = vpack.c.b16 %v2981, %v2977
    %v3434 = vpack.c.b16 %v2982, %v2978
    %v3435 = vpack.c.b16 %v2987, %v2983
    %v3436 = vpack.c.b16 %v2988, %v2984
    %v3437 = vpack.c.b16 %v2989, %v2985
    %v3438 = vpack.c.b16 %v2990, %v2986
    %v3439 = vpack.c.b16 %v2995, %v2991
    %v3440 = vpack.c.b16 %v2996, %v2992
    %v3441 = vpack.c.b16 %v2997, %v2993
    %v3442 = vpack.c.b16 %v2998, %v2994
    %v3443 = vpack.c.b16 %v3003, %v2999
    %v3444 = vpack.c.b16 %v3004, %v3000
    %v3445 = vpack.c.b16 %v3005, %v3001
    %v3446 = vpack.c.b16 %v3006, %v3002
    %v3447 = vpack.c.b16 %v3011, %v3007
    %v3448 = vpack.c.b16 %v3012, %v3008
    %v3449 = vpack.c.b16 %v3013, %v3009
    %v3450 = vpack.c.b16 %v3014, %v3010
    %v3451 = vpack.c.b16 %v3019, %v3015
    %v3452 = vpack.c.b16 %v3020, %v3016
    %v3453 = vpack.c.b16 %v3021, %v3017
    %v3454 = vpack.c.b16 %v3022, %v3018
    %v3455 = vpack.c.b16 %v3027, %v3023
    %v3456 = vpack.c.b16 %v3028, %v3024
    %v3457 = vpack.c.b16 %v3029, %v3025
    %v3458 = vpack.c.b16 %v3030, %v3026
    %v3459 = vpack.c.b16 %v3035, %v3031
    %v3460 = vpack.c.b16 %v3036, %v3032
    %v3461 = vpack.c.b16 %v3037, %v3033
    %v3462 = vpack.c.b16 %v3038, %v3034
    %v3463 = vpack.c.b16 %v3043, %v3039
    %v3464 = vpack.c.b16 %v3044, %v3040
    %v3465 = vpack.c.b16 %v3045, %v3041
    %v3466 = vpack.c.b16 %v3046, %v3042
    %v3467 = vpack.c.b16 %v3051, %v3047
    %v3468 = vpack.c.b16 %v3052, %v3048
    %v3469 = vpack.c.b16 %v3053, %v3049
    %v3470 = vpack.c.b16 %v3054, %v3050
    %v3471 = vpack.c.b16 %v3059, %v3055
    %v3472 = vpack.c.b16 %v3060, %v3056
    %v3473 = vpack.c.b16 %v3061, %v3057
    %v3474 = vpack.c.b16 %v3062, %v3058
    %v3475 = vpack.c.b16 %v3067, %v3063
    %v3476 = vpack.c.b16 %v3068, %v3064
    %v3477 = vpack.c.b16 %v3069, %v3065
    %v3478 = vpack.c.b16 %v3070, %v3066
    %v3479 = vpack.c.b16 %v3075, %v3071
    %v3480 = vpack.c.b16 %v3076, %v3072
    %v3481 = vpack.c.b16 %v3077, %v3073
    %v3482 = vpack.c.b16 %v3078, %v3074
    %v3483 = vpack.c.b16 %v3083, %v3079
    %v3484 = vpack.c.b16 %v3084, %v3080
    %v3485 = vpack.c.b16 %v3085, %v3081
    %v3486 = vpack.c.b16 %v3086, %v3082
    %v3487 = vpack.c.b16 %v3091, %v3087
    %v3488 = vpack.c.b16 %v3092, %v3088
    %v3489 = vpack.c.b16 %v3093, %v3089
    %v3490 = vpack.c.b16 %v3094, %v3090
    %v3491 = vpack.c.b16 %v3099, %v3095
    %v3492 = vpack.c.b16 %v3100, %v3096
    %v3493 = vpack.c.b16 %v3101, %v3097
    %v3494 = vpack.c.b16 %v3102, %v3098
    %v3495 = vpack.c.b16 %v3107, %v3103
    %v3496 = vpack.c.b16 %v3108, %v3104
    %v3497 = vpack.c.b16 %v3109, %v3105
    %v3498 = vpack.c.b16 %v3110, %v3106
    %v3499 = vpack.c.b16 %v3115, %v3111
    %v3500 = vpack.c.b16 %v3116, %v3112
    %v3501 = vpack.c.b16 %v3117, %v3113
    %v3502 = vpack.c.b16 %v3118, %v3114
    %3887 = vmatprep.subr.bf16.mxu0 %v3120
    %3888 = vmatpush1.bf16.msra.mxu0 %v3119
    %3889 = vmatprep.subr.bf16.mxu0 %v3124
    %3890 = vmatpush1.bf16.msra.mxu0 %v3123
    %3891 = vmatprep.subr.bf16.mxu0 %v3128
    %3892 = vmatpush1.bf16.msra.mxu0 %v3127
    %3893 = vmatprep.subr.bf16.mxu0 %v3132
    %3894 = vmatpush1.bf16.msra.mxu0 %v3131
    %3895 = vmatprep.subr.bf16.mxu0 %v3136
    %3896 = vmatpush1.bf16.msra.mxu0 %v3135
    %3897 = vmatprep.subr.bf16.mxu0 %v3140
    %3898 = vmatpush1.bf16.msra.mxu0 %v3139
    %3899 = vmatprep.subr.bf16.mxu0 %v3144
    %3900 = vmatpush1.bf16.msra.mxu0 %v3143
    %3901 = vmatprep.subr.bf16.mxu0 %v3148
    %3902 = vmatpush1.bf16.msra.mxu0 %v3147
    %3903 = vmatprep.subr.bf16.mxu0 %v3152
    %3904 = vmatpush1.bf16.msra.mxu0 %v3151
    %3905 = vmatprep.subr.bf16.mxu0 %v3156
    %3906 = vmatpush1.bf16.msra.mxu0 %v3155
    %3907 = vmatprep.subr.bf16.mxu0 %v3160
    %3908 = vmatpush1.bf16.msra.mxu0 %v3159
    %3909 = vmatprep.subr.bf16.mxu0 %v3164
    %3910 = vmatpush1.bf16.msra.mxu0 %v3163
    %3911 = vmatprep.subr.bf16.mxu0 %v3168
    %3912 = vmatpush1.bf16.msra.mxu0 %v3167
    %3913 = vmatprep.subr.bf16.mxu0 %v3172
    %3914 = vmatpush1.bf16.msra.mxu0 %v3171
    %3915 = vmatprep.subr.bf16.mxu0 %v3176
    %3916 = vmatpush1.bf16.msra.mxu0 %v3175
    %3917 = vmatprep.subr.bf16.mxu0 %v3180
    %3918 = vmatpush1.bf16.msra.mxu0 %v3179
    %3919 = vmatprep.mubr.bf16.mxu0 %v1538
    %3920 = vmatmul.mubr.bf16.gmra.mrb[0].mxu0 %v1537
    %v3921 = vpop.f32.mrb[0].mxu0
    %v3922 = vadd.f32 %v1950, %v3921
    %v3923 = vpop.f32.mrb[0].mxu0
    %v3924 = vadd.f32 %v1954, %v3923
    %v3925 = vpop.f32.mrb[0].mxu0
    %v3926 = vadd.f32 %v1950, %v3925
    %v3927 = vpop.f32.mrb[0].mxu0
    %v3928 = vadd.f32 %v1954, %v3927
    %3929 = vmatprep.mubr.bf16.mxu0 %v1550
    %3930 = vmatmul.mubr.bf16.gmra.mrb[0].mxu0 %v1549
    %v3931 = vpop.f32.mrb[0].mxu0
    %v3932 = vadd.f32 %v1950, %v3931
    %v3933 = vpop.f32.mrb[0].mxu0
    %v3934 = vadd.f32 %v1954, %v3933
    %v3935 = vpop.f32.mrb[0].mxu0
    %v3936 = vadd.f32 %v1950, %v3935
    %v3937 = vpop.f32.mrb[0].mxu0
    %v3938 = vadd.f32 %v1954, %v3937
    %3939 = vdwg.mxu0
    %3940 = vmatprep.subr.bf16.mxu0 %v3184
    %3941 = vmatpush1.bf16.msra.mxu0 %v3183
    %3942 = vmatprep.subr.bf16.mxu0 %v3188
    %3943 = vmatpush1.bf16.msra.mxu0 %v3187
    %3944 = vmatprep.subr.bf16.mxu0 %v3192
    %3945 = vmatpush1.bf16.msra.mxu0 %v3191
    %3946 = vmatprep.subr.bf16.mxu0 %v3196
    %3947 = vmatpush1.bf16.msra.mxu0 %v3195
    %3948 = vmatprep.subr.bf16.mxu0 %v3200
    %3949 = vmatpush1.bf16.msra.mxu0 %v3199
    %3950 = vmatprep.subr.bf16.mxu0 %v3204
    %3951 = vmatpush1.bf16.msra.mxu0 %v3203
    %3952 = vmatprep.subr.bf16.mxu0 %v3208
    %3953 = vmatpush1.bf16.msra.mxu0 %v3207
    %3954 = vmatprep.subr.bf16.mxu0 %v3212
    %3955 = vmatpush1.bf16.msra.mxu0 %v3211
    %3956 = vmatprep.subr.bf16.mxu0 %v3216
    %3957 = vmatpush1.bf16.msra.mxu0 %v3215
    %3958 = vmatprep.subr.bf16.mxu0 %v3220
    %3959 = vmatpush1.bf16.msra.mxu0 %v3219
    %3960 = vmatprep.subr.bf16.mxu0 %v3224
    %3961 = vmatpush1.bf16.msra.mxu0 %v3223
    %3962 = vmatprep.subr.bf16.mxu0 %v3228
    %3963 = vmatpush1.bf16.msra.mxu0 %v3227
    %3964 = vmatprep.subr.bf16.mxu0 %v3232
    %3965 = vmatpush1.bf16.msra.mxu0 %v3231
    %3966 = vmatprep.subr.bf16.mxu0 %v3236
    %3967 = vmatpush1.bf16.msra.mxu0 %v3235
    %3968 = vmatprep.subr.bf16.mxu0 %v3240
    %3969 = vmatpush1.bf16.msra.mxu0 %v3239
    %3970 = vmatprep.subr.bf16.mxu0 %v3244
    %3971 = vmatpush1.bf16.msra.mxu0 %v3243
    %3972 = vmatprep.mubr.bf16.mxu0 %v1540
    %3973 = vmatmul.mubr.bf16.gmra.mrb[0].mxu0 %v1539
    %v3974 = vpop.f32.mrb[0].mxu0
    %v3975 = vadd.f32 %v3922, %v3974
    %v3976 = vpop.f32.mrb[0].mxu0
    %v3977 = vadd.f32 %v3924, %v3976
    %v3978 = vpop.f32.mrb[0].mxu0
    %v3979 = vadd.f32 %v3926, %v3978
    %v3980 = vpop.f32.mrb[0].mxu0
    %v3981 = vadd.f32 %v3928, %v3980
    %3982 = vmatprep.mubr.bf16.mxu0 %v1552
    %3983 = vmatmul.mubr.bf16.gmra.mrb[0].mxu0 %v1551
    %v3984 = vpop.f32.mrb[0].mxu0
    %v3985 = vadd.f32 %v3932, %v3984
    %v3986 = vpop.f32.mrb[0].mxu0
    %v3987 = vadd.f32 %v3934, %v3986
    %v3988 = vpop.f32.mrb[0].mxu0
    %v3989 = vadd.f32 %v3936, %v3988
    %v3990 = vpop.f32.mrb[0].mxu0
    %v3991 = vadd.f32 %v3938, %v3990
    %3992 = vdwg.mxu0
    %3993 = vmatprep.subr.bf16.mxu0 %v3248
    %3994 = vmatpush1.bf16.msra.mxu0 %v3247
    %3995 = vmatprep.subr.bf16.mxu0 %v3252
    %3996 = vmatpush1.bf16.msra.mxu0 %v3251
    %3997 = vmatprep.subr.bf16.mxu0 %v3256
    %3998 = vmatpush1.bf16.msra.mxu0 %v3255
    %3999 = vmatprep.subr.bf16.mxu0 %v3260
    %4000 = vmatpush1.bf16.msra.mxu0 %v3259
    %4001 = vmatprep.subr.bf16.mxu0 %v3264
    %4002 = vmatpush1.bf16.msra.mxu0 %v3263
    %4003 = vmatprep.subr.bf16.mxu0 %v3268
    %4004 = vmatpush1.bf16.msra.mxu0 %v3267
    %4005 = vmatprep.subr.bf16.mxu0 %v3272
    %4006 = vmatpush1.bf16.msra.mxu0 %v3271
    %4007 = vmatprep.subr.bf16.mxu0 %v3276
    %4008 = vmatpush1.bf16.msra.mxu0 %v3275
    %4009 = vmatprep.subr.bf16.mxu0 %v3280
    %4010 = vmatpush1.bf16.msra.mxu0 %v3279
    %4011 = vmatprep.subr.bf16.mxu0 %v3284
    %4012 = vmatpush1.bf16.msra.mxu0 %v3283
    %4013 = vmatprep.subr.bf16.mxu0 %v3288
    %4014 = vmatpush1.bf16.msra.mxu0 %v3287
    %4015 = vmatprep.subr.bf16.mxu0 %v3292
    %4016 = vmatpush1.bf16.msra.mxu0 %v3291
    %4017 = vmatprep.subr.bf16.mxu0 %v3296
    %4018 = vmatpush1.bf16.msra.mxu0 %v3295
    %4019 = vmatprep.subr.bf16.mxu0 %v3300
    %4020 = vmatpush1.bf16.msra.mxu0 %v3299
    %4021 = vmatprep.subr.bf16.mxu0 %v3304
    %4022 = vmatpush1.bf16.msra.mxu0 %v3303
    %4023 = vmatprep.subr.bf16.mxu0 %v3308
    %4024 = vmatpush1.bf16.msra.mxu0 %v3307
    %4025 = vmatprep.mubr.bf16.mxu0 %v1542
    %4026 = vmatmul.mubr.bf16.gmra.mrb[0].mxu0 %v1541
    %v4027 = vpop.f32.mrb[0].mxu0
    %v4028 = vadd.f32 %v3975, %v4027
    %v4029 = vpop.f32.mrb[0].mxu0
    %v4030 = vadd.f32 %v3977, %v4029
    %v4031 = vpop.f32.mrb[0].mxu0
    %v4032 = vadd.f32 %v3979, %v4031
    %v4033 = vpop.f32.mrb[0].mxu0
    %v4034 = vadd.f32 %v3981, %v4033
    %4035 = vmatprep.mubr.bf16.mxu0 %v1554
    %4036 = vmatmul.mubr.bf16.gmra.mrb[0].mxu0 %v1553
    %v4037 = vpop.f32.mrb[0].mxu0
    %v4038 = vadd.f32 %v3985, %v4037
    %v4039 = vpop.f32.mrb[0].mxu0
    %v4040 = vadd.f32 %v3987, %v4039
    %v4041 = vpop.f32.mrb[0].mxu0
    %v4042 = vadd.f32 %v3989, %v4041
    %v4043 = vpop.f32.mrb[0].mxu0
    %v4044 = vadd.f32 %v3991, %v4043
    %4045 = vdwg.mxu0
    %4046 = vmatprep.subr.bf16.mxu0 %v3312
    %4047 = vmatpush1.bf16.msra.mxu0 %v3311
    %4048 = vmatprep.subr.bf16.mxu0 %v3316
    %4049 = vmatpush1.bf16.msra.mxu0 %v3315
    %4050 = vmatprep.subr.bf16.mxu0 %v3320
    %4051 = vmatpush1.bf16.msra.mxu0 %v3319
    %4052 = vmatprep.subr.bf16.mxu0 %v3324
    %4053 = vmatpush1.bf16.msra.mxu0 %v3323
    %4054 = vmatprep.subr.bf16.mxu0 %v3328
    %4055 = vmatpush1.bf16.msra.mxu0 %v3327
    %4056 = vmatprep.subr.bf16.mxu0 %v3332
    %4057 = vmatpush1.bf16.msra.mxu0 %v3331
    %4058 = vmatprep.subr.bf16.mxu0 %v3336
    %4059 = vmatpush1.bf16.msra.mxu0 %v3335
    %4060 = vmatprep.subr.bf16.mxu0 %v3340
    %4061 = vmatpush1.bf16.msra.mxu0 %v3339
    %4062 = vmatprep.subr.bf16.mxu0 %v3344
    %4063 = vmatpush1.bf16.msra.mxu0 %v3343
    %4064 = vmatprep.subr.bf16.mxu0 %v3348
    %4065 = vmatpush1.bf16.msra.mxu0 %v3347
    %4066 = vmatprep.subr.bf16.mxu0 %v3352
    %4067 = vmatpush1.bf16.msra.mxu0 %v3351
    %4068 = vmatprep.subr.bf16.mxu0 %v3356
    %4069 = vmatpush1.bf16.msra.mxu0 %v3355
    %4070 = vmatprep.subr.bf16.mxu0 %v3360
    %4071 = vmatpush1.bf16.msra.mxu0 %v3359
    %4072 = vmatprep.subr.bf16.mxu0 %v3364
    %4073 = vmatpush1.bf16.msra.mxu0 %v3363
    %4074 = vmatprep.subr.bf16.mxu0 %v3368
    %4075 = vmatpush1.bf16.msra.mxu0 %v3367
    %4076 = vmatprep.subr.bf16.mxu0 %v3372
    %4077 = vmatpush1.bf16.msra.mxu0 %v3371
    %4078 = vmatprep.mubr.bf16.mxu0 %v1544
    %4079 = vmatmul.mubr.bf16.gmra.mrb[0].mxu0 %v1543
    %v4080 = vpop.f32.mrb[0].mxu0
    %v4081 = vadd.f32 %v4028, %v4080
    %v4082 = vpop.f32.mrb[0].mxu0
    %v4083 = vadd.f32 %v4030, %v4082
    %v4084 = vpop.f32.mrb[0].mxu0
    %v4085 = vadd.f32 %v4032, %v4084
    %v4086 = vpop.f32.mrb[0].mxu0
    %v4087 = vadd.f32 %v4034, %v4086
    %4088 = vmatprep.mubr.bf16.mxu0 %v1556
    %4089 = vmatmul.mubr.bf16.gmra.mrb[0].mxu0 %v1555
    %v4090 = vpop.f32.mrb[0].mxu0
    %v4091 = vadd.f32 %v4038, %v4090
    %v4092 = vpop.f32.mrb[0].mxu0
    %v4093 = vadd.f32 %v4040, %v4092
    %v4094 = vpop.f32.mrb[0].mxu0
    %v4095 = vadd.f32 %v4042, %v4094
    %v4096 = vpop.f32.mrb[0].mxu0
    %v4097 = vadd.f32 %v4044, %v4096
    %4098 = vdwg.mxu0
    %4099 = vmatprep.subr.bf16.mxu0 %v3376
    %4100 = vmatpush1.bf16.msra.mxu0 %v3375
    %4101 = vmatprep.subr.bf16.mxu0 %v3380
    %4102 = vmatpush1.bf16.msra.mxu0 %v3379
    %4103 = vmatprep.subr.bf16.mxu0 %v3384
    %4104 = vmatpush1.bf16.msra.mxu0 %v3383
    %4105 = vmatprep.subr.bf16.mxu0 %v3388
    %4106 = vmatpush1.bf16.msra.mxu0 %v3387
    %4107 = vmatprep.subr.bf16.mxu0 %v3392
    %4108 = vmatpush1.bf16.msra.mxu0 %v3391
    %4109 = vmatprep.subr.bf16.mxu0 %v3396
    %4110 = vmatpush1.bf16.msra.mxu0 %v3395
    %4111 = vmatprep.subr.bf16.mxu0 %v3400
    %4112 = vmatpush1.bf16.msra.mxu0 %v3399
    %4113 = vmatprep.subr.bf16.mxu0 %v3404
    %4114 = vmatpush1.bf16.msra.mxu0 %v3403
    %4115 = vmatprep.subr.bf16.mxu0 %v3408
    %4116 = vmatpush1.bf16.msra.mxu0 %v3407
    %4117 = vmatprep.subr.bf16.mxu0 %v3412
    %4118 = vmatpush1.bf16.msra.mxu0 %v3411
    %4119 = vmatprep.subr.bf16.mxu0 %v3416
    %4120 = vmatpush1.bf16.msra.mxu0 %v3415
    %4121 = vmatprep.subr.bf16.mxu0 %v3420
    %4122 = vmatpush1.bf16.msra.mxu0 %v3419
    %4123 = vmatprep.subr.bf16.mxu0 %v3424
    %4124 = vmatpush1.bf16.msra.mxu0 %v3423
    %4125 = vmatprep.subr.bf16.mxu0 %v3428
    %4126 = vmatpush1.bf16.msra.mxu0 %v3427
    %4127 = vmatprep.subr.bf16.mxu0 %v3432
    %4128 = vmatpush1.bf16.msra.mxu0 %v3431
    %4129 = vmatprep.subr.bf16.mxu0 %v3436
    %4130 = vmatpush1.bf16.msra.mxu0 %v3435
    %4131 = vmatprep.mubr.bf16.mxu0 %v1546
    %4132 = vmatmul.mubr.bf16.gmra.mrb[0].mxu0 %v1545
    %v4133 = vpop.f32.mrb[0].mxu0
    %v4134 = vadd.f32 %v4081, %v4133
    %v4135 = vpop.f32.mrb[0].mxu0
    %v4136 = vadd.f32 %v4083, %v4135
    %v4137 = vpop.f32.mrb[0].mxu0
    %v4138 = vadd.f32 %v4085, %v4137
    %v4139 = vpop.f32.mrb[0].mxu0
    %v4140 = vadd.f32 %v4087, %v4139
    %4141 = vmatprep.mubr.bf16.mxu0 %v1558
    %4142 = vmatmul.mubr.bf16.gmra.mrb[0].mxu0 %v1557
    %v4143 = vpop.f32.mrb[0].mxu0
    %v4144 = vadd.f32 %v4091, %v4143
    %v4145 = vpop.f32.mrb[0].mxu0
    %v4146 = vadd.f32 %v4093, %v4145
    %v4147 = vpop.f32.mrb[0].mxu0
    %v4148 = vadd.f32 %v4095, %v4147
    %v4149 = vpop.f32.mrb[0].mxu0
    %v4150 = vadd.f32 %v4097, %v4149
    %4151 = vdwg.mxu0
    %4152 = vmatprep.subr.bf16.mxu0 %v3440
    %4153 = vmatpush1.bf16.msra.mxu0 %v3439
    %4154 = vmatprep.subr.bf16.mxu0 %v3444
    %4155 = vmatpush1.bf16.msra.mxu0 %v3443
    %4156 = vmatprep.subr.bf16.mxu0 %v3448
    %4157 = vmatpush1.bf16.msra.mxu0 %v3447
    %4158 = vmatprep.subr.bf16.mxu0 %v3452
    %4159 = vmatpush1.bf16.msra.mxu0 %v3451
    %4160 = vmatprep.subr.bf16.mxu0 %v3456
    %4161 = vmatpush1.bf16.msra.mxu0 %v3455
    %4162 = vmatprep.subr.bf16.mxu0 %v3460
    %4163 = vmatpush1.bf16.msra.mxu0 %v3459
    %4164 = vmatprep.subr.bf16.mxu0 %v3464
    %4165 = vmatpush1.bf16.msra.mxu0 %v3463
    %4166 = vmatprep.subr.bf16.mxu0 %v3468
    %4167 = vmatpush1.bf16.msra.mxu0 %v3467
    %4168 = vmatprep.subr.bf16.mxu0 %v3472
    %4169 = vmatpush1.bf16.msra.mxu0 %v3471
    %4170 = vmatprep.subr.bf16.mxu0 %v3476
    %4171 = vmatpush1.bf16.msra.mxu0 %v3475
    %4172 = vmatprep.subr.bf16.mxu0 %v3480
    %4173 = vmatpush1.bf16.msra.mxu0 %v3479
    %4174 = vmatprep.subr.bf16.mxu0 %v3484
    %4175 = vmatpush1.bf16.msra.mxu0 %v3483
    %4176 = vmatprep.subr.bf16.mxu0 %v3488
    %4177 = vmatpush1.bf16.msra.mxu0 %v3487
    %4178 = vmatprep.subr.bf16.mxu0 %v3492
    %4179 = vmatpush1.bf16.msra.mxu0 %v3491
    %4180 = vmatprep.subr.bf16.mxu0 %v3496
    %4181 = vmatpush1.bf16.msra.mxu0 %v3495
    %4182 = vmatprep.subr.bf16.mxu0 %v3500
    %4183 = vmatpush1.bf16.msra.mxu0 %v3499
    %4184 = vmatprep.mubr.bf16.mxu0 %v1548
    %4185 = vmatmul.mubr.bf16.gmra.mrb[0].mxu0 %v1547
    %v4186 = vpop.f32.mrb[0].mxu0
    %v4187 = vadd.f32 %v4134, %v4186
    %v4188 = vpop.f32.mrb[0].mxu0
    %v4189 = vadd.f32 %v4136, %v4188
    %v4190 = vpop.f32.mrb[0].mxu0
    %v4191 = vadd.f32 %v4138, %v4190
    %v4192 = vpop.f32.mrb[0].mxu0
    %v4193 = vadd.f32 %v4140, %v4192
    %4194 = vmatprep.mubr.bf16.mxu0 %v1560
    %4195 = vmatmul.mubr.bf16.gmra.mrb[0].mxu0 %v1559
    %v4196 = vpop.f32.mrb[0].mxu0
    %v4197 = vadd.f32 %v4144, %v4196
    %v4198 = vpop.f32.mrb[0].mxu0
    %v4199 = vadd.f32 %v4146, %v4198
    %v4200 = vpop.f32.mrb[0].mxu0
    %v4201 = vadd.f32 %v4148, %v4200
    %v4202 = vpop.f32.mrb[0].mxu0
    %v4203 = vadd.f32 %v4150, %v4202
    %4204 = vdwg.mxu0
    %4205 = vmatprep.subr.bf16.mxu0 %v3122
    %4206 = vmatpush1.bf16.msra.mxu0 %v3121
    %4207 = vmatprep.subr.bf16.mxu0 %v3126
    %4208 = vmatpush1.bf16.msra.mxu0 %v3125
    %4209 = vmatprep.subr.bf16.mxu0 %v3130
    %4210 = vmatpush1.bf16.msra.mxu0 %v3129
    %4211 = vmatprep.subr.bf16.mxu0 %v3134
    %4212 = vmatpush1.bf16.msra.mxu0 %v3133
    %4213 = vmatprep.subr.bf16.mxu0 %v3138
    %4214 = vmatpush1.bf16.msra.mxu0 %v3137
    %4215 = vmatprep.subr.bf16.mxu0 %v3142
    %4216 = vmatpush1.bf16.msra.mxu0 %v3141
    %4217 = vmatprep.subr.bf16.mxu0 %v3146
    %4218 = vmatpush1.bf16.msra.mxu0 %v3145
    %4219 = vmatprep.subr.bf16.mxu0 %v3150
    %4220 = vmatpush1.bf16.msra.mxu0 %v3149
    %4221 = vmatprep.subr.bf16.mxu0 %v3154
    %4222 = vmatpush1.bf16.msra.mxu0 %v3153
    %4223 = vmatprep.subr.bf16.mxu0 %v3158
    %4224 = vmatpush1.bf16.msra.mxu0 %v3157
    %4225 = vmatprep.subr.bf16.mxu0 %v3162
    %4226 = vmatpush1.bf16.msra.mxu0 %v3161
    %4227 = vmatprep.subr.bf16.mxu0 %v3166
    %4228 = vmatpush1.bf16.msra.mxu0 %v3165
    %4229 = vmatprep.subr.bf16.mxu0 %v3170
    %4230 = vmatpush1.bf16.msra.mxu0 %v3169
    %4231 = vmatprep.subr.bf16.mxu0 %v3174
    %4232 = vmatpush1.bf16.msra.mxu0 %v3173
    %4233 = vmatprep.subr.bf16.mxu0 %v3178
    %4234 = vmatpush1.bf16.msra.mxu0 %v3177
    %4235 = vmatprep.subr.bf16.mxu0 %v3182
    %4236 = vmatpush1.bf16.msra.mxu0 %v3181
    %4237 = vmatprep.mubr.bf16.mxu0 %v1538
    %4238 = vmatmul.mubr.bf16.gmra.mrb[0].mxu0 %v1537
    %v4239 = vpop.f32.mrb[0].mxu0
    %v4240 = vadd.f32 %v1958, %v4239
    %v4241 = vpop.f32.mrb[0].mxu0
    %v4242 = vadd.f32 %v1962, %v4241
    %v4243 = vpop.f32.mrb[0].mxu0
    %v4244 = vadd.f32 %v1958, %v4243
    %v4245 = vpop.f32.mrb[0].mxu0
    %v4246 = vadd.f32 %v1962, %v4245
    %4247 = vmatprep.mubr.bf16.mxu0 %v1550
    %4248 = vmatmul.mubr.bf16.gmra.mrb[0].mxu0 %v1549
    %v4249 = vpop.f32.mrb[0].mxu0
    %v4250 = vadd.f32 %v1958, %v4249
    %v4251 = vpop.f32.mrb[0].mxu0
    %v4252 = vadd.f32 %v1962, %v4251
    %v4253 = vpop.f32.mrb[0].mxu0
    %v4254 = vadd.f32 %v1958, %v4253
    %v4255 = vpop.f32.mrb[0].mxu0
    %v4256 = vadd.f32 %v1962, %v4255
    %4257 = vdwg.mxu0
    %4258 = vmatprep.subr.bf16.mxu0 %v3186
    %4259 = vmatpush1.bf16.msra.mxu0 %v3185
    %4260 = vmatprep.subr.bf16.mxu0 %v3190
    %4261 = vmatpush1.bf16.msra.mxu0 %v3189
    %4262 = vmatprep.subr.bf16.mxu0 %v3194
    %4263 = vmatpush1.bf16.msra.mxu0 %v3193
    %4264 = vmatprep.subr.bf16.mxu0 %v3198
    %4265 = vmatpush1.bf16.msra.mxu0 %v3197
    %4266 = vmatprep.subr.bf16.mxu0 %v3202
    %4267 = vmatpush1.bf16.msra.mxu0 %v3201
    %4268 = vmatprep.subr.bf16.mxu0 %v3206
    %4269 = vmatpush1.bf16.msra.mxu0 %v3205
    %4270 = vmatprep.subr.bf16.mxu0 %v3210
    %4271 = vmatpush1.bf16.msra.mxu0 %v3209
    %4272 = vmatprep.subr.bf16.mxu0 %v3214
    %4273 = vmatpush1.bf16.msra.mxu0 %v3213
    %4274 = vmatprep.subr.bf16.mxu0 %v3218
    %4275 = vmatpush1.bf16.msra.mxu0 %v3217
    %4276 = vmatprep.subr.bf16.mxu0 %v3222
    %4277 = vmatpush1.bf16.msra.mxu0 %v3221
    %4278 = vmatprep.subr.bf16.mxu0 %v3226
    %4279 = vmatpush1.bf16.msra.mxu0 %v3225
    %4280 = vmatprep.subr.bf16.mxu0 %v3230
    %4281 = vmatpush1.bf16.msra.mxu0 %v3229
    %4282 = vmatprep.subr.bf16.mxu0 %v3234
    %4283 = vmatpush1.bf16.msra.mxu0 %v3233
    %4284 = vmatprep.subr.bf16.mxu0 %v3238
    %4285 = vmatpush1.bf16.msra.mxu0 %v3237
    %4286 = vmatprep.subr.bf16.mxu0 %v3242
    %4287 = vmatpush1.bf16.msra.mxu0 %v3241
    %4288 = vmatprep.subr.bf16.mxu0 %v3246
    %4289 = vmatpush1.bf16.msra.mxu0 %v3245
    %4290 = vmatprep.mubr.bf16.mxu0 %v1540
    %4291 = vmatmul.mubr.bf16.gmra.mrb[0].mxu0 %v1539
    %v4292 = vpop.f32.mrb[0].mxu0
    %v4293 = vadd.f32 %v4240, %v4292
    %v4294 = vpop.f32.mrb[0].mxu0
    %v4295 = vadd.f32 %v4242, %v4294
    %v4296 = vpop.f32.mrb[0].mxu0
    %v4297 = vadd.f32 %v4244, %v4296
    %v4298 = vpop.f32.mrb[0].mxu0
    %v4299 = vadd.f32 %v4246, %v4298
    %4300 = vmatprep.mubr.bf16.mxu0 %v1552
    %4301 = vmatmul.mubr.bf16.gmra.mrb[0].mxu0 %v1551
    %v4302 = vpop.f32.mrb[0].mxu0
    %v4303 = vadd.f32 %v4250, %v4302
    %v4304 = vpop.f32.mrb[0].mxu0
    %v4305 = vadd.f32 %v4252, %v4304
    %v4306 = vpop.f32.mrb[0].mxu0
    %v4307 = vadd.f32 %v4254, %v4306
    %v4308 = vpop.f32.mrb[0].mxu0
    %v4309 = vadd.f32 %v4256, %v4308
    %4310 = vdwg.mxu0
    %4311 = vmatprep.subr.bf16.mxu0 %v3250
    %4312 = vmatpush1.bf16.msra.mxu0 %v3249
    %4313 = vmatprep.subr.bf16.mxu0 %v3254
    %4314 = vmatpush1.bf16.msra.mxu0 %v3253
    %4315 = vmatprep.subr.bf16.mxu0 %v3258
    %4316 = vmatpush1.bf16.msra.mxu0 %v3257
    %4317 = vmatprep.subr.bf16.mxu0 %v3262
    %4318 = vmatpush1.bf16.msra.mxu0 %v3261
    %4319 = vmatprep.subr.bf16.mxu0 %v3266
    %4320 = vmatpush1.bf16.msra.mxu0 %v3265
    %4321 = vmatprep.subr.bf16.mxu0 %v3270
    %4322 = vmatpush1.bf16.msra.mxu0 %v3269
    %4323 = vmatprep.subr.bf16.mxu0 %v3274
    %4324 = vmatpush1.bf16.msra.mxu0 %v3273
    %4325 = vmatprep.subr.bf16.mxu0 %v3278
    %4326 = vmatpush1.bf16.msra.mxu0 %v3277
    %4327 = vmatprep.subr.bf16.mxu0 %v3282
    %4328 = vmatpush1.bf16.msra.mxu0 %v3281
    %4329 = vmatprep.subr.bf16.mxu0 %v3286
    %4330 = vmatpush1.bf16.msra.mxu0 %v3285
    %4331 = vmatprep.subr.bf16.mxu0 %v3290
    %4332 = vmatpush1.bf16.msra.mxu0 %v3289
    %4333 = vmatprep.subr.bf16.mxu0 %v3294
    %4334 = vmatpush1.bf16.msra.mxu0 %v3293
    %4335 = vmatprep.subr.bf16.mxu0 %v3298
    %4336 = vmatpush1.bf16.msra.mxu0 %v3297
    %4337 = vmatprep.subr.bf16.mxu0 %v3302
    %4338 = vmatpush1.bf16.msra.mxu0 %v3301
    %4339 = vmatprep.subr.bf16.mxu0 %v3306
    %4340 = vmatpush1.bf16.msra.mxu0 %v3305
    %4341 = vmatprep.subr.bf16.mxu0 %v3310
    %4342 = vmatpush1.bf16.msra.mxu0 %v3309
    %4343 = vmatprep.mubr.bf16.mxu0 %v1542
    %4344 = vmatmul.mubr.bf16.gmra.mrb[0].mxu0 %v1541
    %v4345 = vpop.f32.mrb[0].mxu0
    %v4346 = vadd.f32 %v4293, %v4345
    %v4347 = vpop.f32.mrb[0].mxu0
    %v4348 = vadd.f32 %v4295, %v4347
    %v4349 = vpop.f32.mrb[0].mxu0
    %v4350 = vadd.f32 %v4297, %v4349
    %v4351 = vpop.f32.mrb[0].mxu0
    %v4352 = vadd.f32 %v4299, %v4351
    %4353 = vmatprep.mubr.bf16.mxu0 %v1554
    %4354 = vmatmul.mubr.bf16.gmra.mrb[0].mxu0 %v1553
    %v4355 = vpop.f32.mrb[0].mxu0
    %v4356 = vadd.f32 %v4303, %v4355
    %v4357 = vpop.f32.mrb[0].mxu0
    %v4358 = vadd.f32 %v4305, %v4357
    %v4359 = vpop.f32.mrb[0].mxu0
    %v4360 = vadd.f32 %v4307, %v4359
    %v4361 = vpop.f32.mrb[0].mxu0
    %v4362 = vadd.f32 %v4309, %v4361
    %4363 = vdwg.mxu0
    %4364 = vmatprep.subr.bf16.mxu0 %v3314
    %4365 = vmatpush1.bf16.msra.mxu0 %v3313
    %4366 = vmatprep.subr.bf16.mxu0 %v3318
    %4367 = vmatpush1.bf16.msra.mxu0 %v3317
    %4368 = vmatprep.subr.bf16.mxu0 %v3322
    %4369 = vmatpush1.bf16.msra.mxu0 %v3321
    %4370 = vmatprep.subr.bf16.mxu0 %v3326
    %4371 = vmatpush1.bf16.msra.mxu0 %v3325
    %4372 = vmatprep.subr.bf16.mxu0 %v3330
    %4373 = vmatpush1.bf16.msra.mxu0 %v3329
    %4374 = vmatprep.subr.bf16.mxu0 %v3334
    %4375 = vmatpush1.bf16.msra.mxu0 %v3333
    %4376 = vmatprep.subr.bf16.mxu0 %v3338
    %4377 = vmatpush1.bf16.msra.mxu0 %v3337
    %4378 = vmatprep.subr.bf16.mxu0 %v3342
    %4379 = vmatpush1.bf16.msra.mxu0 %v3341
    %4380 = vmatprep.subr.bf16.mxu0 %v3346
    %4381 = vmatpush1.bf16.msra.mxu0 %v3345
    %4382 = vmatprep.subr.bf16.mxu0 %v3350
    %4383 = vmatpush1.bf16.msra.mxu0 %v3349
    %4384 = vmatprep.subr.bf16.mxu0 %v3354
    %4385 = vmatpush1.bf16.msra.mxu0 %v3353
    %4386 = vmatprep.subr.bf16.mxu0 %v3358
    %4387 = vmatpush1.bf16.msra.mxu0 %v3357
    %4388 = vmatprep.subr.bf16.mxu0 %v3362
    %4389 = vmatpush1.bf16.msra.mxu0 %v3361
    %4390 = vmatprep.subr.bf16.mxu0 %v3366
    %4391 = vmatpush1.bf16.msra.mxu0 %v3365
    %4392 = vmatprep.subr.bf16.mxu0 %v3370
    %4393 = vmatpush1.bf16.msra.mxu0 %v3369
    %4394 = vmatprep.subr.bf16.mxu0 %v3374
    %4395 = vmatpush1.bf16.msra.mxu0 %v3373
    %4396 = vmatprep.mubr.bf16.mxu0 %v1544
    %4397 = vmatmul.mubr.bf16.gmra.mrb[0].mxu0 %v1543
    %v4398 = vpop.f32.mrb[0].mxu0
    %v4399 = vadd.f32 %v4346, %v4398
    %v4400 = vpop.f32.mrb[0].mxu0
    %v4401 = vadd.f32 %v4348, %v4400
    %v4402 = vpop.f32.mrb[0].mxu0
    %v4403 = vadd.f32 %v4350, %v4402
    %v4404 = vpop.f32.mrb[0].mxu0
    %v4405 = vadd.f32 %v4352, %v4404
    %4406 = vmatprep.mubr.bf16.mxu0 %v1556
    %4407 = vmatmul.mubr.bf16.gmra.mrb[0].mxu0 %v1555
    %v4408 = vpop.f32.mrb[0].mxu0
    %v4409 = vadd.f32 %v4356, %v4408
    %v4410 = vpop.f32.mrb[0].mxu0
    %v4411 = vadd.f32 %v4358, %v4410
    %v4412 = vpop.f32.mrb[0].mxu0
    %v4413 = vadd.f32 %v4360, %v4412
    %v4414 = vpop.f32.mrb[0].mxu0
    %v4415 = vadd.f32 %v4362, %v4414
    %4416 = vdwg.mxu0
    %4417 = vmatprep.subr.bf16.mxu0 %v3378
    %4418 = vmatpush1.bf16.msra.mxu0 %v3377
    %4419 = vmatprep.subr.bf16.mxu0 %v3382
    %4420 = vmatpush1.bf16.msra.mxu0 %v3381
    %4421 = vmatprep.subr.bf16.mxu0 %v3386
    %4422 = vmatpush1.bf16.msra.mxu0 %v3385
    %4423 = vmatprep.subr.bf16.mxu0 %v3390
    %4424 = vmatpush1.bf16.msra.mxu0 %v3389
    %4425 = vmatprep.subr.bf16.mxu0 %v3394
    %4426 = vmatpush1.bf16.msra.mxu0 %v3393
    %4427 = vmatprep.subr.bf16.mxu0 %v3398
    %4428 = vmatpush1.bf16.msra.mxu0 %v3397
    %4429 = vmatprep.subr.bf16.mxu0 %v3402
    %4430 = vmatpush1.bf16.msra.mxu0 %v3401
    %4431 = vmatprep.subr.bf16.mxu0 %v3406
    %4432 = vmatpush1.bf16.msra.mxu0 %v3405
    %4433 = vmatprep.subr.bf16.mxu0 %v3410
    %4434 = vmatpush1.bf16.msra.mxu0 %v3409
    %4435 = vmatprep.subr.bf16.mxu0 %v3414
    %4436 = vmatpush1.bf16.msra.mxu0 %v3413
    %4437 = vmatprep.subr.bf16.mxu0 %v3418
    %4438 = vmatpush1.bf16.msra.mxu0 %v3417
    %4439 = vmatprep.subr.bf16.mxu0 %v3422
    %4440 = vmatpush1.bf16.msra.mxu0 %v3421
    %4441 = vmatprep.subr.bf16.mxu0 %v3426
    %4442 = vmatpush1.bf16.msra.mxu0 %v3425
    %4443 = vmatprep.subr.bf16.mxu0 %v3430
    %4444 = vmatpush1.bf16.msra.mxu0 %v3429
    %4445 = vmatprep.subr.bf16.mxu0 %v3434
    %4446 = vmatpush1.bf16.msra.mxu0 %v3433
    %4447 = vmatprep.subr.bf16.mxu0 %v3438
    %4448 = vmatpush1.bf16.msra.mxu0 %v3437
    %4449 = vmatprep.mubr.bf16.mxu0 %v1546
    %4450 = vmatmul.mubr.bf16.gmra.mrb[0].mxu0 %v1545
    %v4451 = vpop.f32.mrb[0].mxu0
    %v4452 = vadd.f32 %v4399, %v4451
    %v4453 = vpop.f32.mrb[0].mxu0
    %v4454 = vadd.f32 %v4401, %v4453
    %v4455 = vpop.f32.mrb[0].mxu0
    %v4456 = vadd.f32 %v4403, %v4455
    %v4457 = vpop.f32.mrb[0].mxu0
    %v4458 = vadd.f32 %v4405, %v4457
    %4459 = vmatprep.mubr.bf16.mxu0 %v1558
    %4460 = vmatmul.mubr.bf16.gmra.mrb[0].mxu0 %v1557
    %v4461 = vpop.f32.mrb[0].mxu0
    %v4462 = vadd.f32 %v4409, %v4461
    %v4463 = vpop.f32.mrb[0].mxu0
    %v4464 = vadd.f32 %v4411, %v4463
    %v4465 = vpop.f32.mrb[0].mxu0
    %v4466 = vadd.f32 %v4413, %v4465
    %v4467 = vpop.f32.mrb[0].mxu0
    %v4468 = vadd.f32 %v4415, %v4467
    %4469 = vdwg.mxu0
    %4470 = vmatprep.subr.bf16.mxu0 %v3442
    %4471 = vmatpush1.bf16.msra.mxu0 %v3441
    %4472 = vmatprep.subr.bf16.mxu0 %v3446
    %4473 = vmatpush1.bf16.msra.mxu0 %v3445
    %4474 = vmatprep.subr.bf16.mxu0 %v3450
    %4475 = vmatpush1.bf16.msra.mxu0 %v3449
    %4476 = vmatprep.subr.bf16.mxu0 %v3454
    %4477 = vmatpush1.bf16.msra.mxu0 %v3453
    %4478 = vmatprep.subr.bf16.mxu0 %v3458
    %4479 = vmatpush1.bf16.msra.mxu0 %v3457
    %4480 = vmatprep.subr.bf16.mxu0 %v3462
    %4481 = vmatpush1.bf16.msra.mxu0 %v3461
    %4482 = vmatprep.subr.bf16.mxu0 %v3466
    %4483 = vmatpush1.bf16.msra.mxu0 %v3465
    %4484 = vmatprep.subr.bf16.mxu0 %v3470
    %4485 = vmatpush1.bf16.msra.mxu0 %v3469
    %4486 = vmatprep.subr.bf16.mxu0 %v3474
    %4487 = vmatpush1.bf16.msra.mxu0 %v3473
    %4488 = vmatprep.subr.bf16.mxu0 %v3478
    %4489 = vmatpush1.bf16.msra.mxu0 %v3477
    %4490 = vmatprep.subr.bf16.mxu0 %v3482
    %4491 = vmatpush1.bf16.msra.mxu0 %v3481
    %4492 = vmatprep.subr.bf16.mxu0 %v3486
    %4493 = vmatpush1.bf16.msra.mxu0 %v3485
    %4494 = vmatprep.subr.bf16.mxu0 %v3490
    %4495 = vmatpush1.bf16.msra.mxu0 %v3489
    %4496 = vmatprep.subr.bf16.mxu0 %v3494
    %4497 = vmatpush1.bf16.msra.mxu0 %v3493
    %4498 = vmatprep.subr.bf16.mxu0 %v3498
    %4499 = vmatpush1.bf16.msra.mxu0 %v3497
    %4500 = vmatprep.subr.bf16.mxu0 %v3502
    %4501 = vmatpush1.bf16.msra.mxu0 %v3501
    %4502 = vmatprep.mubr.bf16.mxu0 %v1548
    %4503 = vmatmul.mubr.bf16.gmra.mrb[0].mxu0 %v1547
    %v4504 = vpop.f32.mrb[0].mxu0
    %v4505 = vadd.f32 %v4452, %v4504
    %v4506 = vpop.f32.mrb[0].mxu0
    %v4507 = vadd.f32 %v4454, %v4506
    %v4508 = vpop.f32.mrb[0].mxu0
    %v4509 = vadd.f32 %v4456, %v4508
    %v4510 = vpop.f32.mrb[0].mxu0
    %v4511 = vadd.f32 %v4458, %v4510
    %4512 = vmatprep.mubr.bf16.mxu0 %v1560
    %4513 = vmatmul.mubr.bf16.gmra.mrb[0].mxu0 %v1559
    %v4514 = vpop.f32.mrb[0].mxu0
    %v4515 = vadd.f32 %v4462, %v4514
    %v4516 = vpop.f32.mrb[0].mxu0
    %v4517 = vadd.f32 %v4464, %v4516
    %v4518 = vpop.f32.mrb[0].mxu0
    %v4519 = vadd.f32 %v4466, %v4518
    %v4520 = vpop.f32.mrb[0].mxu0
    %v4521 = vadd.f32 %v4468, %v4520
    %4522 = vdwg.mxu0
    %v4523 = vmax.f32 %v4187, 0.0
    %v4524 = vmax.f32 %v4189, 0.0
    %v4525 = vmax.f32 %v4505, 0.0
    %v4526 = vmax.f32 %v4507, 0.0
    %v4527 = vmax.f32 %v4191, 0.0
    %v4528 = vmax.f32 %v4193, 0.0
    %v4529 = vmax.f32 %v4509, 0.0
    %v4530 = vmax.f32 %v4511, 0.0
    %v4531 = vmax.f32 %v4197, 0.0
    %v4532 = vmax.f32 %v4199, 0.0
    %v4533 = vmax.f32 %v4515, 0.0
    %v4534 = vmax.f32 %v4517, 0.0
    %v4535 = vmax.f32 %v4201, 0.0
    %v4536 = vmax.f32 %v4203, 0.0
    %v4537 = vmax.f32 %v4519, 0.0
    %v4538 = vmax.f32 %v4521, 0.0
    %v4539 = vadd.f32 %v4523, %v4527
    %v4540 = vrot.slane %v4539, 4
    %v4541 = vadd.f32 %v4539, %v4540
    %v4542 = vrot.slane %v4541, 2
    %v4543 = vadd.f32 %v4541, %v4542
    %v4544 = vrot.slane %v4543, 1
    %v4545 = vadd.f32 %v4543, %v4544
    %v4546 = vadd.f32 %v4524, %v4528
    %v4547 = vrot.slane %v4546, 4
    %v4548 = vadd.f32 %v4546, %v4547
    %v4549 = vrot.slane %v4548, 2
    %v4550 = vadd.f32 %v4548, %v4549
    %v4551 = vrot.slane %v4550, 1
    %v4552 = vadd.f32 %v4550, %v4551
    %v4553 = vadd.f32 %v4525, %v4529
    %v4554 = vrot.slane %v4553, 4
    %v4555 = vadd.f32 %v4553, %v4554
    %v4556 = vrot.slane %v4555, 2
    %v4557 = vadd.f32 %v4555, %v4556
    %v4558 = vrot.slane %v4557, 1
    %v4559 = vadd.f32 %v4557, %v4558
    %v4560 = vadd.f32 %v4526, %v4530
    %v4561 = vrot.slane %v4560, 4
    %v4562 = vadd.f32 %v4560, %v4561
    %v4563 = vrot.slane %v4562, 2
    %v4564 = vadd.f32 %v4562, %v4563
    %v4565 = vrot.slane %v4564, 1
    %v4566 = vadd.f32 %v4564, %v4565
    %v4567 = vadd.f32 %v4531, %v4535
    %v4568 = vrot.slane %v4567, 4
    %v4569 = vadd.f32 %v4567, %v4568
    %v4570 = vrot.slane %v4569, 2
    %v4571 = vadd.f32 %v4569, %v4570
    %v4572 = vrot.slane %v4571, 1
    %v4573 = vadd.f32 %v4571, %v4572
    %v4574 = vadd.f32 %v4532, %v4536
    %v4575 = vrot.slane %v4574, 4
    %v4576 = vadd.f32 %v4574, %v4575
    %v4577 = vrot.slane %v4576, 2
    %v4578 = vadd.f32 %v4576, %v4577
    %v4579 = vrot.slane %v4578, 1
    %v4580 = vadd.f32 %v4578, %v4579
    %v4581 = vadd.f32 %v4533, %v4537
    %v4582 = vrot.slane %v4581, 4
    %v4583 = vadd.f32 %v4581, %v4582
    %v4584 = vrot.slane %v4583, 2
    %v4585 = vadd.f32 %v4583, %v4584
    %v4586 = vrot.slane %v4585, 1
    %v4587 = vadd.f32 %v4585, %v4586
    %v4588 = vadd.f32 %v4534, %v4538
    %v4589 = vrot.slane %v4588, 4
    %v4590 = vadd.f32 %v4588, %v4589
    %v4591 = vrot.slane %v4590, 2
    %v4592 = vadd.f32 %v4590, %v4591
    %v4593 = vrot.slane %v4592, 1
    %v4594 = vadd.f32 %v4592, %v4593
    %v4595 = vsel %vm1262, %v4545, %v4573
    %v4596 = vsel %vm1262, %v4552, %v4580
    %v4597 = vsel %vm1262, %v4559, %v4587
    %v4598 = vsel %vm1262, %v4566, %v4594
    %v4599 = vpack.c.bf16 %v4595, %v4595
    %v4600 = vpack.c.bf16 %v4596, %v4596
    %v4601 = vpack.c.bf16 %v4597, %v4597
    %v4602 = vpack.c.bf16 %v4598, %v4598
    %v4603 = vld [vmem:[%s6] sm:$0xf]
    %v4604 = vld [vmem:[%s6 + $0x4] sm:$0xf]
    %v4605 = vld [vmem:[%s6 + $0x8] sm:$0xf]
    %v4606 = vld [vmem:[%s6 + $0xc] sm:$0xf]
    %v4607 = vld [vmem:[%s6 + $0x10] sm:$0xf]
    %v4608 = vld [vmem:[%s6 + $0x14] sm:$0xf]
    %v4609 = vld [vmem:[%s6 + $0x18] sm:$0xf]
    %v4610 = vld [vmem:[%s6 + $0x1c] sm:$0xf]
    %v4611 = vld [vmem:[%s6 + $0x20] sm:$0xf]
    %v4612 = vld [vmem:[%s6 + $0x24] sm:$0xf]
    %v4613 = vld [vmem:[%s6 + $0x28] sm:$0xf]
    %v4614 = vld [vmem:[%s6 + $0x2c] sm:$0xf]
    %v4615 = vld [vmem:[%s6 + $0x30] sm:$0xf]
    %v4616 = vld [vmem:[%s6 + $0x34] sm:$0xf]
    %v4617 = vld [vmem:[%s6 + $0x38] sm:$0xf]
    %v4618 = vld [vmem:[%s6 + $0x3c] sm:$0xf]
    %v4619 = vld [vmem:[%s6 + $0x40] sm:$0xf]
    %v4620 = vld [vmem:[%s6 + $0x44] sm:$0xf]
    %v4621 = vld [vmem:[%s6 + $0x48] sm:$0xf]
    %v4622 = vld [vmem:[%s6 + $0x4c] sm:$0xf]
    %v4623 = vld [vmem:[%s6 + $0x50] sm:$0xf]
    %v4624 = vld [vmem:[%s6 + $0x54] sm:$0xf]
    %v4625 = vld [vmem:[%s6 + $0x58] sm:$0xf]
    %v4626 = vld [vmem:[%s6 + $0x5c] sm:$0xf]
    %v4627 = vld [vmem:[%s6 + $0x60] sm:$0xf]
    %v4628 = vld [vmem:[%s6 + $0x64] sm:$0xf]
    %v4629 = vld [vmem:[%s6 + $0x68] sm:$0xf]
    %v4630 = vld [vmem:[%s6 + $0x6c] sm:$0xf]
    %v4631 = vld [vmem:[%s6 + $0x70] sm:$0xf]
    %v4632 = vld [vmem:[%s6 + $0x74] sm:$0xf]
    %v4633 = vld [vmem:[%s6 + $0x78] sm:$0xf]
    %v4634 = vld [vmem:[%s6 + $0x7c] sm:$0xf]
    %v4635 = vld [vmem:[%s6 + $0x80] sm:$0xf]
    %v4636 = vld [vmem:[%s6 + $0x84] sm:$0xf]
    %v4637 = vld [vmem:[%s6 + $0x88] sm:$0xf]
    %v4638 = vld [vmem:[%s6 + $0x8c] sm:$0xf]
    %v4639 = vld [vmem:[%s6 + $0x90] sm:$0xf]
    %v4640 = vld [vmem:[%s6 + $0x94] sm:$0xf]
    %v4641 = vld [vmem:[%s6 + $0x98] sm:$0xf]
    %v4642 = vld [vmem:[%s6 + $0x9c] sm:$0xf]
    %v4643 = vld [vmem:[%s6 + $0xa0] sm:$0xf]
    %v4644 = vld [vmem:[%s6 + $0xa4] sm:$0xf]
    %v4645 = vld [vmem:[%s6 + $0xa8] sm:$0xf]
    %v4646 = vld [vmem:[%s6 + $0xac] sm:$0xf]
    %v4647 = vld [vmem:[%s6 + $0xb0] sm:$0xf]
    %v4648 = vld [vmem:[%s6 + $0xb4] sm:$0xf]
    %v4649 = vld [vmem:[%s6 + $0xb8] sm:$0xf]
    %v4650 = vld [vmem:[%s6 + $0xbc] sm:$0xf]
    %v4651 = vld [vmem:[%s6 + $0xc0] sm:$0xf]
    %v4652 = vld [vmem:[%s6 + $0xc4] sm:$0xf]
    %v4653 = vld [vmem:[%s6 + $0xc8] sm:$0xf]
    %v4654 = vld [vmem:[%s6 + $0xcc] sm:$0xf]
    %v4655 = vld [vmem:[%s6 + $0xd0] sm:$0xf]
    %v4656 = vld [vmem:[%s6 + $0xd4] sm:$0xf]
    %v4657 = vld [vmem:[%s6 + $0xd8] sm:$0xf]
    %v4658 = vld [vmem:[%s6 + $0xdc] sm:$0xf]
    %v4659 = vld [vmem:[%s6 + $0xe0] sm:$0xf]
    %v4660 = vld [vmem:[%s6 + $0xe4] sm:$0xf]
    %v4661 = vld [vmem:[%s6 + $0xe8] sm:$0xf]
    %v4662 = vld [vmem:[%s6 + $0xec] sm:$0xf]
    %v4663 = vld [vmem:[%s6 + $0xf0] sm:$0xf]
    %v4664 = vld [vmem:[%s6 + $0xf4] sm:$0xf]
    %v4665 = vld [vmem:[%s6 + $0xf8] sm:$0xf]
    %v4666 = vld [vmem:[%s6 + $0xfc] sm:$0xf]
    %v4731 = vunpack.c.l.b16 %v4603
    %v4732 = vunpack.c.l.b16 %v4604
    %v4733 = vunpack.c.l.b16 %v4605
    %v4734 = vunpack.c.l.b16 %v4606
    %v4735 = vunpack.c.l.b16 %v4607
    %v4736 = vunpack.c.l.b16 %v4608
    %v4737 = vunpack.c.l.b16 %v4609
    %v4738 = vunpack.c.l.b16 %v4610
    %v4739 = vunpack.c.l.b16 %v4611
    %v4740 = vunpack.c.l.b16 %v4612
    %v4741 = vunpack.c.l.b16 %v4613
    %v4742 = vunpack.c.l.b16 %v4614
    %v4743 = vunpack.c.l.b16 %v4615
    %v4744 = vunpack.c.l.b16 %v4616
    %v4745 = vunpack.c.l.b16 %v4617
    %v4746 = vunpack.c.l.b16 %v4618
    %v4747 = vunpack.c.l.b16 %v4619
    %v4748 = vunpack.c.l.b16 %v4620
    %v4749 = vunpack.c.l.b16 %v4621
    %v4750 = vunpack.c.l.b16 %v4622
    %v4751 = vunpack.c.l.b16 %v4623
    %v4752 = vunpack.c.l.b16 %v4624
    %v4753 = vunpack.c.l.b16 %v4625
    %v4754 = vunpack.c.l.b16 %v4626
    %v4755 = vunpack.c.l.b16 %v4627
    %v4756 = vunpack.c.l.b16 %v4628
    %v4757 = vunpack.c.l.b16 %v4629
    %v4758 = vunpack.c.l.b16 %v4630
    %v4759 = vunpack.c.l.b16 %v4631
    %v4760 = vunpack.c.l.b16 %v4632
    %v4761 = vunpack.c.l.b16 %v4633
    %v4762 = vunpack.c.l.b16 %v4634
    %v4763 = vunpack.c.l.b16 %v4635
    %v4764 = vunpack.c.l.b16 %v4636
    %v4765 = vunpack.c.l.b16 %v4637
    %v4766 = vunpack.c.l.b16 %v4638
    %v4767 = vunpack.c.l.b16 %v4639
    %v4768 = vunpack.c.l.b16 %v4640
    %v4769 = vunpack.c.l.b16 %v4641
    %v4770 = vunpack.c.l.b16 %v4642
    %v4771 = vunpack.c.l.b16 %v4643
    %v4772 = vunpack.c.l.b16 %v4644
    %v4773 = vunpack.c.l.b16 %v4645
    %v4774 = vunpack.c.l.b16 %v4646
    %v4775 = vunpack.c.l.b16 %v4647
    %v4776 = vunpack.c.l.b16 %v4648
    %v4777 = vunpack.c.l.b16 %v4649
    %v4778 = vunpack.c.l.b16 %v4650
    %v4779 = vunpack.c.l.b16 %v4651
    %v4780 = vunpack.c.l.b16 %v4652
    %v4781 = vunpack.c.l.b16 %v4653
    %v4782 = vunpack.c.l.b16 %v4654
    %v4783 = vunpack.c.l.b16 %v4655
    %v4784 = vunpack.c.l.b16 %v4656
    %v4785 = vunpack.c.l.b16 %v4657
    %v4786 = vunpack.c.l.b16 %v4658
    %v4787 = vunpack.c.l.b16 %v4659
    %v4788 = vunpack.c.l.b16 %v4660
    %v4789 = vunpack.c.l.b16 %v4661
    %v4790 = vunpack.c.l.b16 %v4662
    %v4791 = vunpack.c.l.b16 %v4663
    %v4792 = vunpack.c.l.b16 %v4664
    %v4793 = vunpack.c.l.b16 %v4665
    %v4794 = vunpack.c.l.b16 %v4666
    %v4795 = vpack.c.b16 %v4732, %v4731
    %v4796 = vpack.c.b16 %v4734, %v4733
    %v4797 = vpack.c.b16 %v4736, %v4735
    %v4798 = vpack.c.b16 %v4738, %v4737
    %v4799 = vpack.c.b16 %v4740, %v4739
    %v4800 = vpack.c.b16 %v4742, %v4741
    %v4801 = vpack.c.b16 %v4744, %v4743
    %v4802 = vpack.c.b16 %v4746, %v4745
    %v4803 = vpack.c.b16 %v4748, %v4747
    %v4804 = vpack.c.b16 %v4750, %v4749
    %v4805 = vpack.c.b16 %v4752, %v4751
    %v4806 = vpack.c.b16 %v4754, %v4753
    %v4807 = vpack.c.b16 %v4756, %v4755
    %v4808 = vpack.c.b16 %v4758, %v4757
    %v4809 = vpack.c.b16 %v4760, %v4759
    %v4810 = vpack.c.b16 %v4762, %v4761
    %v4811 = vpack.c.b16 %v4764, %v4763
    %v4812 = vpack.c.b16 %v4766, %v4765
    %v4813 = vpack.c.b16 %v4768, %v4767
    %v4814 = vpack.c.b16 %v4770, %v4769
    %v4815 = vpack.c.b16 %v4772, %v4771
    %v4816 = vpack.c.b16 %v4774, %v4773
    %v4817 = vpack.c.b16 %v4776, %v4775
    %v4818 = vpack.c.b16 %v4778, %v4777
    %v4819 = vpack.c.b16 %v4780, %v4779
    %v4820 = vpack.c.b16 %v4782, %v4781
    %v4821 = vpack.c.b16 %v4784, %v4783
    %v4822 = vpack.c.b16 %v4786, %v4785
    %v4823 = vpack.c.b16 %v4788, %v4787
    %v4824 = vpack.c.b16 %v4790, %v4789
    %v4825 = vpack.c.b16 %v4792, %v4791
    %v4826 = vpack.c.b16 %v4794, %v4793
    %4859 = vmatprep.subr.bf16.mxu0 0
    %4860 = vmatpush1.bf16.msra.mxu0 %v4795
    %4861 = vmatprep.subr.bf16.mxu0 0
    %4862 = vmatpush1.bf16.msra.mxu0 %v4796
    %4863 = vmatprep.subr.bf16.mxu0 0
    %4864 = vmatpush1.bf16.msra.mxu0 %v4797
    %4865 = vmatprep.subr.bf16.mxu0 0
    %4866 = vmatpush1.bf16.msra.mxu0 %v4798
    %4867 = vmatprep.subr.bf16.mxu0 0
    %4868 = vmatpush1.bf16.msra.mxu0 %v4799
    %4869 = vmatprep.subr.bf16.mxu0 0
    %4870 = vmatpush1.bf16.msra.mxu0 %v4800
    %4871 = vmatprep.subr.bf16.mxu0 0
    %4872 = vmatpush1.bf16.msra.mxu0 %v4801
    %4873 = vmatprep.subr.bf16.mxu0 0
    %4874 = vmatpush1.bf16.msra.mxu0 %v4802
    %4875 = vmatprep.subr.bf16.mxu0 0
    %4876 = vmatpush1.bf16.msra.mxu0 %v4803
    %4877 = vmatprep.subr.bf16.mxu0 0
    %4878 = vmatpush1.bf16.msra.mxu0 %v4804
    %4879 = vmatprep.subr.bf16.mxu0 0
    %4880 = vmatpush1.bf16.msra.mxu0 %v4805
    %4881 = vmatprep.subr.bf16.mxu0 0
    %4882 = vmatpush1.bf16.msra.mxu0 %v4806
    %4883 = vmatprep.subr.bf16.mxu0 0
    %4884 = vmatpush1.bf16.msra.mxu0 %v4807
    %4885 = vmatprep.subr.bf16.mxu0 0
    %4886 = vmatpush1.bf16.msra.mxu0 %v4808
    %4887 = vmatprep.subr.bf16.mxu0 0
    %4888 = vmatpush1.bf16.msra.mxu0 %v4809
    %4889 = vmatprep.subr.bf16.mxu0 0
    %4890 = vmatpush1.bf16.msra.mxu0 %v4810
    %4891 = vmatprep.mubr.bf16.mxu0 %v4600
    %4892 = vmatmul.mubr.bf16.gmra.mrb[0].mxu0 %v4599
    %v4893 = vpop.f32.mrb[0].mxu0
    %v4894 = vadd.f32 0.0, %v4893
    %v4895 = vpop.f32.mrb[0].mxu0
    %v4896 = vpop.f32.mrb[0].mxu0
    %v4897 = vpop.f32.mrb[0].mxu0
    %4898 = vdwg.mxu0
    %4899 = vmatprep.subr.bf16.mxu0 0
    %4900 = vmatpush1.bf16.msra.mxu0 %v4811
    %4901 = vmatprep.subr.bf16.mxu0 0
    %4902 = vmatpush1.bf16.msra.mxu0 %v4812
    %4903 = vmatprep.subr.bf16.mxu0 0
    %4904 = vmatpush1.bf16.msra.mxu0 %v4813
    %4905 = vmatprep.subr.bf16.mxu0 0
    %4906 = vmatpush1.bf16.msra.mxu0 %v4814
    %4907 = vmatprep.subr.bf16.mxu0 0
    %4908 = vmatpush1.bf16.msra.mxu0 %v4815
    %4909 = vmatprep.subr.bf16.mxu0 0
    %4910 = vmatpush1.bf16.msra.mxu0 %v4816
    %4911 = vmatprep.subr.bf16.mxu0 0
    %4912 = vmatpush1.bf16.msra.mxu0 %v4817
    %4913 = vmatprep.subr.bf16.mxu0 0
    %4914 = vmatpush1.bf16.msra.mxu0 %v4818
    %4915 = vmatprep.subr.bf16.mxu0 0
    %4916 = vmatpush1.bf16.msra.mxu0 %v4819
    %4917 = vmatprep.subr.bf16.mxu0 0
    %4918 = vmatpush1.bf16.msra.mxu0 %v4820
    %4919 = vmatprep.subr.bf16.mxu0 0
    %4920 = vmatpush1.bf16.msra.mxu0 %v4821
    %4921 = vmatprep.subr.bf16.mxu0 0
    %4922 = vmatpush1.bf16.msra.mxu0 %v4822
    %4923 = vmatprep.subr.bf16.mxu0 0
    %4924 = vmatpush1.bf16.msra.mxu0 %v4823
    %4925 = vmatprep.subr.bf16.mxu0 0
    %4926 = vmatpush1.bf16.msra.mxu0 %v4824
    %4927 = vmatprep.subr.bf16.mxu0 0
    %4928 = vmatpush1.bf16.msra.mxu0 %v4825
    %4929 = vmatprep.subr.bf16.mxu0 0
    %4930 = vmatpush1.bf16.msra.mxu0 %v4826
    %4931 = vmatprep.mubr.bf16.mxu0 %v4602
    %4932 = vmatmul.mubr.bf16.gmra.mrb[0].mxu0 %v4601
    %v4933 = vpop.f32.mrb[0].mxu0
    %v4934 = vadd.f32 %v4894, %v4933
    %v4935 = vpop.f32.mrb[0].mxu0
    %v4936 = vpop.f32.mrb[0].mxu0
    %v4937 = vpop.f32.mrb[0].mxu0
    %4938 = vdwg.mxu0
    %v4939 = vld [vmem:[#allocation11] sm:$0x1]
    %v4940 = vlaneseq
    %v4941 = vshrl.u32 %v4940, 7
    %v4942 = vsub.s32 0, %v4941
    %v4943 = vrot.slane %v4939, %v4942
    %v4944 = vmul.f32 %v4934, %v4943
    %vm4945 = vcmask 254976
    %v4946 = vsel %vm4945, %v4944, 0.0
    %4947 = vadd.xlane.f32.xlu0 %v4946
    %v4948 = vpop.xlane.xlu0 %4947
    %v4949 = vmax.f32 %v4948, 0.0
    %v4950 = vld [vmem:[#allocation13] sm:$0x1]
    %v4951 = vlaneseq
    %v4952 = vshrl.u32 %v4951, 7
    %v4953 = vsub.s32 0, %v4952
    %v4954 = vrot.slane %v4950, %v4953
    %v4955 = vmul.f32 %v4949, %v4954
    %v4956 = vadd.f32 %v4955, 0.0
    %v4957 = vld [vmem:[#allocation11 + $0x1] sm:$0x1]
    %v4958 = vlaneseq
    %v4959 = vshrl.u32 %v4958, 7
    %v4960 = vsub.s32 0, %v4959
    %v4961 = vrot.slane %v4957, %v4960
    %v4962 = vmul.f32 %v4934, %v4961
    %v4963 = vsel %vm4945, %v4962, 0.0
    %4964 = vadd.xlane.f32.xlu0 %v4963
    %v4965 = vpop.xlane.xlu0 %4964
    %v4966 = vmax.f32 %v4965, 0.0
    %v4967 = vld [vmem:[#allocation13 + $0x1] sm:$0x1]
    %v4968 = vlaneseq
    %v4969 = vshrl.u32 %v4968, 7
    %v4970 = vsub.s32 0, %v4969
    %v4971 = vrot.slane %v4967, %v4970
    %v4972 = vmul.f32 %v4966, %v4971
    %v4973 = vadd.f32 %v4956, %v4972
    %v4974 = vxor.u32 %v4973, 2147483648
    %v4975 = vmul.f32 %v4974, 1.442695
    %v4976 = vpow.pop %v4975
    %v4977 = vadd.f32 %v4976, 1.0
    %v4978 = vrcp.pop %v4977
    %v4979 = vmul.f32 1.0, %v4978
    %v4980 = vpack.c.bf16 %v4979, %v4979
    %v4981 = vld [vmem:[#allocation14] sm:$0xff]
    %v4982 = vld [vmem:[#allocation14 + $0x8] sm:$0xff]
    %v4983 = vld [vmem:[#allocation14 + $0x10] sm:$0xff]
    %v4984 = vld [vmem:[#allocation14 + $0x18] sm:$0xff]
    %v4985 = vld [vmem:[#allocation14 + $0x20] sm:$0xff]
    %v4986 = vld [vmem:[#allocation14 + $0x28] sm:$0xff]
    %v4987 = vld [vmem:[#allocation14 + $0x30] sm:$0xff]
    %v4988 = vld [vmem:[#allocation14 + $0x38] sm:$0xff]
    %v4997 = vunpack.c.l.b16 %v4981
    %v4998 = vunpack.c.h.b16 %v4981
    %v4999 = vunpack.c.l.b16 %v4982
    %v5000 = vunpack.c.h.b16 %v4982
    %v5001 = vunpack.c.l.b16 %v4983
    %v5002 = vunpack.c.h.b16 %v4983
    %v5003 = vunpack.c.l.b16 %v4984
    %v5004 = vunpack.c.h.b16 %v4984
    %v5005 = vunpack.c.l.b16 %v4985
    %v5006 = vunpack.c.h.b16 %v4985
    %v5007 = vunpack.c.l.b16 %v4986
    %v5008 = vunpack.c.h.b16 %v4986
    %v5009 = vunpack.c.l.b16 %v4987
    %v5010 = vunpack.c.h.b16 %v4987
    %v5011 = vunpack.c.l.b16 %v4988
    %v5012 = vunpack.c.h.b16 %v4988
    %v5013 = vpack.c.b16 %v5001, %v4997
    %v5014 = vpack.c.b16 %v5002, %v4998
    %v5015 = vpack.c.b16 %v5003, %v4999
    %v5016 = vpack.c.b16 %v5004, %v5000
    %v5017 = vpack.c.b16 %v5009, %v5005
    %v5018 = vpack.c.b16 %v5010, %v5006
    %v5019 = vpack.c.b16 %v5011, %v5007
    %v5020 = vpack.c.b16 %v5012, %v5008
    %vm5029 = vcmask 261120
    %v5031 = vsel %vm5029, %v4980, 0
    %5033 = vmatprep.subr.bf16.mxu0 %v5014
    %5034 = vmatpush1.bf16.msra.mxu0 %v5013
    %5035 = vmatprep.subr.bf16.mxu0 %v5018
    %5036 = vmatpush1.bf16.msra.mxu0 %v5017
    %5037 = vmatprep.subr.bf16.mxu0 0
    %5038 = vmatpush1.bf16.msra.mxu0 0
    %5039 = vmatprep.subr.bf16.mxu0 0
    %5040 = vmatpush1.bf16.msra.mxu0 0
    %5041 = vmatprep.subr.bf16.mxu0 0
    %5042 = vmatpush1.bf16.msra.mxu0 0
    %5043 = vmatprep.subr.bf16.mxu0 0
    %5044 = vmatpush1.bf16.msra.mxu0 0
    %5045 = vmatprep.subr.bf16.mxu0 0
    %5046 = vmatpush1.bf16.msra.mxu0 0
    %5047 = vmatprep.subr.bf16.mxu0 0
    %5048 = vmatpush1.bf16.msra.mxu0 0
    %5049 = vmatprep.subr.bf16.mxu0 0
    %5050 = vmatpush1.bf16.msra.mxu0 0
    %5051 = vmatprep.subr.bf16.mxu0 0
    %5052 = vmatpush1.bf16.msra.mxu0 0
    %5053 = vmatprep.subr.bf16.mxu0 0
    %5054 = vmatpush1.bf16.msra.mxu0 0
    %5055 = vmatprep.subr.bf16.mxu0 0
    %5056 = vmatpush1.bf16.msra.mxu0 0
    %5057 = vmatprep.subr.bf16.mxu0 0
    %5058 = vmatpush1.bf16.msra.mxu0 0
    %5059 = vmatprep.subr.bf16.mxu0 0
    %5060 = vmatpush1.bf16.msra.mxu0 0
    %5061 = vmatprep.subr.bf16.mxu0 0
    %5062 = vmatpush1.bf16.msra.mxu0 0
    %5063 = vmatprep.subr.bf16.mxu0 0
    %5064 = vmatpush1.bf16.msra.mxu0 0
    %5065 = vmatprep.mubr.bf16.mxu0 0
    %5066 = vmatmul.mubr.bf16.gmra.mrb[0].mxu0 %v5031
    %v5067 = vpop.f32.mrb[0].mxu0
    %v5068 = vadd.f32 0.0, %v5067
    %v5069 = vpop.f32.mrb[0].mxu0
    %v5070 = vadd.f32 0.0, %v5069
    %v5071 = vpop.f32.mrb[0].mxu0
    %v5072 = vpop.f32.mrb[0].mxu0
    %5073 = vdwg.mxu0
    %5074 = vmatprep.subr.bf16.mxu0 %v5016
    %5075 = vmatpush1.bf16.msra.mxu0 %v5015
    %5076 = vmatprep.subr.bf16.mxu0 %v5020
    %5077 = vmatpush1.bf16.msra.mxu0 %v5019
    %5078 = vmatprep.subr.bf16.mxu0 0
    %5079 = vmatpush1.bf16.msra.mxu0 0
    %5080 = vmatprep.subr.bf16.mxu0 0
    %5081 = vmatpush1.bf16.msra.mxu0 0
    %5082 = vmatprep.subr.bf16.mxu0 0
    %5083 = vmatpush1.bf16.msra.mxu0 0
    %5084 = vmatprep.subr.bf16.mxu0 0
    %5085 = vmatpush1.bf16.msra.mxu0 0
    %5086 = vmatprep.subr.bf16.mxu0 0
    %5087 = vmatpush1.bf16.msra.mxu0 0
    %5088 = vmatprep.subr.bf16.mxu0 0
    %5089 = vmatpush1.bf16.msra.mxu0 0
    %5090 = vmatprep.subr.bf16.mxu0 0
    %5091 = vmatpush1.bf16.msra.mxu0 0
    %5092 = vmatprep.subr.bf16.mxu0 0
    %5093 = vmatpush1.bf16.msra.mxu0 0
    %5094 = vmatprep.subr.bf16.mxu0 0
    %5095 = vmatpush1.bf16.msra.mxu0 0
    %5096 = vmatprep.subr.bf16.mxu0 0
    %5097 = vmatpush1.bf16.msra.mxu0 0
    %5098 = vmatprep.subr.bf16.mxu0 0
    %5099 = vmatpush1.bf16.msra.mxu0 0
    %5100 = vmatprep.subr.bf16.mxu0 0
    %5101 = vmatpush1.bf16.msra.mxu0 0
    %5102 = vmatprep.subr.bf16.mxu0 0
    %5103 = vmatpush1.bf16.msra.mxu0 0
    %5104 = vmatprep.subr.bf16.mxu0 0
    %5105 = vmatpush1.bf16.msra.mxu0 0
    %5106 = vmatprep.mubr.bf16.mxu0 0
    %5107 = vmatmul.mubr.bf16.gmra.mrb[0].mxu0 %v5031
    %v5108 = vpop.f32.mrb[0].mxu0
    %v5109 = vadd.f32 0.0, %v5108
    %v5110 = vpop.f32.mrb[0].mxu0
    %v5111 = vadd.f32 0.0, %v5110
    %v5112 = vpop.f32.mrb[0].mxu0
    %v5113 = vpop.f32.mrb[0].mxu0
    %5114 = vdwg.mxu0
    %v5119 = vcombine.low %v5068, %v5070
    %v5120 = vcombine.low %v5109, %v5111
    %v5122 = vunpack.c.l.s4 1966171168
    %v5123 = vunpack.c.0.s8 %v5122
    %v5124 = vlaneseq
    %v5125 = vshrl.u32 %v5124, 7
    %v5126 = vsub.s32 %v5123, %v5125
    %v5127 = vrot.slane %v5119, %v5126
    %v5129 = vunpack.c.l.s4 1966171168
    %v5130 = vunpack.c.0.s8 %v5129
    %v5131 = vlaneseq
    %v5132 = vshrl.u32 %v5131, 7
    %v5133 = vsub.s32 %v5130, %v5132
    %v5134 = vrot.slane %v5120, %v5133
    %v5135 = vcombine.low %v5127, %v5134
    %v5136 = vcombine.high %v5127, %v5134
    %v5138 = vunpack.c.l.s4 1966171168
    %v5139 = vunpack.c.0.s8 %v5138
    %v5140 = vlaneseq
    %v5141 = vshrl.u32 %v5140, 7
    %v5142 = vsub.s32 %v5139, %v5141
    %v5143 = vrot.slane %v5135, %v5142
    %v5145 = vunpack.c.l.s4 1966171168
    %v5146 = vunpack.c.0.s8 %v5145
    %v5147 = vlaneseq
    %v5148 = vshrl.u32 %v5147, 7
    %v5149 = vsub.s32 %v5146, %v5148
    %v5150 = vrot.slane %v5136, %v5149
    %v5151 = vlaneseq
    %v5152 = vshrl.u32 %v5151, 7
    %v5153 = vsub.s32 0, %v5152
    %v5154 = vrot.slane %v5143, %v5153
    %v5155 = vlaneseq
    %v5156 = vshrl.u32 %v5155, 7
    %v5157 = vsub.s32 1, %v5156
    %v5158 = vrot.slane %v5143, %v5157
    %v5159 = vlaneseq
    %v5160 = vshrl.u32 %v5159, 7
    %v5161 = vsub.s32 2, %v5160
    %v5162 = vrot.slane %v5143, %v5161
    %v5163 = vlaneseq
    %v5164 = vshrl.u32 %v5163, 7
    %v5165 = vsub.s32 3, %v5164
    %v5166 = vrot.slane %v5143, %v5165
    %v5167 = vlaneseq
    %v5168 = vshrl.u32 %v5167, 7
    %v5169 = vsub.s32 0, %v5168
    %v5170 = vrot.slane %v5150, %v5169
    %v5171 = vlaneseq
    %v5172 = vshrl.u32 %v5171, 7
    %v5173 = vsub.s32 1, %v5172
    %v5174 = vrot.slane %v5150, %v5173
    %v5175 = vlaneseq
    %v5176 = vshrl.u32 %v5175, 7
    %v5177 = vsub.s32 2, %v5176
    %v5178 = vrot.slane %v5150, %v5177
    %v5179 = vlaneseq
    %v5180 = vshrl.u32 %v5179, 7
    %v5181 = vsub.s32 3, %v5180
    %v5182 = vrot.slane %v5150, %v5181
    %v5191 = vmul.f32 %v4523, %v5154
    %v5192 = vmul.f32 %v4524, %v5158
    %v5193 = vmul.f32 %v4525, %v5162
    %v5194 = vmul.f32 %v4526, %v5166
    %v5195 = vmul.f32 %v4527, %v5154
    %v5196 = vmul.f32 %v4528, %v5158
    %v5197 = vmul.f32 %v4529, %v5162
    %v5198 = vmul.f32 %v4530, %v5166
    %v5199 = vmul.f32 %v4531, %v5170
    %v5200 = vmul.f32 %v4532, %v5174
    %v5201 = vmul.f32 %v4533, %v5178
    %v5202 = vmul.f32 %v4534, %v5182
    %v5203 = vmul.f32 %v4535, %v5170
    %v5204 = vmul.f32 %v4536, %v5174
    %v5205 = vmul.f32 %v4537, %v5178
    %v5206 = vmul.f32 %v4538, %v5182
    %v5207 = vadd.f32 %v5191, %v1215
    %v5208 = vadd.f32 %v5192, %v1216
    %v5209 = vadd.f32 %v5193, %v1217
    %v5210 = vadd.f32 %v5194, %v1218
    %v5211 = vadd.f32 %v5195, %v1219
    %v5212 = vadd.f32 %v5196, %v1220
    %v5213 = vadd.f32 %v5197, %v1221
    %v5214 = vadd.f32 %v5198, %v1222
    %v5215 = vadd.f32 %v5199, %v1223
    %v5216 = vadd.f32 %v5200, %v1224
    %v5217 = vadd.f32 %v5201, %v1225
    %v5218 = vadd.f32 %v5202, %v1226
    %v5219 = vadd.f32 %v5203, %v1227
    %v5220 = vadd.f32 %v5204, %v1228
    %v5221 = vadd.f32 %v5205, %v1229
    %v5222 = vadd.f32 %v5206, %v1230
    %5223 = vst [vmem:[%s10] sm:$0xff] %v5207
    %5224 = vst [vmem:[%s10 + $0x8] sm:$0xff] %v5208
    %5225 = vst [vmem:[%s10 + $0x10] sm:$0xff] %v5209
    %5226 = vst [vmem:[%s10 + $0x18] sm:$0xff] %v5210
    %5227 = vst [vmem:[%s10 + $0x20] sm:$0xff] %v5211
    %5228 = vst [vmem:[%s10 + $0x28] sm:$0xff] %v5212
    %5229 = vst [vmem:[%s10 + $0x30] sm:$0xff] %v5213
    %5230 = vst [vmem:[%s10 + $0x38] sm:$0xff] %v5214
    %5231 = vst [vmem:[%s10 + $0x40] sm:$0xff] %v5215
    %5232 = vst [vmem:[%s10 + $0x48] sm:$0xff] %v5216
    %5233 = vst [vmem:[%s10 + $0x50] sm:$0xff] %v5217
    %5234 = vst [vmem:[%s10 + $0x58] sm:$0xff] %v5218
    %5235 = vst [vmem:[%s10 + $0x60] sm:$0xff] %v5219
    %5236 = vst [vmem:[%s10 + $0x68] sm:$0xff] %v5220
    %5237 = vst [vmem:[%s10 + $0x70] sm:$0xff] %v5221
    %5238 = vst [vmem:[%s10 + $0x78] sm:$0xff] %v5222
    // Predicated region
    $region74: #{inconv_forward.1} parent=1 // pred_check
      _
    $region75: #{inconv_forward.1} parent=1 // pred_check_branch
      %5240 = sbr.rel (0) target = $region77
    $region76: #{inconv_forward.1} parent=1 // pred_region
      _
    $region77: #{inconv_forward.1} parent=1 // pred_fallthru
      _
    // Predicated region
    $region78: #{inconv_forward.1} parent=1 // pred_check
      _
    $region79: #{inconv_forward.1} parent=1 // pred_check_branch
      %5242 = sbr.rel (0) target = $region81
    $region80: #{inconv_forward.1} parent=1 // pred_region
      _
    $region81: #{inconv_forward.1} parent=1 // pred_fallthru
      _
    %5243 = vsyncpa [#allocation4], 1
    %5244 = vsyncpa [#allocation6], 1
    %5245 = vsyncpa [#allocation9], 1
    %5246 = vsyncpa [#allocation12], 1
    %5247 = vsyncpa [#allocation15], 1

</llo_original>
